<compile_context>
chip_gen: v6e
topology: v6e:2x2x1
jax: 0.10.0
libtpu: 0.0.40
codegen_flags: <defaults>
</compile_context>

<pallas_src>
import math

import numpy as np
import jax
import jax.numpy as jnp
from jax.experimental import pallas as pl
from jax.experimental.pallas import tpu as pltpu


# ----------------------------- model config ---------------------------------
IMAGE_SIZE      = 16
PATCH_SIZE      = 4
CHANNELS        = 4
EMBED_DIM       = 32
NUM_HEADS       = 4
HEAD_DIM        = EMBED_DIM // NUM_HEADS
MLP_DIM         = 64
NUM_LAYERS      = 2            # encoder re-uses the SAME attn/mlp weights each layer
NUM_CLASSES     = 10
NUM_CLASSES_PAD = 128          # lane-dense output; real logits are the first 10 cols
NUM_PATCHES     = (IMAGE_SIZE // PATCH_SIZE) ** 2
PATCH_K         = CHANNELS * PATCH_SIZE * PATCH_SIZE
BATCH           = 2
BN              = BATCH * NUM_PATCHES
LN_EPS          = 1e-5

# ------------------------- packed-slab row offsets ---------------------------
# bf16 weight slab (W_ROWS, 128)
ROW_PE_W = 0                               # (PATCH_K, EMBED_DIM)        = (64, 32)
ROW_WQKV = ROW_PE_W + PATCH_K              # (EMBED_DIM, 3*EMBED_DIM)    = (32, 96)
ROW_WO   = ROW_WQKV + EMBED_DIM            # (EMBED_DIM, EMBED_DIM)      = (32, 32)
ROW_W1   = ROW_WO + EMBED_DIM              # (EMBED_DIM, MLP_DIM)        = (32, 64)
ROW_W2   = ROW_W1 + EMBED_DIM              # (MLP_DIM, EMBED_DIM)        = (64, 32)
ROW_WC   = ROW_W2 + MLP_DIM                # (EMBED_DIM, NUM_CLASSES_PAD)= (32,128)
ROW_POOL = ROW_WC + EMBED_DIM              # (BATCH, BN)                 = ( 2, 32)
W_ROWS   = 264                             # 258 rounded up

# f32 vector/bias slab (V_ROWS, 128); every row-vector sits at an 8-aligned row
ROW_BIAS  = 0                              # head-stacked attn bias (H*N, N)=(64,16)
ROW_PE_B  = 64
ROW_BQKV  = 72
ROW_BO    = 80
ROW_LN1_G = 88
ROW_LN1_B = 96
ROW_B1    = 104
ROW_B2    = 112
ROW_LNF_G = 120
ROW_LNF_B = 128
ROW_BC    = 136
V_ROWS    = 144


# ----------------------- distance matrix (host side) -------------------------
def calculate_distance_matrix(num_patches: int) -> np.ndarray:
    dm = np.zeros((num_patches, num_patches), dtype=np.float32)
    s = math.sqrt(num_patches)
    for p1 in range(num_patches):
        r1, c1 = divmod(float(p1), s)
        ctr1 = (c1 + 0.5, r1 + 0.5)
        for p2 in range(num_patches):
            r2, c2 = divmod(float(p2), s)
            ctr2 = (c2 + 0.5, r2 + 0.5)
            dm[p1, p2] = math.sqrt((ctr1[0] - ctr2[0]) ** 2 + (ctr1[1] - ctr2[1]) ** 2)
    return dm


# ------------------------------ fused Pallas kernel ---------------------------
def _layernorm(x, g, b):
    mu = jnp.mean(x, axis=-1, keepdims=True)
    var = jnp.mean((x - mu) ** 2, axis=-1, keepdims=True)
    return (x - mu) * jax.lax.rsqrt(var + LN_EPS) * g + b


def _vit_fused_kernel(patches_ref, w_ref, v_ref, o_ref,
                      qkv_scr, s_scr, p_scr, ctx_scr):
    N = NUM_PATCHES
    D = EMBED_DIM
    scale = 1.0 / math.sqrt(HEAD_DIM)
    inv_sqrt2 = 1.0 / math.sqrt(2.0)

    # ---- patch embedding: (BN, K) @ (K, D) + b  (Conv2d k=stride=p) ----
    tok = (jnp.dot(patches_ref[...],
                   w_ref[ROW_PE_W:ROW_PE_W + PATCH_K, 0:D],
                   preferred_element_type=jnp.float32)
           + v_ref[ROW_PE_B:ROW_PE_B + 1, 0:D])                       # (BN, D) f32

    # weight-shared encoder layers (static unroll, NUM_LAYERS = 2)
    for _ in range(NUM_LAYERS):
        # ------------------------- attention -------------------------
        # TODO(synk): MultiHeadAttentionParallel/Individual are undefined in the
        # reference; standard MHA with an additive (-slope_h * distance) bias is used.
        qkv = (jnp.dot(tok.astype(jnp.bfloat16),
                       w_ref[ROW_WQKV:ROW_WQKV + D, 0:3 * D],
                       preferred_element_type=jnp.float32)
               + v_ref[ROW_BQKV:ROW_BQKV + 1, 0:3 * D])               # (BN, 3D) f32
        qkv_scr[...] = qkv.astype(jnp.bfloat16)

        for b in range(BATCH):                       # static unroll over batch
            r0 = b * N
            # --- head-stacked score slab: (H*N, N) built from 4 tiny matmuls ---
            for h in range(NUM_HEADS):
                c = h * HEAD_DIM
                qh = qkv_scr[r0:r0 + N, c:c + HEAD_DIM]
                kh = qkv_scr[r0:r0 + N, D + c:D + c + HEAD_DIM]
                s_scr[h * N:(h + 1) * N, :] = jnp.dot(
                    qh, kh.T, preferred_element_type=jnp.float32)
            # --- dense softmax on the whole (H*N, N) slab (one pass / batch) ---
            s = s_scr[...] * scale + v_ref[ROW_BIAS:ROW_BIAS + NUM_HEADS * N, 0:N]
            s = s - jnp.max(s, axis=-1, keepdims=True)
            e = jnp.exp(s)
            p = e * pl.reciprocal(jnp.sum(e, axis=-1, keepdims=True), approx=True)
            p_scr[...] = p.astype(jnp.bfloat16)
            # --- per-head PV written to the head's 8-lane slice of ctx ---
            for h in range(NUM_HEADS):
                c = h * HEAD_DIM
                vh = qkv_scr[r0:r0 + N, 2 * D + c:2 * D + c + HEAD_DIM]
                ctx_scr[r0:r0 + N, c:c + HEAD_DIM] = jnp.dot(
                    p_scr[h * N:(h + 1) * N, :], vh,
                    preferred_element_type=jnp.float32).astype(jnp.bfloat16)

        # single output projection per layer (per-head concat folded into ctx_scr)
        attn = (jnp.dot(ctx_scr[...], w_ref[ROW_WO:ROW_WO + D, 0:D],
                        preferred_element_type=jnp.float32)
                + v_ref[ROW_BO:ROW_BO + 1, 0:D])
        tok = tok + attn                                              # residual

        # --------------------- MLP (pre-norm) ------------------------
        hmlp = _layernorm(tok,
                          v_ref[ROW_LN1_G:ROW_LN1_G + 1, 0:D],
                          v_ref[ROW_LN1_B:ROW_LN1_B + 1, 0:D])
        h1 = (jnp.dot(hmlp.astype(jnp.bfloat16),
                      w_ref[ROW_W1:ROW_W1 + D, 0:MLP_DIM],
                      preferred_element_type=jnp.float32)
              + v_ref[ROW_B1:ROW_B1 + 1, 0:MLP_DIM])
        h1 = 0.5 * h1 * (1.0 + jax.lax.erf(h1 * inv_sqrt2))           # exact GELU
        tok = tok + (jnp.dot(h1.astype(jnp.bfloat16),
                             w_ref[ROW_W2:ROW_W2 + MLP_DIM, 0:D],
                             preferred_element_type=jnp.float32)
                     + v_ref[ROW_B2:ROW_B2 + 1, 0:D])                 # residual

    # ---- final LayerNorm + mean over patches (pool matmul) + classifier ----
    hn = _layernorm(tok,
                    v_ref[ROW_LNF_G:ROW_LNF_G + 1, 0:D],
                    v_ref[ROW_LNF_B:ROW_LNF_B + 1, 0:D])              # (BN, D)
    pooled = jnp.dot(w_ref[ROW_POOL:ROW_POOL + BATCH, 0:BN],
                     hn.astype(jnp.bfloat16),
                     preferred_element_type=jnp.float32)              # (B, D)
    o_ref[...] = (jnp.dot(pooled.astype(jnp.bfloat16),
                          w_ref[ROW_WC:ROW_WC + D, 0:NUM_CLASSES_PAD],
                          preferred_element_type=jnp.float32)
                  + v_ref[ROW_BC:ROW_BC + 1, 0:NUM_CLASSES_PAD])      # (B, 128)


# ------------------------------ forward pass ----------------------------------
def vision_transformer_forward(x_nchw, params):
    B, C, H, W = x_nchw.shape
    p = PATCH_SIZE
    # Conv2d(kernel=stride=p) == per-patch linear projection (glue reshape in JAX)
    patches = (
        x_nchw.reshape(B, C, H // p, p, W // p, p)
        .transpose(0, 2, 4, 1, 3, 5)
        .reshape(B * NUM_PATCHES, PATCH_K)
    ).astype(jnp.bfloat16)                         # bf16 MXU operand, halves DMA

    vmem = pltpu.MemorySpace.VMEM
    out_pad = pl.pallas_call(
        _vit_fused_kernel,
        out_shape=jax.ShapeDtypeStruct((B, NUM_CLASSES_PAD), jnp.float32),
        in_specs=[pl.BlockSpec(memory_space=vmem)] * 3,
        out_specs=pl.BlockSpec(memory_space=vmem),
        scratch_shapes=[
            pltpu.VMEM((BN, 3 * EMBED_DIM), jnp.bfloat16),                     # qkv
            pltpu.VMEM((NUM_HEADS * NUM_PATCHES, NUM_PATCHES), jnp.float32),   # scores
            pltpu.VMEM((NUM_HEADS * NUM_PATCHES, NUM_PATCHES), jnp.bfloat16),  # probs
            pltpu.VMEM((BN, EMBED_DIM), jnp.bfloat16),                         # ctx
        ],
    )(patches, params["w_slab"], params["v_slab"])
    return out_pad[:, :NUM_CLASSES]


# ------------------------------ parameter init ---------------------------------
def init_params(key):
    ks = jax.random.split(key, 8)
    f = lambda k, shape: (0.02 * jax.random.normal(k, shape)).astype(jnp.float32)

    # relative-positional bias from the distance matrix (per-head slope), host-stacked
    dist = jnp.asarray(calculate_distance_matrix(NUM_PATCHES))                  # (N, N)
    slopes = 2.0 ** (-(jnp.arange(NUM_HEADS, dtype=jnp.float32) + 1.0))
    attn_bias = (-slopes[:, None, None] * dist[None]).astype(jnp.float32)       # (H, N, N)
    attn_bias_slab = np.asarray(attn_bias).reshape(NUM_HEADS * NUM_PATCHES, NUM_PATCHES)

    # conv weight (E, C, p, p) -> pre-reshaped (K, E)
    pe_w = np.asarray(f(ks[0], (EMBED_DIM, CHANNELS, PATCH_SIZE, PATCH_SIZE))
                      ).reshape(EMBED_DIM, PATCH_K).T
    wq = np.asarray(f(ks[1], (EMBED_DIM, EMBED_DIM)))
    wk = np.asarray(f(ks[2], (EMBED_DIM, EMBED_DIM)))
    wv = np.asarray(f(ks[3], (EMBED_DIM, EMBED_DIM)))
    wqkv = np.concatenate([wq, wk, wv], axis=1)                                 # (D, 3D)
    wo = np.asarray(f(ks[4], (EMBED_DIM, EMBED_DIM)))
    w1 = np.asarray(f(ks[5], (EMBED_DIM, MLP_DIM)))
    w2 = np.asarray(f(ks[6], (MLP_DIM, EMBED_DIM)))
    wc = np.asarray(f(ks[7], (EMBED_DIM, NUM_CLASSES)))                         # (D, 10)

    # constant mean-pool matrix: pooled = pool @ tokens (1/16 is exact in bf16)
    pool = np.zeros((BATCH, BN), dtype=np.float32)
    for b in range(BATCH):
        pool[b, b * NUM_PATCHES:(b + 1) * NUM_PATCHES] = 1.0 / NUM_PATCHES

    # ---- bf16 MXU weight slab: single DMA ----
    w_slab = np.zeros((W_ROWS, 128), dtype=np.float32)

    def put(row, arr):
        r, c = arr.shape
        w_slab[row:row + r, 0:c] = arr

    put(ROW_PE_W, pe_w)
    put(ROW_WQKV, wqkv)
    put(ROW_WO, wo)
    put(ROW_W1, w1)
    put(ROW_W2, w2)
    put(ROW_WC, wc)          # lanes 10..127 stay zero -> lane-dense padded logits
    put(ROW_POOL, pool)

    # ---- f32 vector / bias slab: single DMA, 8-aligned rows ----
    v_slab = np.zeros((V_ROWS, 128), dtype=np.float32)
    v_slab[ROW_BIAS:ROW_BIAS + NUM_HEADS * NUM_PATCHES, 0:NUM_PATCHES] = attn_bias_slab
    # pe_b / bqkv / bo / b1 / b2 / bc are zero-initialised (rows already zero)
    v_slab[ROW_LN1_G, 0:EMBED_DIM] = 1.0
    v_slab[ROW_LNF_G, 0:EMBED_DIM] = 1.0

    return {
        "w_slab": jnp.asarray(w_slab, dtype=jnp.bfloat16),
        "v_slab": jnp.asarray(v_slab, dtype=jnp.float32),
    }


# ------------------------------------ main --------------------------------------
if __name__ == "__main__":
    key = jax.random.PRNGKey(0)
    k_x, k_p = jax.random.split(key)
    x = jax.random.normal(k_x, (BATCH, CHANNELS, IMAGE_SIZE, IMAGE_SIZE), jnp.float32)
    params = init_params(k_p)

    fwd = jax.jit(vision_transformer_forward)
    logits = fwd(x, params)
    jax.block_until_ready(logits)
    assert logits.shape == (BATCH, NUM_CLASSES)
    assert bool(jnp.all(jnp.isfinite(logits)))
    print("KERNEL_OK")
</pallas_src>

<mosaic_0001>
module attributes {stable_mosaic.version = 11 : i64} {
  func.func @_vit_fused_kernel(%arg0: memref<32x64xbf16, #tpu.memory_space<vmem>>, %arg1: memref<264x128xbf16, #tpu.memory_space<vmem>>, %arg2: memref<144x128xf32, #tpu.memory_space<vmem>>, %arg3: memref<2x128xf32, #tpu.memory_space<vmem>>, %arg4: memref<32x96xbf16, #tpu.memory_space<vmem>>, %arg5: memref<64x16xf32, #tpu.memory_space<vmem>>, %arg6: memref<64x16xbf16, #tpu.memory_space<vmem>>, %arg7: memref<32x32xbf16, #tpu.memory_space<vmem>>) attributes {dimension_semantics = [], scalar_prefetch = 0 : i64, scratch_operands = 4 : i64, tpu.core_type = #tpu.core_type<tc>} {
    %c0 = arith.constant 0 : index
    %c0_0 = arith.constant 0 : index
    %0 = vector.load %arg0[%c0, %c0_0] : memref<32x64xbf16, #tpu.memory_space<vmem>>, vector<32x64xbf16>
    %c0_1 = arith.constant 0 : index
    %c0_2 = arith.constant 0 : index
    %1 = vector.load %arg1[%c0_1, %c0_2] : memref<264x128xbf16, #tpu.memory_space<vmem>>, vector<64x32xbf16>
    %cst = arith.constant dense<0.000000e+00> : vector<32x32xf32>
    %2 = tpu.matmul %0, %1, %cst {dimension_numbers = #tpu.dot_dimension_numbers<[1], [0], [0], [1], [0, 0, 1, 1], [], []>} : vector<32x64xbf16>, vector<64x32xbf16>, vector<32x32xf32> -> vector<32x32xf32>
    %c64 = arith.constant 64 : index
    %c0_3 = arith.constant 0 : index
    %3 = vector.load %arg2[%c64, %c0_3] : memref<144x128xf32, #tpu.memory_space<vmem>>, vector<1x32xf32>
    %4 = vector.broadcast %3 : vector<1x32xf32> to vector<32x32xf32>
    %5 = arith.addf %2, %4 : vector<32x32xf32>
    %6 = arith.truncf %5 : vector<32x32xf32> to vector<32x32xbf16>
    %c64_4 = arith.constant 64 : index
    %c0_5 = arith.constant 0 : index
    %7 = vector.load %arg1[%c64_4, %c0_5] : memref<264x128xbf16, #tpu.memory_space<vmem>>, vector<32x96xbf16>
    %cst_6 = arith.constant dense<0.000000e+00> : vector<32x96xf32>
    %8 = tpu.matmul %6, %7, %cst_6 {dimension_numbers = #tpu.dot_dimension_numbers<[1], [0], [0], [1], [0, 0, 1, 1], [], []>} : vector<32x32xbf16>, vector<32x96xbf16>, vector<32x96xf32> -> vector<32x96xf32>
    %c72 = arith.constant 72 : index
    %c0_7 = arith.constant 0 : index
    %9 = vector.load %arg2[%c72, %c0_7] : memref<144x128xf32, #tpu.memory_space<vmem>>, vector<1x96xf32>
    %10 = vector.broadcast %9 : vector<1x96xf32> to vector<32x96xf32>
    %11 = arith.addf %8, %10 : vector<32x96xf32>
    %12 = arith.truncf %11 : vector<32x96xf32> to vector<32x96xbf16>
    %c0_8 = arith.constant 0 : index
    %c0_9 = arith.constant 0 : index
    %13 = vector.load %arg4[%c0_8, %c0_9] : memref<32x96xbf16, #tpu.memory_space<vmem>>, vector<32x96xbf16>
    tpu.vector_store %arg4[%c0_8, %c0_9], %12 {strides = array<i32>} : memref<32x96xbf16, #tpu.memory_space<vmem>>, vector<32x96xbf16>,
    %c0_10 = arith.constant 0 : index
    %c0_11 = arith.constant 0 : index
    %14 = vector.load %arg4[%c0_10, %c0_11] : memref<32x96xbf16, #tpu.memory_space<vmem>>, vector<16x8xbf16>
    %c0_12 = arith.constant 0 : index
    %c32 = arith.constant 32 : index
    %15 = vector.load %arg4[%c0_12, %c32] : memref<32x96xbf16, #tpu.memory_space<vmem>>, vector<16x8xbf16>
    %16 = tpu.transpose %15, [1, 0] : vector<16x8xbf16> -> vector<8x16xbf16>
    %cst_13 = arith.constant dense<0.000000e+00> : vector<16x16xf32>
    %17 = tpu.matmul %14, %16, %cst_13 {dimension_numbers = #tpu.dot_dimension_numbers<[1], [0], [0], [1], [0, 0, 1, 1], [], []>} : vector<16x8xbf16>, vector<8x16xbf16>, vector<16x16xf32> -> vector<16x16xf32>
    %c0_14 = arith.constant 0 : index
    %c0_15 = arith.constant 0 : index
    %18 = vector.load %arg5[%c0_14, %c0_15] : memref<64x16xf32, #tpu.memory_space<vmem>>, vector<16x16xf32>
    tpu.vector_store %arg5[%c0_14, %c0_15], %17 {strides = array<i32>} : memref<64x16xf32, #tpu.memory_space<vmem>>, vector<16x16xf32>,
    %c0_16 = arith.constant 0 : index
    %c8 = arith.constant 8 : index
    %19 = vector.load %arg4[%c0_16, %c8] : memref<32x96xbf16, #tpu.memory_space<vmem>>, vector<16x8xbf16>
    %c0_17 = arith.constant 0 : index
    %c40 = arith.constant 40 : index
    %20 = vector.load %arg4[%c0_17, %c40] : memref<32x96xbf16, #tpu.memory_space<vmem>>, vector<16x8xbf16>
    %21 = tpu.transpose %20, [1, 0] : vector<16x8xbf16> -> vector<8x16xbf16>
    %cst_18 = arith.constant dense<0.000000e+00> : vector<16x16xf32>
    %22 = tpu.matmul %19, %21, %cst_18 {dimension_numbers = #tpu.dot_dimension_numbers<[1], [0], [0], [1], [0, 0, 1, 1], [], []>} : vector<16x8xbf16>, vector<8x16xbf16>, vector<16x16xf32> -> vector<16x16xf32>
    %c16 = arith.constant 16 : index
    %c0_19 = arith.constant 0 : index
    %23 = vector.load %arg5[%c16, %c0_19] : memref<64x16xf32, #tpu.memory_space<vmem>>, vector<16x16xf32>
    tpu.vector_store %arg5[%c16, %c0_19], %22 {strides = array<i32>} : memref<64x16xf32, #tpu.memory_space<vmem>>, vector<16x16xf32>,
    %c0_20 = arith.constant 0 : index
    %c16_21 = arith.constant 16 : index
    %24 = vector.load %arg4[%c0_20, %c16_21] : memref<32x96xbf16, #tpu.memory_space<vmem>>, vector<16x8xbf16>
    %c0_22 = arith.constant 0 : index
    %c48 = arith.constant 48 : index
    %25 = vector.load %arg4[%c0_22, %c48] : memref<32x96xbf16, #tpu.memory_space<vmem>>, vector<16x8xbf16>
    %26 = tpu.transpose %25, [1, 0] : vector<16x8xbf16> -> vector<8x16xbf16>
    %cst_23 = arith.constant dense<0.000000e+00> : vector<16x16xf32>
    %27 = tpu.matmul %24, %26, %cst_23 {dimension_numbers = #tpu.dot_dimension_numbers<[1], [0], [0], [1], [0, 0, 1, 1], [], []>} : vector<16x8xbf16>, vector<8x16xbf16>, vector<16x16xf32> -> vector<16x16xf32>
    %c32_24 = arith.constant 32 : index
    %c0_25 = arith.constant 0 : index
    %28 = vector.load %arg5[%c32_24, %c0_25] : memref<64x16xf32, #tpu.memory_space<vmem>>, vector<16x16xf32>
    tpu.vector_store %arg5[%c32_24, %c0_25], %27 {strides = array<i32>} : memref<64x16xf32, #tpu.memory_space<vmem>>, vector<16x16xf32>,
    %c0_26 = arith.constant 0 : index
    %c24 = arith.constant 24 : index
    %29 = vector.load %arg4[%c0_26, %c24] : memref<32x96xbf16, #tpu.memory_space<vmem>>, vector<16x8xbf16>
    %c0_27 = arith.constant 0 : index
    %c56 = arith.constant 56 : index
    %30 = vector.load %arg4[%c0_27, %c56] : memref<32x96xbf16, #tpu.memory_space<vmem>>, vector<16x8xbf16>
    %31 = tpu.transpose %30, [1, 0] : vector<16x8xbf16> -> vector<8x16xbf16>
    %cst_28 = arith.constant dense<0.000000e+00> : vector<16x16xf32>
    %32 = tpu.matmul %29, %31, %cst_28 {dimension_numbers = #tpu.dot_dimension_numbers<[1], [0], [0], [1], [0, 0, 1, 1], [], []>} : vector<16x8xbf16>, vector<8x16xbf16>, vector<16x16xf32> -> vector<16x16xf32>
    %c48_29 = arith.constant 48 : index
    %c0_30 = arith.constant 0 : index
    %33 = vector.load %arg5[%c48_29, %c0_30] : memref<64x16xf32, #tpu.memory_space<vmem>>, vector<16x16xf32>
    tpu.vector_store %arg5[%c48_29, %c0_30], %32 {strides = array<i32>} : memref<64x16xf32, #tpu.memory_space<vmem>>, vector<16x16xf32>,
    %c0_31 = arith.constant 0 : index
    %c0_32 = arith.constant 0 : index
    %34 = vector.load %arg5[%c0_31, %c0_32] : memref<64x16xf32, #tpu.memory_space<vmem>>, vector<64x16xf32>
    %cst_33 = arith.constant 0.353553385 : f32
    %35 = vector.broadcast %cst_33 : f32 to vector<64x16xf32>
    %36 = arith.mulf %34, %35 : vector<64x16xf32>
    %c0_34 = arith.constant 0 : index
    %c0_35 = arith.constant 0 : index
    %37 = vector.load %arg2[%c0_34, %c0_35] : memref<144x128xf32, #tpu.memory_space<vmem>>, vector<64x16xf32>
    %38 = arith.addf %36, %37 : vector<64x16xf32>
    %cst_36 = arith.constant dense<0xFF800000> : vector<64xf32>
    %39 = vector.multi_reduction <maximumf>, %38, %cst_36 [1] : vector<64x16xf32> to vector<64xf32>
    %40 = vector.shape_cast %39 : vector<64xf32> to vector<64x1xf32>
    %41 = vector.broadcast %40 : vector<64x1xf32> to vector<64x16xf32>
    %42 = arith.subf %38, %41 : vector<64x16xf32>
    %43 = math.exp %42 : vector<64x16xf32>
    %cst_37 = arith.constant dense<0.000000e+00> : vector<64xf32>
    %44 = vector.multi_reduction <add>, %43, %cst_37 [1] : vector<64x16xf32> to vector<64xf32>
    %45 = vector.shape_cast %44 : vector<64xf32> to vector<64x1xf32>
    %46 = tpu.reciprocal %45 {approx = true} : vector<64x1xf32> -> vector<64x1xf32>
    %47 = vector.broadcast %46 : vector<64x1xf32> to vector<64x16xf32>
    %48 = arith.mulf %43, %47 : vector<64x16xf32>
    %49 = arith.truncf %48 : vector<64x16xf32> to vector<64x16xbf16>
    %c0_38 = arith.constant 0 : index
    %c0_39 = arith.constant 0 : index
    %50 = vector.load %arg6[%c0_38, %c0_39] : memref<64x16xbf16, #tpu.memory_space<vmem>>, vector<64x16xbf16>
    tpu.vector_store %arg6[%c0_38, %c0_39], %49 {strides = array<i32>} : memref<64x16xbf16, #tpu.memory_space<vmem>>, vector<64x16xbf16>,
    %c0_40 = arith.constant 0 : index
    %c64_41 = arith.constant 64 : index
    %51 = vector.load %arg4[%c0_40, %c64_41] : memref<32x96xbf16, #tpu.memory_space<vmem>>, vector<16x8xbf16>
    %c0_42 = arith.constant 0 : index
    %c0_43 = arith.constant 0 : index
    %52 = vector.load %arg6[%c0_42, %c0_43] : memref<64x16xbf16, #tpu.memory_space<vmem>>, vector<16x16xbf16>
    %cst_44 = arith.constant dense<0.000000e+00> : vector<16x8xf32>
    %53 = tpu.matmul %52, %51, %cst_44 {dimension_numbers = #tpu.dot_dimension_numbers<[1], [0], [0], [1], [0, 0, 1, 1], [], []>} : vector<16x16xbf16>, vector<16x8xbf16>, vector<16x8xf32> -> vector<16x8xf32>
    %54 = arith.truncf %53 : vector<16x8xf32> to vector<16x8xbf16>
    %c0_45 = arith.constant 0 : index
    %c0_46 = arith.constant 0 : index
    %55 = vector.load %arg7[%c0_45, %c0_46] : memref<32x32xbf16, #tpu.memory_space<vmem>>, vector<16x8xbf16>
    tpu.vector_store %arg7[%c0_45, %c0_46], %54 {strides = array<i32>} : memref<32x32xbf16, #tpu.memory_space<vmem>>, vector<16x8xbf16>,
    %c0_47 = arith.constant 0 : index
    %c72_48 = arith.constant 72 : index
    %56 = vector.load %arg4[%c0_47, %c72_48] : memref<32x96xbf16, #tpu.memory_space<vmem>>, vector<16x8xbf16>
    %c16_49 = arith.constant 16 : index
    %c0_50 = arith.constant 0 : index
    %57 = vector.load %arg6[%c16_49, %c0_50] : memref<64x16xbf16, #tpu.memory_space<vmem>>, vector<16x16xbf16>
    %cst_51 = arith.constant dense<0.000000e+00> : vector<16x8xf32>
    %58 = tpu.matmul %57, %56, %cst_51 {dimension_numbers = #tpu.dot_dimension_numbers<[1], [0], [0], [1], [0, 0, 1, 1], [], []>} : vector<16x16xbf16>, vector<16x8xbf16>, vector<16x8xf32> -> vector<16x8xf32>
    %59 = arith.truncf %58 : vector<16x8xf32> to vector<16x8xbf16>
    %c0_52 = arith.constant 0 : index
    %c8_53 = arith.constant 8 : index
    %60 = vector.load %arg7[%c0_52, %c8_53] : memref<32x32xbf16, #tpu.memory_space<vmem>>, vector<16x8xbf16>
    tpu.vector_store %arg7[%c0_52, %c8_53], %59 {strides = array<i32>} : memref<32x32xbf16, #tpu.memory_space<vmem>>, vector<16x8xbf16>,
    %c0_54 = arith.constant 0 : index
    %c80 = arith.constant 80 : index
    %61 = vector.load %arg4[%c0_54, %c80] : memref<32x96xbf16, #tpu.memory_space<vmem>>, vector<16x8xbf16>
    %c32_55 = arith.constant 32 : index
    %c0_56 = arith.constant 0 : index
    %62 = vector.load %arg6[%c32_55, %c0_56] : memref<64x16xbf16, #tpu.memory_space<vmem>>, vector<16x16xbf16>
    %cst_57 = arith.constant dense<0.000000e+00> : vector<16x8xf32>
    %63 = tpu.matmul %62, %61, %cst_57 {dimension_numbers = #tpu.dot_dimension_numbers<[1], [0], [0], [1], [0, 0, 1, 1], [], []>} : vector<16x16xbf16>, vector<16x8xbf16>, vector<16x8xf32> -> vector<16x8xf32>
    %64 = arith.truncf %63 : vector<16x8xf32> to vector<16x8xbf16>
    %c0_58 = arith.constant 0 : index
    %c16_59 = arith.constant 16 : index
    %65 = vector.load %arg7[%c0_58, %c16_59] : memref<32x32xbf16, #tpu.memory_space<vmem>>, vector<16x8xbf16>
    tpu.vector_store %arg7[%c0_58, %c16_59], %64 {strides = array<i32>} : memref<32x32xbf16, #tpu.memory_space<vmem>>, vector<16x8xbf16>,
    %c0_60 = arith.constant 0 : index
    %c88 = arith.constant 88 : index
    %66 = vector.load %arg4[%c0_60, %c88] : memref<32x96xbf16, #tpu.memory_space<vmem>>, vector<16x8xbf16>
    %c48_61 = arith.constant 48 : index
    %c0_62 = arith.constant 0 : index
    %67 = vector.load %arg6[%c48_61, %c0_62] : memref<64x16xbf16, #tpu.memory_space<vmem>>, vector<16x16xbf16>
    %cst_63 = arith.constant dense<0.000000e+00> : vector<16x8xf32>
    %68 = tpu.matmul %67, %66, %cst_63 {dimension_numbers = #tpu.dot_dimension_numbers<[1], [0], [0], [1], [0, 0, 1, 1], [], []>} : vector<16x16xbf16>, vector<16x8xbf16>, vector<16x8xf32> -> vector<16x8xf32>
    %69 = arith.truncf %68 : vector<16x8xf32> to vector<16x8xbf16>
    %c0_64 = arith.constant 0 : index
    %c24_65 = arith.constant 24 : index
    %70 = vector.load %arg7[%c0_64, %c24_65] : memref<32x32xbf16, #tpu.memory_space<vmem>>, vector<16x8xbf16>
    tpu.vector_store %arg7[%c0_64, %c24_65], %69 {strides = array<i32>} : memref<32x32xbf16, #tpu.memory_space<vmem>>, vector<16x8xbf16>,
    %c16_66 = arith.constant 16 : index
    %c0_67 = arith.constant 0 : index
    %71 = vector.load %arg4[%c16_66, %c0_67] : memref<32x96xbf16, #tpu.memory_space<vmem>>, vector<16x8xbf16>
    %c16_68 = arith.constant 16 : index
    %c32_69 = arith.constant 32 : index
    %72 = vector.load %arg4[%c16_68, %c32_69] : memref<32x96xbf16, #tpu.memory_space<vmem>>, vector<16x8xbf16>
    %73 = tpu.transpose %72, [1, 0] : vector<16x8xbf16> -> vector<8x16xbf16>
    %cst_70 = arith.constant dense<0.000000e+00> : vector<16x16xf32>
    %74 = tpu.matmul %71, %73, %cst_70 {dimension_numbers = #tpu.dot_dimension_numbers<[1], [0], [0], [1], [0, 0, 1, 1], [], []>} : vector<16x8xbf16>, vector<8x16xbf16>, vector<16x16xf32> -> vector<16x16xf32>
    %c0_71 = arith.constant 0 : index
    %c0_72 = arith.constant 0 : index
    %75 = vector.load %arg5[%c0_71, %c0_72] : memref<64x16xf32, #tpu.memory_space<vmem>>, vector<16x16xf32>
    tpu.vector_store %arg5[%c0_71, %c0_72], %74 {strides = array<i32>} : memref<64x16xf32, #tpu.memory_space<vmem>>, vector<16x16xf32>,
    %c16_73 = arith.constant 16 : index
    %c8_74 = arith.constant 8 : index
    %76 = vector.load %arg4[%c16_73, %c8_74] : memref<32x96xbf16, #tpu.memory_space<vmem>>, vector<16x8xbf16>
    %c16_75 = arith.constant 16 : index
    %c40_76 = arith.constant 40 : index
    %77 = vector.load %arg4[%c16_75, %c40_76] : memref<32x96xbf16, #tpu.memory_space<vmem>>, vector<16x8xbf16>
    %78 = tpu.transpose %77, [1, 0] : vector<16x8xbf16> -> vector<8x16xbf16>
    %cst_77 = arith.constant dense<0.000000e+00> : vector<16x16xf32>
    %79 = tpu.matmul %76, %78, %cst_77 {dimension_numbers = #tpu.dot_dimension_numbers<[1], [0], [0], [1], [0, 0, 1, 1], [], []>} : vector<16x8xbf16>, vector<8x16xbf16>, vector<16x16xf32> -> vector<16x16xf32>
    %c16_78 = arith.constant 16 : index
    %c0_79 = arith.constant 0 : index
    %80 = vector.load %arg5[%c16_78, %c0_79] : memref<64x16xf32, #tpu.memory_space<vmem>>, vector<16x16xf32>
    tpu.vector_store %arg5[%c16_78, %c0_79], %79 {strides = array<i32>} : memref<64x16xf32, #tpu.memory_space<vmem>>, vector<16x16xf32>,
    %c16_80 = arith.constant 16 : index
    %c16_81 = arith.constant 16 : index
    %81 = vector.load %arg4[%c16_80, %c16_81] : memref<32x96xbf16, #tpu.memory_space<vmem>>, vector<16x8xbf16>
    %c16_82 = arith.constant 16 : index
    %c48_83 = arith.constant 48 : index
    %82 = vector.load %arg4[%c16_82, %c48_83] : memref<32x96xbf16, #tpu.memory_space<vmem>>, vector<16x8xbf16>
    %83 = tpu.transpose %82, [1, 0] : vector<16x8xbf16> -> vector<8x16xbf16>
    %cst_84 = arith.constant dense<0.000000e+00> : vector<16x16xf32>
    %84 = tpu.matmul %81, %83, %cst_84 {dimension_numbers = #tpu.dot_dimension_numbers<[1], [0], [0], [1], [0, 0, 1, 1], [], []>} : vector<16x8xbf16>, vector<8x16xbf16>, vector<16x16xf32> -> vector<16x16xf32>
    %c32_85 = arith.constant 32 : index
    %c0_86 = arith.constant 0 : index
    %85 = vector.load %arg5[%c32_85, %c0_86] : memref<64x16xf32, #tpu.memory_space<vmem>>, vector<16x16xf32>
    tpu.vector_store %arg5[%c32_85, %c0_86], %84 {strides = array<i32>} : memref<64x16xf32, #tpu.memory_space<vmem>>, vector<16x16xf32>,
    %c16_87 = arith.constant 16 : index
    %c24_88 = arith.constant 24 : index
    %86 = vector.load %arg4[%c16_87, %c24_88] : memref<32x96xbf16, #tpu.memory_space<vmem>>, vector<16x8xbf16>
    %c16_89 = arith.constant 16 : index
    %c56_90 = arith.constant 56 : index
    %87 = vector.load %arg4[%c16_89, %c56_90] : memref<32x96xbf16, #tpu.memory_space<vmem>>, vector<16x8xbf16>
    %88 = tpu.transpose %87, [1, 0] : vector<16x8xbf16> -> vector<8x16xbf16>
    %cst_91 = arith.constant dense<0.000000e+00> : vector<16x16xf32>
    %89 = tpu.matmul %86, %88, %cst_91 {dimension_numbers = #tpu.dot_dimension_numbers<[1], [0], [0], [1], [0, 0, 1, 1], [], []>} : vector<16x8xbf16>, vector<8x16xbf16>, vector<16x16xf32> -> vector<16x16xf32>
    %c48_92 = arith.constant 48 : index
    %c0_93 = arith.constant 0 : index
    %90 = vector.load %arg5[%c48_92, %c0_93] : memref<64x16xf32, #tpu.memory_space<vmem>>, vector<16x16xf32>
    tpu.vector_store %arg5[%c48_92, %c0_93], %89 {strides = array<i32>} : memref<64x16xf32, #tpu.memory_space<vmem>>, vector<16x16xf32>,
    %c0_94 = arith.constant 0 : index
    %c0_95 = arith.constant 0 : index
    %91 = vector.load %arg5[%c0_94, %c0_95] : memref<64x16xf32, #tpu.memory_space<vmem>>, vector<64x16xf32>
    %cst_96 = arith.constant 0.353553385 : f32
    %92 = vector.broadcast %cst_96 : f32 to vector<64x16xf32>
    %93 = arith.mulf %91, %92 : vector<64x16xf32>
    %c0_97 = arith.constant 0 : index
    %c0_98 = arith.constant 0 : index
    %94 = vector.load %arg2[%c0_97, %c0_98] : memref<144x128xf32, #tpu.memory_space<vmem>>, vector<64x16xf32>
    %95 = arith.addf %93, %94 : vector<64x16xf32>
    %cst_99 = arith.constant dense<0xFF800000> : vector<64xf32>
    %96 = vector.multi_reduction <maximumf>, %95, %cst_99 [1] : vector<64x16xf32> to vector<64xf32>
    %97 = vector.shape_cast %96 : vector<64xf32> to vector<64x1xf32>
    %98 = vector.broadcast %97 : vector<64x1xf32> to vector<64x16xf32>
    %99 = arith.subf %95, %98 : vector<64x16xf32>
    %100 = math.exp %99 : vector<64x16xf32>
    %cst_100 = arith.constant dense<0.000000e+00> : vector<64xf32>
    %101 = vector.multi_reduction <add>, %100, %cst_100 [1] : vector<64x16xf32> to vector<64xf32>
    %102 = vector.shape_cast %101 : vector<64xf32> to vector<64x1xf32>
    %103 = tpu.reciprocal %102 {approx = true} : vector<64x1xf32> -> vector<64x1xf32>
    %104 = vector.broadcast %103 : vector<64x1xf32> to vector<64x16xf32>
    %105 = arith.mulf %100, %104 : vector<64x16xf32>
    %106 = arith.truncf %105 : vector<64x16xf32> to vector<64x16xbf16>
    %c0_101 = arith.constant 0 : index
    %c0_102 = arith.constant 0 : index
    %107 = vector.load %arg6[%c0_101, %c0_102] : memref<64x16xbf16, #tpu.memory_space<vmem>>, vector<64x16xbf16>
    tpu.vector_store %arg6[%c0_101, %c0_102], %106 {strides = array<i32>} : memref<64x16xbf16, #tpu.memory_space<vmem>>, vector<64x16xbf16>,
    %c16_103 = arith.constant 16 : index
    %c64_104 = arith.constant 64 : index
    %108 = vector.load %arg4[%c16_103, %c64_104] : memref<32x96xbf16, #tpu.memory_space<vmem>>, vector<16x8xbf16>
    %c0_105 = arith.constant 0 : index
    %c0_106 = arith.constant 0 : index
    %109 = vector.load %arg6[%c0_105, %c0_106] : memref<64x16xbf16, #tpu.memory_space<vmem>>, vector<16x16xbf16>
    %cst_107 = arith.constant dense<0.000000e+00> : vector<16x8xf32>
    %110 = tpu.matmul %109, %108, %cst_107 {dimension_numbers = #tpu.dot_dimension_numbers<[1], [0], [0], [1], [0, 0, 1, 1], [], []>} : vector<16x16xbf16>, vector<16x8xbf16>, vector<16x8xf32> -> vector<16x8xf32>
    %111 = arith.truncf %110 : vector<16x8xf32> to vector<16x8xbf16>
    %c16_108 = arith.constant 16 : index
    %c0_109 = arith.constant 0 : index
    %112 = vector.load %arg7[%c16_108, %c0_109] : memref<32x32xbf16, #tpu.memory_space<vmem>>, vector<16x8xbf16>
    tpu.vector_store %arg7[%c16_108, %c0_109], %111 {strides = array<i32>} : memref<32x32xbf16, #tpu.memory_space<vmem>>, vector<16x8xbf16>,
    %c16_110 = arith.constant 16 : index
    %c72_111 = arith.constant 72 : index
    %113 = vector.load %arg4[%c16_110, %c72_111] : memref<32x96xbf16, #tpu.memory_space<vmem>>, vector<16x8xbf16>
    %c16_112 = arith.constant 16 : index
    %c0_113 = arith.constant 0 : index
    %114 = vector.load %arg6[%c16_112, %c0_113] : memref<64x16xbf16, #tpu.memory_space<vmem>>, vector<16x16xbf16>
    %cst_114 = arith.constant dense<0.000000e+00> : vector<16x8xf32>
    %115 = tpu.matmul %114, %113, %cst_114 {dimension_numbers = #tpu.dot_dimension_numbers<[1], [0], [0], [1], [0, 0, 1, 1], [], []>} : vector<16x16xbf16>, vector<16x8xbf16>, vector<16x8xf32> -> vector<16x8xf32>
    %116 = arith.truncf %115 : vector<16x8xf32> to vector<16x8xbf16>
    %c16_115 = arith.constant 16 : index
    %c8_116 = arith.constant 8 : index
    %117 = vector.load %arg7[%c16_115, %c8_116] : memref<32x32xbf16, #tpu.memory_space<vmem>>, vector<16x8xbf16>
    tpu.vector_store %arg7[%c16_115, %c8_116], %116 {strides = array<i32>} : memref<32x32xbf16, #tpu.memory_space<vmem>>, vector<16x8xbf16>,
    %c16_117 = arith.constant 16 : index
    %c80_118 = arith.constant 80 : index
    %118 = vector.load %arg4[%c16_117, %c80_118] : memref<32x96xbf16, #tpu.memory_space<vmem>>, vector<16x8xbf16>
    %c32_119 = arith.constant 32 : index
    %c0_120 = arith.constant 0 : index
    %119 = vector.load %arg6[%c32_119, %c0_120] : memref<64x16xbf16, #tpu.memory_space<vmem>>, vector<16x16xbf16>
    %cst_121 = arith.constant dense<0.000000e+00> : vector<16x8xf32>
    %120 = tpu.matmul %119, %118, %cst_121 {dimension_numbers = #tpu.dot_dimension_numbers<[1], [0], [0], [1], [0, 0, 1, 1], [], []>} : vector<16x16xbf16>, vector<16x8xbf16>, vector<16x8xf32> -> vector<16x8xf32>
    %121 = arith.truncf %120 : vector<16x8xf32> to vector<16x8xbf16>
    %c16_122 = arith.constant 16 : index
    %c16_123 = arith.constant 16 : index
    %122 = vector.load %arg7[%c16_122, %c16_123] : memref<32x32xbf16, #tpu.memory_space<vmem>>, vector<16x8xbf16>
    tpu.vector_store %arg7[%c16_122, %c16_123], %121 {strides = array<i32>} : memref<32x32xbf16, #tpu.memory_space<vmem>>, vector<16x8xbf16>,
    %c16_124 = arith.constant 16 : index
    %c88_125 = arith.constant 88 : index
    %123 = vector.load %arg4[%c16_124, %c88_125] : memref<32x96xbf16, #tpu.memory_space<vmem>>, vector<16x8xbf16>
    %c48_126 = arith.constant 48 : index
    %c0_127 = arith.constant 0 : index
    %124 = vector.load %arg6[%c48_126, %c0_127] : memref<64x16xbf16, #tpu.memory_space<vmem>>, vector<16x16xbf16>
    %cst_128 = arith.constant dense<0.000000e+00> : vector<16x8xf32>
    %125 = tpu.matmul %124, %123, %cst_128 {dimension_numbers = #tpu.dot_dimension_numbers<[1], [0], [0], [1], [0, 0, 1, 1], [], []>} : vector<16x16xbf16>, vector<16x8xbf16>, vector<16x8xf32> -> vector<16x8xf32>
    %126 = arith.truncf %125 : vector<16x8xf32> to vector<16x8xbf16>
    %c16_129 = arith.constant 16 : index
    %c24_130 = arith.constant 24 : index
    %127 = vector.load %arg7[%c16_129, %c24_130] : memref<32x32xbf16, #tpu.memory_space<vmem>>, vector<16x8xbf16>
    tpu.vector_store %arg7[%c16_129, %c24_130], %126 {strides = array<i32>} : memref<32x32xbf16, #tpu.memory_space<vmem>>, vector<16x8xbf16>,
    %c0_131 = arith.constant 0 : index
    %c0_132 = arith.constant 0 : index
    %128 = vector.load %arg7[%c0_131, %c0_132] : memref<32x32xbf16, #tpu.memory_space<vmem>>, vector<32x32xbf16>
    %c96 = arith.constant 96 : index
    %c0_133 = arith.constant 0 : index
    %129 = vector.load %arg1[%c96, %c0_133] : memref<264x128xbf16, #tpu.memory_space<vmem>>, vector<32x32xbf16>
    %cst_134 = arith.constant dense<0.000000e+00> : vector<32x32xf32>
    %130 = tpu.matmul %128, %129, %cst_134 {dimension_numbers = #tpu.dot_dimension_numbers<[1], [0], [0], [1], [0, 0, 1, 1], [], []>} : vector<32x32xbf16>, vector<32x32xbf16>, vector<32x32xf32> -> vector<32x32xf32>
    %c80_135 = arith.constant 80 : index
    %c0_136 = arith.constant 0 : index
    %131 = vector.load %arg2[%c80_135, %c0_136] : memref<144x128xf32, #tpu.memory_space<vmem>>, vector<1x32xf32>
    %132 = vector.broadcast %131 : vector<1x32xf32> to vector<32x32xf32>
    %133 = arith.addf %130, %132 : vector<32x32xf32>
    %134 = arith.addf %5, %133 : vector<32x32xf32>
    %c88_137 = arith.constant 88 : index
    %c0_138 = arith.constant 0 : index
    %135 = vector.load %arg2[%c88_137, %c0_138] : memref<144x128xf32, #tpu.memory_space<vmem>>, vector<1x32xf32>
    %c96_139 = arith.constant 96 : index
    %c0_140 = arith.constant 0 : index
    %136 = vector.load %arg2[%c96_139, %c0_140] : memref<144x128xf32, #tpu.memory_space<vmem>>, vector<1x32xf32>
    %cst_141 = arith.constant dense<0.000000e+00> : vector<32xf32>
    %137 = vector.multi_reduction <add>, %134, %cst_141 [1] : vector<32x32xf32> to vector<32xf32>
    %138 = vector.shape_cast %137 : vector<32xf32> to vector<32x1xf32>
    %cst_142 = arith.constant 3.200000e+01 : f32
    %139 = vector.broadcast %cst_142 : f32 to vector<32x1xf32>
    %140 = arith.divf %138, %139 : vector<32x1xf32>
    %141 = vector.broadcast %140 : vector<32x1xf32> to vector<32x32xf32>
    %142 = arith.subf %134, %141 : vector<32x32xf32>
    %143 = arith.mulf %142, %142 : vector<32x32xf32>
    %cst_143 = arith.constant dense<0.000000e+00> : vector<32xf32>
    %144 = vector.multi_reduction <add>, %143, %cst_143 [1] : vector<32x32xf32> to vector<32xf32>
    %145 = vector.shape_cast %144 : vector<32xf32> to vector<32x1xf32>
    %cst_144 = arith.constant 3.200000e+01 : f32
    %146 = vector.broadcast %cst_144 : f32 to vector<32x1xf32>
    %147 = arith.divf %145, %146 : vector<32x1xf32>
    %148 = vector.broadcast %140 : vector<32x1xf32> to vector<32x32xf32>
    %149 = arith.subf %134, %148 : vector<32x32xf32>
    %cst_145 = arith.constant 9.99999974E-6 : f32
    %150 = vector.broadcast %cst_145 : f32 to vector<32x1xf32>
    %151 = arith.addf %147, %150 : vector<32x1xf32>
    %152 = math.rsqrt %151 : vector<32x1xf32>
    %153 = vector.broadcast %152 : vector<32x1xf32> to vector<32x32xf32>
    %154 = arith.mulf %149, %153 : vector<32x32xf32>
    %155 = vector.broadcast %135 : vector<1x32xf32> to vector<32x32xf32>
    %156 = arith.mulf %154, %155 : vector<32x32xf32>
    %157 = vector.broadcast %136 : vector<1x32xf32> to vector<32x32xf32>
    %158 = arith.addf %156, %157 : vector<32x32xf32>
    %159 = arith.truncf %158 : vector<32x32xf32> to vector<32x32xbf16>
    %c128 = arith.constant 128 : index
    %c0_146 = arith.constant 0 : index
    %160 = vector.load %arg1[%c128, %c0_146] : memref<264x128xbf16, #tpu.memory_space<vmem>>, vector<32x64xbf16>
    %cst_147 = arith.constant dense<0.000000e+00> : vector<32x64xf32>
    %161 = tpu.matmul %159, %160, %cst_147 {dimension_numbers = #tpu.dot_dimension_numbers<[1], [0], [0], [1], [0, 0, 1, 1], [], []>} : vector<32x32xbf16>, vector<32x64xbf16>, vector<32x64xf32> -> vector<32x64xf32>
    %c104 = arith.constant 104 : index
    %c0_148 = arith.constant 0 : index
    %162 = vector.load %arg2[%c104, %c0_148] : memref<144x128xf32, #tpu.memory_space<vmem>>, vector<1x64xf32>
    %163 = vector.broadcast %162 : vector<1x64xf32> to vector<32x64xf32>
    %164 = arith.addf %161, %163 : vector<32x64xf32>
    %cst_149 = arith.constant 5.000000e-01 : f32
    %165 = vector.broadcast %cst_149 : f32 to vector<32x64xf32>
    %166 = arith.mulf %165, %164 : vector<32x64xf32>
    %cst_150 = arith.constant 0.707106769 : f32
    %167 = vector.broadcast %cst_150 : f32 to vector<32x64xf32>
    %168 = arith.mulf %164, %167 : vector<32x64xf32>
    %169 = math.erf %168 : vector<32x64xf32>
    %cst_151 = arith.constant 1.000000e+00 : f32
    %170 = vector.broadcast %cst_151 : f32 to vector<32x64xf32>
    %171 = arith.addf %170, %169 : vector<32x64xf32>
    %172 = arith.mulf %166, %171 : vector<32x64xf32>
    %173 = arith.truncf %172 : vector<32x64xf32> to vector<32x64xbf16>
    %c160 = arith.constant 160 : index
    %c0_152 = arith.constant 0 : index
    %174 = vector.load %arg1[%c160, %c0_152] : memref<264x128xbf16, #tpu.memory_space<vmem>>, vector<64x32xbf16>
    %cst_153 = arith.constant dense<0.000000e+00> : vector<32x32xf32>
    %175 = tpu.matmul %173, %174, %cst_153 {dimension_numbers = #tpu.dot_dimension_numbers<[1], [0], [0], [1], [0, 0, 1, 1], [], []>} : vector<32x64xbf16>, vector<64x32xbf16>, vector<32x32xf32> -> vector<32x32xf32>
    %c112 = arith.constant 112 : index
    %c0_154 = arith.constant 0 : index
    %176 = vector.load %arg2[%c112, %c0_154] : memref<144x128xf32, #tpu.memory_space<vmem>>, vector<1x32xf32>
    %177 = vector.broadcast %176 : vector<1x32xf32> to vector<32x32xf32>
    %178 = arith.addf %175, %177 : vector<32x32xf32>
    %179 = arith.addf %134, %178 : vector<32x32xf32>
    %180 = arith.truncf %179 : vector<32x32xf32> to vector<32x32xbf16>
    %c64_155 = arith.constant 64 : index
    %c0_156 = arith.constant 0 : index
    %181 = vector.load %arg1[%c64_155, %c0_156] : memref<264x128xbf16, #tpu.memory_space<vmem>>, vector<32x96xbf16>
    %cst_157 = arith.constant dense<0.000000e+00> : vector<32x96xf32>
    %182 = tpu.matmul %180, %181, %cst_157 {dimension_numbers = #tpu.dot_dimension_numbers<[1], [0], [0], [1], [0, 0, 1, 1], [], []>} : vector<32x32xbf16>, vector<32x96xbf16>, vector<32x96xf32> -> vector<32x96xf32>
    %c72_158 = arith.constant 72 : index
    %c0_159 = arith.constant 0 : index
    %183 = vector.load %arg2[%c72_158, %c0_159] : memref<144x128xf32, #tpu.memory_space<vmem>>, vector<1x96xf32>
    %184 = vector.broadcast %183 : vector<1x96xf32> to vector<32x96xf32>
    %185 = arith.addf %182, %184 : vector<32x96xf32>
    %186 = arith.truncf %185 : vector<32x96xf32> to vector<32x96xbf16>
    %c0_160 = arith.constant 0 : index
    %c0_161 = arith.constant 0 : index
    %187 = vector.load %arg4[%c0_160, %c0_161] : memref<32x96xbf16, #tpu.memory_space<vmem>>, vector<32x96xbf16>
    tpu.vector_store %arg4[%c0_160, %c0_161], %186 {strides = array<i32>} : memref<32x96xbf16, #tpu.memory_space<vmem>>, vector<32x96xbf16>,
    %c0_162 = arith.constant 0 : index
    %c0_163 = arith.constant 0 : index
    %188 = vector.load %arg4[%c0_162, %c0_163] : memref<32x96xbf16, #tpu.memory_space<vmem>>, vector<16x8xbf16>
    %c0_164 = arith.constant 0 : index
    %c32_165 = arith.constant 32 : index
    %189 = vector.load %arg4[%c0_164, %c32_165] : memref<32x96xbf16, #tpu.memory_space<vmem>>, vector<16x8xbf16>
    %190 = tpu.transpose %189, [1, 0] : vector<16x8xbf16> -> vector<8x16xbf16>
    %cst_166 = arith.constant dense<0.000000e+00> : vector<16x16xf32>
    %191 = tpu.matmul %188, %190, %cst_166 {dimension_numbers = #tpu.dot_dimension_numbers<[1], [0], [0], [1], [0, 0, 1, 1], [], []>} : vector<16x8xbf16>, vector<8x16xbf16>, vector<16x16xf32> -> vector<16x16xf32>
    %c0_167 = arith.constant 0 : index
    %c0_168 = arith.constant 0 : index
    %192 = vector.load %arg5[%c0_167, %c0_168] : memref<64x16xf32, #tpu.memory_space<vmem>>, vector<16x16xf32>
    tpu.vector_store %arg5[%c0_167, %c0_168], %191 {strides = array<i32>} : memref<64x16xf32, #tpu.memory_space<vmem>>, vector<16x16xf32>,
    %c0_169 = arith.constant 0 : index
    %c8_170 = arith.constant 8 : index
    %193 = vector.load %arg4[%c0_169, %c8_170] : memref<32x96xbf16, #tpu.memory_space<vmem>>, vector<16x8xbf16>
    %c0_171 = arith.constant 0 : index
    %c40_172 = arith.constant 40 : index
    %194 = vector.load %arg4[%c0_171, %c40_172] : memref<32x96xbf16, #tpu.memory_space<vmem>>, vector<16x8xbf16>
    %195 = tpu.transpose %194, [1, 0] : vector<16x8xbf16> -> vector<8x16xbf16>
    %cst_173 = arith.constant dense<0.000000e+00> : vector<16x16xf32>
    %196 = tpu.matmul %193, %195, %cst_173 {dimension_numbers = #tpu.dot_dimension_numbers<[1], [0], [0], [1], [0, 0, 1, 1], [], []>} : vector<16x8xbf16>, vector<8x16xbf16>, vector<16x16xf32> -> vector<16x16xf32>
    %c16_174 = arith.constant 16 : index
    %c0_175 = arith.constant 0 : index
    %197 = vector.load %arg5[%c16_174, %c0_175] : memref<64x16xf32, #tpu.memory_space<vmem>>, vector<16x16xf32>
    tpu.vector_store %arg5[%c16_174, %c0_175], %196 {strides = array<i32>} : memref<64x16xf32, #tpu.memory_space<vmem>>, vector<16x16xf32>,
    %c0_176 = arith.constant 0 : index
    %c16_177 = arith.constant 16 : index
    %198 = vector.load %arg4[%c0_176, %c16_177] : memref<32x96xbf16, #tpu.memory_space<vmem>>, vector<16x8xbf16>
    %c0_178 = arith.constant 0 : index
    %c48_179 = arith.constant 48 : index
    %199 = vector.load %arg4[%c0_178, %c48_179] : memref<32x96xbf16, #tpu.memory_space<vmem>>, vector<16x8xbf16>
    %200 = tpu.transpose %199, [1, 0] : vector<16x8xbf16> -> vector<8x16xbf16>
    %cst_180 = arith.constant dense<0.000000e+00> : vector<16x16xf32>
    %201 = tpu.matmul %198, %200, %cst_180 {dimension_numbers = #tpu.dot_dimension_numbers<[1], [0], [0], [1], [0, 0, 1, 1], [], []>} : vector<16x8xbf16>, vector<8x16xbf16>, vector<16x16xf32> -> vector<16x16xf32>
    %c32_181 = arith.constant 32 : index
    %c0_182 = arith.constant 0 : index
    %202 = vector.load %arg5[%c32_181, %c0_182] : memref<64x16xf32, #tpu.memory_space<vmem>>, vector<16x16xf32>
    tpu.vector_store %arg5[%c32_181, %c0_182], %201 {strides = array<i32>} : memref<64x16xf32, #tpu.memory_space<vmem>>, vector<16x16xf32>,
    %c0_183 = arith.constant 0 : index
    %c24_184 = arith.constant 24 : index
    %203 = vector.load %arg4[%c0_183, %c24_184] : memref<32x96xbf16, #tpu.memory_space<vmem>>, vector<16x8xbf16>
    %c0_185 = arith.constant 0 : index
    %c56_186 = arith.constant 56 : index
    %204 = vector.load %arg4[%c0_185, %c56_186] : memref<32x96xbf16, #tpu.memory_space<vmem>>, vector<16x8xbf16>
    %205 = tpu.transpose %204, [1, 0] : vector<16x8xbf16> -> vector<8x16xbf16>
    %cst_187 = arith.constant dense<0.000000e+00> : vector<16x16xf32>
    %206 = tpu.matmul %203, %205, %cst_187 {dimension_numbers = #tpu.dot_dimension_numbers<[1], [0], [0], [1], [0, 0, 1, 1], [], []>} : vector<16x8xbf16>, vector<8x16xbf16>, vector<16x16xf32> -> vector<16x16xf32>
    %c48_188 = arith.constant 48 : index
    %c0_189 = arith.constant 0 : index
    %207 = vector.load %arg5[%c48_188, %c0_189] : memref<64x16xf32, #tpu.memory_space<vmem>>, vector<16x16xf32>
    tpu.vector_store %arg5[%c48_188, %c0_189], %206 {strides = array<i32>} : memref<64x16xf32, #tpu.memory_space<vmem>>, vector<16x16xf32>,
    %c0_190 = arith.constant 0 : index
    %c0_191 = arith.constant 0 : index
    %208 = vector.load %arg5[%c0_190, %c0_191] : memref<64x16xf32, #tpu.memory_space<vmem>>, vector<64x16xf32>
    %cst_192 = arith.constant 0.353553385 : f32
    %209 = vector.broadcast %cst_192 : f32 to vector<64x16xf32>
    %210 = arith.mulf %208, %209 : vector<64x16xf32>
    %c0_193 = arith.constant 0 : index
    %c0_194 = arith.constant 0 : index
    %211 = vector.load %arg2[%c0_193, %c0_194] : memref<144x128xf32, #tpu.memory_space<vmem>>, vector<64x16xf32>
    %212 = arith.addf %210, %211 : vector<64x16xf32>
    %cst_195 = arith.constant dense<0xFF800000> : vector<64xf32>
    %213 = vector.multi_reduction <maximumf>, %212, %cst_195 [1] : vector<64x16xf32> to vector<64xf32>
    %214 = vector.shape_cast %213 : vector<64xf32> to vector<64x1xf32>
    %215 = vector.broadcast %214 : vector<64x1xf32> to vector<64x16xf32>
    %216 = arith.subf %212, %215 : vector<64x16xf32>
    %217 = math.exp %216 : vector<64x16xf32>
    %cst_196 = arith.constant dense<0.000000e+00> : vector<64xf32>
    %218 = vector.multi_reduction <add>, %217, %cst_196 [1] : vector<64x16xf32> to vector<64xf32>
    %219 = vector.shape_cast %218 : vector<64xf32> to vector<64x1xf32>
    %220 = tpu.reciprocal %219 {approx = true} : vector<64x1xf32> -> vector<64x1xf32>
    %221 = vector.broadcast %220 : vector<64x1xf32> to vector<64x16xf32>
    %222 = arith.mulf %217, %221 : vector<64x16xf32>
    %223 = arith.truncf %222 : vector<64x16xf32> to vector<64x16xbf16>
    %c0_197 = arith.constant 0 : index
    %c0_198 = arith.constant 0 : index
    %224 = vector.load %arg6[%c0_197, %c0_198] : memref<64x16xbf16, #tpu.memory_space<vmem>>, vector<64x16xbf16>
    tpu.vector_store %arg6[%c0_197, %c0_198], %223 {strides = array<i32>} : memref<64x16xbf16, #tpu.memory_space<vmem>>, vector<64x16xbf16>,
    %c0_199 = arith.constant 0 : index
    %c64_200 = arith.constant 64 : index
    %225 = vector.load %arg4[%c0_199, %c64_200] : memref<32x96xbf16, #tpu.memory_space<vmem>>, vector<16x8xbf16>
    %c0_201 = arith.constant 0 : index
    %c0_202 = arith.constant 0 : index
    %226 = vector.load %arg6[%c0_201, %c0_202] : memref<64x16xbf16, #tpu.memory_space<vmem>>, vector<16x16xbf16>
    %cst_203 = arith.constant dense<0.000000e+00> : vector<16x8xf32>
    %227 = tpu.matmul %226, %225, %cst_203 {dimension_numbers = #tpu.dot_dimension_numbers<[1], [0], [0], [1], [0, 0, 1, 1], [], []>} : vector<16x16xbf16>, vector<16x8xbf16>, vector<16x8xf32> -> vector<16x8xf32>
    %228 = arith.truncf %227 : vector<16x8xf32> to vector<16x8xbf16>
    %c0_204 = arith.constant 0 : index
    %c0_205 = arith.constant 0 : index
    %229 = vector.load %arg7[%c0_204, %c0_205] : memref<32x32xbf16, #tpu.memory_space<vmem>>, vector<16x8xbf16>
    tpu.vector_store %arg7[%c0_204, %c0_205], %228 {strides = array<i32>} : memref<32x32xbf16, #tpu.memory_space<vmem>>, vector<16x8xbf16>,
    %c0_206 = arith.constant 0 : index
    %c72_207 = arith.constant 72 : index
    %230 = vector.load %arg4[%c0_206, %c72_207] : memref<32x96xbf16, #tpu.memory_space<vmem>>, vector<16x8xbf16>
    %c16_208 = arith.constant 16 : index
    %c0_209 = arith.constant 0 : index
    %231 = vector.load %arg6[%c16_208, %c0_209] : memref<64x16xbf16, #tpu.memory_space<vmem>>, vector<16x16xbf16>
    %cst_210 = arith.constant dense<0.000000e+00> : vector<16x8xf32>
    %232 = tpu.matmul %231, %230, %cst_210 {dimension_numbers = #tpu.dot_dimension_numbers<[1], [0], [0], [1], [0, 0, 1, 1], [], []>} : vector<16x16xbf16>, vector<16x8xbf16>, vector<16x8xf32> -> vector<16x8xf32>
    %233 = arith.truncf %232 : vector<16x8xf32> to vector<16x8xbf16>
    %c0_211 = arith.constant 0 : index
    %c8_212 = arith.constant 8 : index
    %234 = vector.load %arg7[%c0_211, %c8_212] : memref<32x32xbf16, #tpu.memory_space<vmem>>, vector<16x8xbf16>
    tpu.vector_store %arg7[%c0_211, %c8_212], %233 {strides = array<i32>} : memref<32x32xbf16, #tpu.memory_space<vmem>>, vector<16x8xbf16>,
    %c0_213 = arith.constant 0 : index
    %c80_214 = arith.constant 80 : index
    %235 = vector.load %arg4[%c0_213, %c80_214] : memref<32x96xbf16, #tpu.memory_space<vmem>>, vector<16x8xbf16>
    %c32_215 = arith.constant 32 : index
    %c0_216 = arith.constant 0 : index
    %236 = vector.load %arg6[%c32_215, %c0_216] : memref<64x16xbf16, #tpu.memory_space<vmem>>, vector<16x16xbf16>
    %cst_217 = arith.constant dense<0.000000e+00> : vector<16x8xf32>
    %237 = tpu.matmul %236, %235, %cst_217 {dimension_numbers = #tpu.dot_dimension_numbers<[1], [0], [0], [1], [0, 0, 1, 1], [], []>} : vector<16x16xbf16>, vector<16x8xbf16>, vector<16x8xf32> -> vector<16x8xf32>
    %238 = arith.truncf %237 : vector<16x8xf32> to vector<16x8xbf16>
    %c0_218 = arith.constant 0 : index
    %c16_219 = arith.constant 16 : index
    %239 = vector.load %arg7[%c0_218, %c16_219] : memref<32x32xbf16, #tpu.memory_space<vmem>>, vector<16x8xbf16>
    tpu.vector_store %arg7[%c0_218, %c16_219], %238 {strides = array<i32>} : memref<32x32xbf16, #tpu.memory_space<vmem>>, vector<16x8xbf16>,
    %c0_220 = arith.constant 0 : index
    %c88_221 = arith.constant 88 : index
    %240 = vector.load %arg4[%c0_220, %c88_221] : memref<32x96xbf16, #tpu.memory_space<vmem>>, vector<16x8xbf16>
    %c48_222 = arith.constant 48 : index
    %c0_223 = arith.constant 0 : index
    %241 = vector.load %arg6[%c48_222, %c0_223] : memref<64x16xbf16, #tpu.memory_space<vmem>>, vector<16x16xbf16>
    %cst_224 = arith.constant dense<0.000000e+00> : vector<16x8xf32>
    %242 = tpu.matmul %241, %240, %cst_224 {dimension_numbers = #tpu.dot_dimension_numbers<[1], [0], [0], [1], [0, 0, 1, 1], [], []>} : vector<16x16xbf16>, vector<16x8xbf16>, vector<16x8xf32> -> vector<16x8xf32>
    %243 = arith.truncf %242 : vector<16x8xf32> to vector<16x8xbf16>
    %c0_225 = arith.constant 0 : index
    %c24_226 = arith.constant 24 : index
    %244 = vector.load %arg7[%c0_225, %c24_226] : memref<32x32xbf16, #tpu.memory_space<vmem>>, vector<16x8xbf16>
    tpu.vector_store %arg7[%c0_225, %c24_226], %243 {strides = array<i32>} : memref<32x32xbf16, #tpu.memory_space<vmem>>, vector<16x8xbf16>,
    %c16_227 = arith.constant 16 : index
    %c0_228 = arith.constant 0 : index
    %245 = vector.load %arg4[%c16_227, %c0_228] : memref<32x96xbf16, #tpu.memory_space<vmem>>, vector<16x8xbf16>
    %c16_229 = arith.constant 16 : index
    %c32_230 = arith.constant 32 : index
    %246 = vector.load %arg4[%c16_229, %c32_230] : memref<32x96xbf16, #tpu.memory_space<vmem>>, vector<16x8xbf16>
    %247 = tpu.transpose %246, [1, 0] : vector<16x8xbf16> -> vector<8x16xbf16>
    %cst_231 = arith.constant dense<0.000000e+00> : vector<16x16xf32>
    %248 = tpu.matmul %245, %247, %cst_231 {dimension_numbers = #tpu.dot_dimension_numbers<[1], [0], [0], [1], [0, 0, 1, 1], [], []>} : vector<16x8xbf16>, vector<8x16xbf16>, vector<16x16xf32> -> vector<16x16xf32>
    %c0_232 = arith.constant 0 : index
    %c0_233 = arith.constant 0 : index
    %249 = vector.load %arg5[%c0_232, %c0_233] : memref<64x16xf32, #tpu.memory_space<vmem>>, vector<16x16xf32>
    tpu.vector_store %arg5[%c0_232, %c0_233], %248 {strides = array<i32>} : memref<64x16xf32, #tpu.memory_space<vmem>>, vector<16x16xf32>,
    %c16_234 = arith.constant 16 : index
    %c8_235 = arith.constant 8 : index
    %250 = vector.load %arg4[%c16_234, %c8_235] : memref<32x96xbf16, #tpu.memory_space<vmem>>, vector<16x8xbf16>
    %c16_236 = arith.constant 16 : index
    %c40_237 = arith.constant 40 : index
    %251 = vector.load %arg4[%c16_236, %c40_237] : memref<32x96xbf16, #tpu.memory_space<vmem>>, vector<16x8xbf16>
    %252 = tpu.transpose %251, [1, 0] : vector<16x8xbf16> -> vector<8x16xbf16>
    %cst_238 = arith.constant dense<0.000000e+00> : vector<16x16xf32>
    %253 = tpu.matmul %250, %252, %cst_238 {dimension_numbers = #tpu.dot_dimension_numbers<[1], [0], [0], [1], [0, 0, 1, 1], [], []>} : vector<16x8xbf16>, vector<8x16xbf16>, vector<16x16xf32> -> vector<16x16xf32>
    %c16_239 = arith.constant 16 : index
    %c0_240 = arith.constant 0 : index
    %254 = vector.load %arg5[%c16_239, %c0_240] : memref<64x16xf32, #tpu.memory_space<vmem>>, vector<16x16xf32>
    tpu.vector_store %arg5[%c16_239, %c0_240], %253 {strides = array<i32>} : memref<64x16xf32, #tpu.memory_space<vmem>>, vector<16x16xf32>,
    %c16_241 = arith.constant 16 : index
    %c16_242 = arith.constant 16 : index
    %255 = vector.load %arg4[%c16_241, %c16_242] : memref<32x96xbf16, #tpu.memory_space<vmem>>, vector<16x8xbf16>
    %c16_243 = arith.constant 16 : index
    %c48_244 = arith.constant 48 : index
    %256 = vector.load %arg4[%c16_243, %c48_244] : memref<32x96xbf16, #tpu.memory_space<vmem>>, vector<16x8xbf16>
    %257 = tpu.transpose %256, [1, 0] : vector<16x8xbf16> -> vector<8x16xbf16>
    %cst_245 = arith.constant dense<0.000000e+00> : vector<16x16xf32>
    %258 = tpu.matmul %255, %257, %cst_245 {dimension_numbers = #tpu.dot_dimension_numbers<[1], [0], [0], [1], [0, 0, 1, 1], [], []>} : vector<16x8xbf16>, vector<8x16xbf16>, vector<16x16xf32> -> vector<16x16xf32>
    %c32_246 = arith.constant 32 : index
    %c0_247 = arith.constant 0 : index
    %259 = vector.load %arg5[%c32_246, %c0_247] : memref<64x16xf32, #tpu.memory_space<vmem>>, vector<16x16xf32>
    tpu.vector_store %arg5[%c32_246, %c0_247], %258 {strides = array<i32>} : memref<64x16xf32, #tpu.memory_space<vmem>>, vector<16x16xf32>,
    %c16_248 = arith.constant 16 : index
    %c24_249 = arith.constant 24 : index
    %260 = vector.load %arg4[%c16_248, %c24_249] : memref<32x96xbf16, #tpu.memory_space<vmem>>, vector<16x8xbf16>
    %c16_250 = arith.constant 16 : index
    %c56_251 = arith.constant 56 : index
    %261 = vector.load %arg4[%c16_250, %c56_251] : memref<32x96xbf16, #tpu.memory_space<vmem>>, vector<16x8xbf16>
    %262 = tpu.transpose %261, [1, 0] : vector<16x8xbf16> -> vector<8x16xbf16>
    %cst_252 = arith.constant dense<0.000000e+00> : vector<16x16xf32>
    %263 = tpu.matmul %260, %262, %cst_252 {dimension_numbers = #tpu.dot_dimension_numbers<[1], [0], [0], [1], [0, 0, 1, 1], [], []>} : vector<16x8xbf16>, vector<8x16xbf16>, vector<16x16xf32> -> vector<16x16xf32>
    %c48_253 = arith.constant 48 : index
    %c0_254 = arith.constant 0 : index
    %264 = vector.load %arg5[%c48_253, %c0_254] : memref<64x16xf32, #tpu.memory_space<vmem>>, vector<16x16xf32>
    tpu.vector_store %arg5[%c48_253, %c0_254], %263 {strides = array<i32>} : memref<64x16xf32, #tpu.memory_space<vmem>>, vector<16x16xf32>,
    %c0_255 = arith.constant 0 : index
    %c0_256 = arith.constant 0 : index
    %265 = vector.load %arg5[%c0_255, %c0_256] : memref<64x16xf32, #tpu.memory_space<vmem>>, vector<64x16xf32>
    %cst_257 = arith.constant 0.353553385 : f32
    %266 = vector.broadcast %cst_257 : f32 to vector<64x16xf32>
    %267 = arith.mulf %265, %266 : vector<64x16xf32>
    %c0_258 = arith.constant 0 : index
    %c0_259 = arith.constant 0 : index
    %268 = vector.load %arg2[%c0_258, %c0_259] : memref<144x128xf32, #tpu.memory_space<vmem>>, vector<64x16xf32>
    %269 = arith.addf %267, %268 : vector<64x16xf32>
    %cst_260 = arith.constant dense<0xFF800000> : vector<64xf32>
    %270 = vector.multi_reduction <maximumf>, %269, %cst_260 [1] : vector<64x16xf32> to vector<64xf32>
    %271 = vector.shape_cast %270 : vector<64xf32> to vector<64x1xf32>
    %272 = vector.broadcast %271 : vector<64x1xf32> to vector<64x16xf32>
    %273 = arith.subf %269, %272 : vector<64x16xf32>
    %274 = math.exp %273 : vector<64x16xf32>
    %cst_261 = arith.constant dense<0.000000e+00> : vector<64xf32>
    %275 = vector.multi_reduction <add>, %274, %cst_261 [1] : vector<64x16xf32> to vector<64xf32>
    %276 = vector.shape_cast %275 : vector<64xf32> to vector<64x1xf32>
    %277 = tpu.reciprocal %276 {approx = true} : vector<64x1xf32> -> vector<64x1xf32>
    %278 = vector.broadcast %277 : vector<64x1xf32> to vector<64x16xf32>
    %279 = arith.mulf %274, %278 : vector<64x16xf32>
    %280 = arith.truncf %279 : vector<64x16xf32> to vector<64x16xbf16>
    %c0_262 = arith.constant 0 : index
    %c0_263 = arith.constant 0 : index
    %281 = vector.load %arg6[%c0_262, %c0_263] : memref<64x16xbf16, #tpu.memory_space<vmem>>, vector<64x16xbf16>
    tpu.vector_store %arg6[%c0_262, %c0_263], %280 {strides = array<i32>} : memref<64x16xbf16, #tpu.memory_space<vmem>>, vector<64x16xbf16>,
    %c16_264 = arith.constant 16 : index
    %c64_265 = arith.constant 64 : index
    %282 = vector.load %arg4[%c16_264, %c64_265] : memref<32x96xbf16, #tpu.memory_space<vmem>>, vector<16x8xbf16>
    %c0_266 = arith.constant 0 : index
    %c0_267 = arith.constant 0 : index
    %283 = vector.load %arg6[%c0_266, %c0_267] : memref<64x16xbf16, #tpu.memory_space<vmem>>, vector<16x16xbf16>
    %cst_268 = arith.constant dense<0.000000e+00> : vector<16x8xf32>
    %284 = tpu.matmul %283, %282, %cst_268 {dimension_numbers = #tpu.dot_dimension_numbers<[1], [0], [0], [1], [0, 0, 1, 1], [], []>} : vector<16x16xbf16>, vector<16x8xbf16>, vector<16x8xf32> -> vector<16x8xf32>
    %285 = arith.truncf %284 : vector<16x8xf32> to vector<16x8xbf16>
    %c16_269 = arith.constant 16 : index
    %c0_270 = arith.constant 0 : index
    %286 = vector.load %arg7[%c16_269, %c0_270] : memref<32x32xbf16, #tpu.memory_space<vmem>>, vector<16x8xbf16>
    tpu.vector_store %arg7[%c16_269, %c0_270], %285 {strides = array<i32>} : memref<32x32xbf16, #tpu.memory_space<vmem>>, vector<16x8xbf16>,
    %c16_271 = arith.constant 16 : index
    %c72_272 = arith.constant 72 : index
    %287 = vector.load %arg4[%c16_271, %c72_272] : memref<32x96xbf16, #tpu.memory_space<vmem>>, vector<16x8xbf16>
    %c16_273 = arith.constant 16 : index
    %c0_274 = arith.constant 0 : index
    %288 = vector.load %arg6[%c16_273, %c0_274] : memref<64x16xbf16, #tpu.memory_space<vmem>>, vector<16x16xbf16>
    %cst_275 = arith.constant dense<0.000000e+00> : vector<16x8xf32>
    %289 = tpu.matmul %288, %287, %cst_275 {dimension_numbers = #tpu.dot_dimension_numbers<[1], [0], [0], [1], [0, 0, 1, 1], [], []>} : vector<16x16xbf16>, vector<16x8xbf16>, vector<16x8xf32> -> vector<16x8xf32>
    %290 = arith.truncf %289 : vector<16x8xf32> to vector<16x8xbf16>
    %c16_276 = arith.constant 16 : index
    %c8_277 = arith.constant 8 : index
    %291 = vector.load %arg7[%c16_276, %c8_277] : memref<32x32xbf16, #tpu.memory_space<vmem>>, vector<16x8xbf16>
    tpu.vector_store %arg7[%c16_276, %c8_277], %290 {strides = array<i32>} : memref<32x32xbf16, #tpu.memory_space<vmem>>, vector<16x8xbf16>,
    %c16_278 = arith.constant 16 : index
    %c80_279 = arith.constant 80 : index
    %292 = vector.load %arg4[%c16_278, %c80_279] : memref<32x96xbf16, #tpu.memory_space<vmem>>, vector<16x8xbf16>
    %c32_280 = arith.constant 32 : index
    %c0_281 = arith.constant 0 : index
    %293 = vector.load %arg6[%c32_280, %c0_281] : memref<64x16xbf16, #tpu.memory_space<vmem>>, vector<16x16xbf16>
    %cst_282 = arith.constant dense<0.000000e+00> : vector<16x8xf32>
    %294 = tpu.matmul %293, %292, %cst_282 {dimension_numbers = #tpu.dot_dimension_numbers<[1], [0], [0], [1], [0, 0, 1, 1], [], []>} : vector<16x16xbf16>, vector<16x8xbf16>, vector<16x8xf32> -> vector<16x8xf32>
    %295 = arith.truncf %294 : vector<16x8xf32> to vector<16x8xbf16>
    %c16_283 = arith.constant 16 : index
    %c16_284 = arith.constant 16 : index
    %296 = vector.load %arg7[%c16_283, %c16_284] : memref<32x32xbf16, #tpu.memory_space<vmem>>, vector<16x8xbf16>
    tpu.vector_store %arg7[%c16_283, %c16_284], %295 {strides = array<i32>} : memref<32x32xbf16, #tpu.memory_space<vmem>>, vector<16x8xbf16>,
    %c16_285 = arith.constant 16 : index
    %c88_286 = arith.constant 88 : index
    %297 = vector.load %arg4[%c16_285, %c88_286] : memref<32x96xbf16, #tpu.memory_space<vmem>>, vector<16x8xbf16>
    %c48_287 = arith.constant 48 : index
    %c0_288 = arith.constant 0 : index
    %298 = vector.load %arg6[%c48_287, %c0_288] : memref<64x16xbf16, #tpu.memory_space<vmem>>, vector<16x16xbf16>
    %cst_289 = arith.constant dense<0.000000e+00> : vector<16x8xf32>
    %299 = tpu.matmul %298, %297, %cst_289 {dimension_numbers = #tpu.dot_dimension_numbers<[1], [0], [0], [1], [0, 0, 1, 1], [], []>} : vector<16x16xbf16>, vector<16x8xbf16>, vector<16x8xf32> -> vector<16x8xf32>
    %300 = arith.truncf %299 : vector<16x8xf32> to vector<16x8xbf16>
    %c16_290 = arith.constant 16 : index
    %c24_291 = arith.constant 24 : index
    %301 = vector.load %arg7[%c16_290, %c24_291] : memref<32x32xbf16, #tpu.memory_space<vmem>>, vector<16x8xbf16>
    tpu.vector_store %arg7[%c16_290, %c24_291], %300 {strides = array<i32>} : memref<32x32xbf16, #tpu.memory_space<vmem>>, vector<16x8xbf16>,
    %c0_292 = arith.constant 0 : index
    %c0_293 = arith.constant 0 : index
    %302 = vector.load %arg7[%c0_292, %c0_293] : memref<32x32xbf16, #tpu.memory_space<vmem>>, vector<32x32xbf16>
    %c96_294 = arith.constant 96 : index
    %c0_295 = arith.constant 0 : index
    %303 = vector.load %arg1[%c96_294, %c0_295] : memref<264x128xbf16, #tpu.memory_space<vmem>>, vector<32x32xbf16>
    %cst_296 = arith.constant dense<0.000000e+00> : vector<32x32xf32>
    %304 = tpu.matmul %302, %303, %cst_296 {dimension_numbers = #tpu.dot_dimension_numbers<[1], [0], [0], [1], [0, 0, 1, 1], [], []>} : vector<32x32xbf16>, vector<32x32xbf16>, vector<32x32xf32> -> vector<32x32xf32>
    %c80_297 = arith.constant 80 : index
    %c0_298 = arith.constant 0 : index
    %305 = vector.load %arg2[%c80_297, %c0_298] : memref<144x128xf32, #tpu.memory_space<vmem>>, vector<1x32xf32>
    %306 = vector.broadcast %305 : vector<1x32xf32> to vector<32x32xf32>
    %307 = arith.addf %304, %306 : vector<32x32xf32>
    %308 = arith.addf %179, %307 : vector<32x32xf32>
    %c88_299 = arith.constant 88 : index
    %c0_300 = arith.constant 0 : index
    %309 = vector.load %arg2[%c88_299, %c0_300] : memref<144x128xf32, #tpu.memory_space<vmem>>, vector<1x32xf32>
    %c96_301 = arith.constant 96 : index
    %c0_302 = arith.constant 0 : index
    %310 = vector.load %arg2[%c96_301, %c0_302] : memref<144x128xf32, #tpu.memory_space<vmem>>, vector<1x32xf32>
    %cst_303 = arith.constant dense<0.000000e+00> : vector<32xf32>
    %311 = vector.multi_reduction <add>, %308, %cst_303 [1] : vector<32x32xf32> to vector<32xf32>
    %312 = vector.shape_cast %311 : vector<32xf32> to vector<32x1xf32>
    %cst_304 = arith.constant 3.200000e+01 : f32
    %313 = vector.broadcast %cst_304 : f32 to vector<32x1xf32>
    %314 = arith.divf %312, %313 : vector<32x1xf32>
    %315 = vector.broadcast %314 : vector<32x1xf32> to vector<32x32xf32>
    %316 = arith.subf %308, %315 : vector<32x32xf32>
    %317 = arith.mulf %316, %316 : vector<32x32xf32>
    %cst_305 = arith.constant dense<0.000000e+00> : vector<32xf32>
    %318 = vector.multi_reduction <add>, %317, %cst_305 [1] : vector<32x32xf32> to vector<32xf32>
    %319 = vector.shape_cast %318 : vector<32xf32> to vector<32x1xf32>
    %cst_306 = arith.constant 3.200000e+01 : f32
    %320 = vector.broadcast %cst_306 : f32 to vector<32x1xf32>
    %321 = arith.divf %319, %320 : vector<32x1xf32>
    %322 = vector.broadcast %314 : vector<32x1xf32> to vector<32x32xf32>
    %323 = arith.subf %308, %322 : vector<32x32xf32>
    %cst_307 = arith.constant 9.99999974E-6 : f32
    %324 = vector.broadcast %cst_307 : f32 to vector<32x1xf32>
    %325 = arith.addf %321, %324 : vector<32x1xf32>
    %326 = math.rsqrt %325 : vector<32x1xf32>
    %327 = vector.broadcast %326 : vector<32x1xf32> to vector<32x32xf32>
    %328 = arith.mulf %323, %327 : vector<32x32xf32>
    %329 = vector.broadcast %309 : vector<1x32xf32> to vector<32x32xf32>
    %330 = arith.mulf %328, %329 : vector<32x32xf32>
    %331 = vector.broadcast %310 : vector<1x32xf32> to vector<32x32xf32>
    %332 = arith.addf %330, %331 : vector<32x32xf32>
    %333 = arith.truncf %332 : vector<32x32xf32> to vector<32x32xbf16>
    %c128_308 = arith.constant 128 : index
    %c0_309 = arith.constant 0 : index
    %334 = vector.load %arg1[%c128_308, %c0_309] : memref<264x128xbf16, #tpu.memory_space<vmem>>, vector<32x64xbf16>
    %cst_310 = arith.constant dense<0.000000e+00> : vector<32x64xf32>
    %335 = tpu.matmul %333, %334, %cst_310 {dimension_numbers = #tpu.dot_dimension_numbers<[1], [0], [0], [1], [0, 0, 1, 1], [], []>} : vector<32x32xbf16>, vector<32x64xbf16>, vector<32x64xf32> -> vector<32x64xf32>
    %c104_311 = arith.constant 104 : index
    %c0_312 = arith.constant 0 : index
    %336 = vector.load %arg2[%c104_311, %c0_312] : memref<144x128xf32, #tpu.memory_space<vmem>>, vector<1x64xf32>
    %337 = vector.broadcast %336 : vector<1x64xf32> to vector<32x64xf32>
    %338 = arith.addf %335, %337 : vector<32x64xf32>
    %cst_313 = arith.constant 5.000000e-01 : f32
    %339 = vector.broadcast %cst_313 : f32 to vector<32x64xf32>
    %340 = arith.mulf %339, %338 : vector<32x64xf32>
    %cst_314 = arith.constant 0.707106769 : f32
    %341 = vector.broadcast %cst_314 : f32 to vector<32x64xf32>
    %342 = arith.mulf %338, %341 : vector<32x64xf32>
    %343 = math.erf %342 : vector<32x64xf32>
    %cst_315 = arith.constant 1.000000e+00 : f32
    %344 = vector.broadcast %cst_315 : f32 to vector<32x64xf32>
    %345 = arith.addf %344, %343 : vector<32x64xf32>
    %346 = arith.mulf %340, %345 : vector<32x64xf32>
    %347 = arith.truncf %346 : vector<32x64xf32> to vector<32x64xbf16>
    %c160_316 = arith.constant 160 : index
    %c0_317 = arith.constant 0 : index
    %348 = vector.load %arg1[%c160_316, %c0_317] : memref<264x128xbf16, #tpu.memory_space<vmem>>, vector<64x32xbf16>
    %cst_318 = arith.constant dense<0.000000e+00> : vector<32x32xf32>
    %349 = tpu.matmul %347, %348, %cst_318 {dimension_numbers = #tpu.dot_dimension_numbers<[1], [0], [0], [1], [0, 0, 1, 1], [], []>} : vector<32x64xbf16>, vector<64x32xbf16>, vector<32x32xf32> -> vector<32x32xf32>
    %c112_319 = arith.constant 112 : index
    %c0_320 = arith.constant 0 : index
    %350 = vector.load %arg2[%c112_319, %c0_320] : memref<144x128xf32, #tpu.memory_space<vmem>>, vector<1x32xf32>
    %351 = vector.broadcast %350 : vector<1x32xf32> to vector<32x32xf32>
    %352 = arith.addf %349, %351 : vector<32x32xf32>
    %353 = arith.addf %308, %352 : vector<32x32xf32>
    %c120 = arith.constant 120 : index
    %c0_321 = arith.constant 0 : index
    %354 = vector.load %arg2[%c120, %c0_321] : memref<144x128xf32, #tpu.memory_space<vmem>>, vector<1x32xf32>
    %c128_322 = arith.constant 128 : index
    %c0_323 = arith.constant 0 : index
    %355 = vector.load %arg2[%c128_322, %c0_323] : memref<144x128xf32, #tpu.memory_space<vmem>>, vector<1x32xf32>
    %cst_324 = arith.constant dense<0.000000e+00> : vector<32xf32>
    %356 = vector.multi_reduction <add>, %353, %cst_324 [1] : vector<32x32xf32> to vector<32xf32>
    %357 = vector.shape_cast %356 : vector<32xf32> to vector<32x1xf32>
    %cst_325 = arith.constant 3.200000e+01 : f32
    %358 = vector.broadcast %cst_325 : f32 to vector<32x1xf32>
    %359 = arith.divf %357, %358 : vector<32x1xf32>
    %360 = vector.broadcast %359 : vector<32x1xf32> to vector<32x32xf32>
    %361 = arith.subf %353, %360 : vector<32x32xf32>
    %362 = arith.mulf %361, %361 : vector<32x32xf32>
    %cst_326 = arith.constant dense<0.000000e+00> : vector<32xf32>
    %363 = vector.multi_reduction <add>, %362, %cst_326 [1] : vector<32x32xf32> to vector<32xf32>
    %364 = vector.shape_cast %363 : vector<32xf32> to vector<32x1xf32>
    %cst_327 = arith.constant 3.200000e+01 : f32
    %365 = vector.broadcast %cst_327 : f32 to vector<32x1xf32>
    %366 = arith.divf %364, %365 : vector<32x1xf32>
    %367 = vector.broadcast %359 : vector<32x1xf32> to vector<32x32xf32>
    %368 = arith.subf %353, %367 : vector<32x32xf32>
    %cst_328 = arith.constant 9.99999974E-6 : f32
    %369 = vector.broadcast %cst_328 : f32 to vector<32x1xf32>
    %370 = arith.addf %366, %369 : vector<32x1xf32>
    %371 = math.rsqrt %370 : vector<32x1xf32>
    %372 = vector.broadcast %371 : vector<32x1xf32> to vector<32x32xf32>
    %373 = arith.mulf %368, %372 : vector<32x32xf32>
    %374 = vector.broadcast %354 : vector<1x32xf32> to vector<32x32xf32>
    %375 = arith.mulf %373, %374 : vector<32x32xf32>
    %376 = vector.broadcast %355 : vector<1x32xf32> to vector<32x32xf32>
    %377 = arith.addf %375, %376 : vector<32x32xf32>
    %c256 = arith.constant 256 : index
    %c0_329 = arith.constant 0 : index
    %378 = vector.load %arg1[%c256, %c0_329] : memref<264x128xbf16, #tpu.memory_space<vmem>>, vector<2x32xbf16>
    %379 = arith.truncf %377 : vector<32x32xf32> to vector<32x32xbf16>
    %cst_330 = arith.constant dense<0.000000e+00> : vector<2x32xf32>
    %380 = tpu.matmul %378, %379, %cst_330 {dimension_numbers = #tpu.dot_dimension_numbers<[1], [0], [0], [1], [0, 0, 1, 1], [], []>} : vector<2x32xbf16>, vector<32x32xbf16>, vector<2x32xf32> -> vector<2x32xf32>
    %381 = arith.truncf %380 : vector<2x32xf32> to vector<2x32xbf16>
    %c224 = arith.constant 224 : index
    %c0_331 = arith.constant 0 : index
    %382 = vector.load %arg1[%c224, %c0_331] : memref<264x128xbf16, #tpu.memory_space<vmem>>, vector<32x128xbf16>
    %cst_332 = arith.constant dense<0.000000e+00> : vector<2x128xf32>
    %383 = tpu.matmul %381, %382, %cst_332 {dimension_numbers = #tpu.dot_dimension_numbers<[1], [0], [0], [1], [0, 0, 1, 1], [], []>} : vector<2x32xbf16>, vector<32x128xbf16>, vector<2x128xf32> -> vector<2x128xf32>
    %c136 = arith.constant 136 : index
    %c0_333 = arith.constant 0 : index
    %384 = vector.load %arg2[%c136, %c0_333] : memref<144x128xf32, #tpu.memory_space<vmem>>, vector<1x128xf32>
    %385 = vector.broadcast %384 : vector<1x128xf32> to vector<2x128xf32>
    %386 = arith.addf %383, %385 : vector<2x128xf32>
    %c0_334 = arith.constant 0 : index
    %c0_335 = arith.constant 0 : index
    %387 = vector.load %arg3[%c0_334, %c0_335] : memref<2x128xf32, #tpu.memory_space<vmem>>, vector<2x128xf32>
    tpu.vector_store %arg3[%c0_334, %c0_335], %386 {strides = array<i32>} : memref<2x128xf32, #tpu.memory_space<vmem>>, vector<2x128xf32>,
    return
  }
}

</mosaic_0001>

<llo_original>
// kernel: vision_transformer_forward.1
$region0: #{vision_transformer_forward.1}
  #allocation0 [shape = 'u32[]', space=smem, size = 0x4, offset = 0x4, fixed_abs, tag = 'smem constant byte address 0x4 - core index']
  #allocation1 [shape = 'u32[144,128]{1,0:T(1,128)}', space=vmem, size = 0x12000, scoped, tag = 'internal scratch']
  #allocation2 [shape = 'bf16[32,96]{1,0:T(8,128)(2,1)}', space=vmem, size = 0x2000, scoped, tag = 'scratch operand']
  #allocation3 [shape = 'f32[64,16]{1,0:T(8,128)}', space=vmem, size = 0x8000, scoped, tag = 'scratch operand']
  #allocation4 [shape = 'bf16[64,16]{1,0:T(8,128)(2,1)}', space=vmem, size = 0x4000, scoped, tag = 'scratch operand']
  #allocation5 [shape = 'bf16[32,32]{1,0:T(8,128)(2,1)}', space=vmem, size = 0x2000, scoped, tag = 'scratch operand']
  %s0 = inlined_call_operand.vmem [shape: bf16[32,64], index: 0, kind: input, shape index: {}]
  %s1 = inlined_call_operand.vmem [shape: bf16[264,128], index: 1, kind: input, shape index: {}]
  %s2 = inlined_call_operand.vmem [shape: f32[144,128], index: 2, kind: input, shape index: {}]
  %s3 = inlined_call_operand.hbm [shape: f32[2,128], index: 3, kind: output, shape index: {}]
  %s4 = sld [smem:[#allocation0]]
  $region22: #{vision_transformer_forward.1} parent=0
    _
  %s6 = ssub.s32 1, %s4
  %s7 = scalar_select 0, %s6, %s4
  $region1: #{vision_transformer_forward.1} parent=0
    #allocation6 [shape = 'u8[1024]{0}', space=vmem, size = 0x400, scoped, tag = 'output window, operand 0, single buffered']
    #allocation7 [shape = 's32[1]{0}', space=sflag, size = 0x4, scoped, tag = 'scoped memory for vision_transformer_forward.1']
    %8 = vsyncpa [#allocation7], 0
    // Predicated region
    $region2: #{vision_transformer_forward.1} parent=1 // pred_check
      _
    $region3: #{vision_transformer_forward.1} parent=1 // pred_check_branch
      %10 = sbr.rel (0) target = $region5
    $region4: #{vision_transformer_forward.1} parent=1 // pred_region
      _
    $region5: #{vision_transformer_forward.1} parent=1 // pred_fallthru
      _
    // Predicated region
    $region6: #{vision_transformer_forward.1} parent=1 // pred_check
      _
    $region7: #{vision_transformer_forward.1} parent=1 // pred_check_branch
      %12 = sbr.rel (0) target = $region9
    $region8: #{vision_transformer_forward.1} parent=1 // pred_region
      _
    $region9: #{vision_transformer_forward.1} parent=1 // pred_fallthru
      _
    // Predicated region
    $region10: #{vision_transformer_forward.1} parent=1 // pred_check
      _
    $region11: #{vision_transformer_forward.1} parent=1 // pred_check_branch
      %14 = sbr.rel (0) target = $region13
    $region12: #{vision_transformer_forward.1} parent=1 // pred_region
      _
    $region13: #{vision_transformer_forward.1} parent=1 // pred_fallthru
      _
    %v16 = vld [vmem:[%s0] sm:$0xf]
    %v17 = vld [vmem:[%s0 + $0x4] sm:$0xf]
    %v18 = vld [vmem:[%s0 + $0x8] sm:$0xf]
    %v19 = vld [vmem:[%s0 + $0xc] sm:$0xf]
    %v20 = vld [vmem:[%s1] sm:$0xf]
    %v21 = vld [vmem:[%s1 + $0x4] sm:$0xf]
    %v22 = vld [vmem:[%s1 + $0x8] sm:$0xf]
    %v23 = vld [vmem:[%s1 + $0xc] sm:$0xf]
    %v24 = vld [vmem:[%s1 + $0x10] sm:$0xf]
    %v25 = vld [vmem:[%s1 + $0x14] sm:$0xf]
    %v26 = vld [vmem:[%s1 + $0x18] sm:$0xf]
    %v27 = vld [vmem:[%s1 + $0x1c] sm:$0xf]
    %v28 = vld [vmem:[%s2 + $0x40] sm:$0x1]
    %v29 = vlaneseq
    %v30 = vshrl.u32 %v29, 7
    %v31 = vsub.s32 0, %v30
    %v32 = vrot.slane %v28, %v31
    %v37 = vunpack.c.l.b16 %v16
    %v38 = vunpack.c.l.b16 %v17
    %v39 = vunpack.c.l.b16 %v18
    %v40 = vunpack.c.l.b16 %v19
    %v41 = vpack.c.b16 %v38, %v37
    %v42 = vpack.c.b16 %v40, %v39
    %v51 = vunpack.c.l.b16 %v20
    %v52 = vunpack.c.l.b16 %v21
    %v53 = vunpack.c.l.b16 %v22
    %v54 = vunpack.c.l.b16 %v23
    %v55 = vunpack.c.l.b16 %v24
    %v56 = vunpack.c.l.b16 %v25
    %v57 = vunpack.c.l.b16 %v26
    %v58 = vunpack.c.l.b16 %v27
    %v59 = vpack.c.b16 %v52, %v51
    %v60 = vpack.c.b16 %v54, %v53
    %v61 = vpack.c.b16 %v56, %v55
    %v62 = vpack.c.b16 %v58, %v57
    %vm67 = vcmask 523264
    %v69 = vsel %vm67, %v41, 0
    %v72 = vsel %vm67, %v42, 0
    %74 = vmatprep.subr.bf16.mxu0 0
    %75 = vmatpush1.bf16.msra.mxu0 0
    %76 = vmatprep.subr.bf16.mxu0 0
    %77 = vmatpush1.bf16.msra.mxu0 0
    %78 = vmatprep.subr.bf16.mxu0 0
    %79 = vmatpush1.bf16.msra.mxu0 0
    %80 = vmatprep.subr.bf16.mxu0 0
    %81 = vmatpush1.bf16.msra.mxu0 0
    %82 = vmatprep.subr.bf16.mxu0 0
    %83 = vmatpush1.bf16.msra.mxu0 %v62
    %84 = vmatprep.subr.bf16.mxu0 0
    %85 = vmatpush1.bf16.msra.mxu0 %v61
    %86 = vmatprep.subr.bf16.mxu0 0
    %87 = vmatpush1.bf16.msra.mxu0 %v60
    %88 = vmatprep.subr.bf16.mxu0 0
    %89 = vmatpush1.bf16.msra.mxu0 %v59
    %90 = vmatprep.subr.bf16.mxu0 0
    %91 = vmatpush2.bf16.msra.mxu0 0
    %92 = vmatprep.subr.bf16.mxu0 0
    %93 = vmatpush2.bf16.msra.mxu0 0
    %94 = vmatprep.subr.bf16.mxu0 0
    %95 = vmatpush2.bf16.msra.mxu0 0
    %96 = vmatprep.subr.bf16.mxu0 0
    %97 = vmatpush2.bf16.msra.mxu0 0
    %98 = vmatprep.subr.bf16.mxu0 0
    %99 = vmatpush2.bf16.msra.mxu0 0
    %100 = vmatprep.subr.bf16.mxu0 0
    %101 = vmatpush2.bf16.msra.mxu0 0
    %102 = vmatprep.subr.bf16.mxu0 0
    %103 = vmatpush2.bf16.msra.mxu0 0
    %104 = vmatprep.subr.bf16.mxu0 0
    %105 = vmatpush2.bf16.msra.mxu0 0
    %106 = vmatprep.mubr.bf16.mxu0 0
    %107 = vmatmul.mubr.bf16.gmra.mxu0 %v69
    %v108 = vpop.f32.mrf.mxu0
    %v109 = vadd.f32 %v32, %v108
    %v110 = vpop.f32.mrf.mxu0
    %v111 = vpop.f32.mrf.mxu0
    %v112 = vadd.f32 %v32, %v111
    %v113 = vpop.f32.mrf.mxu0
    %114 = vmatprep.mubr.bf16.mxu0 0
    %115 = vmatmul.mubr.bf16.gmra.mxu0 %v72
    %v116 = vpop.f32.mrf.mxu0
    %v117 = vadd.f32 %v32, %v116
    %v118 = vpop.f32.mrf.mxu0
    %v119 = vpop.f32.mrf.mxu0
    %v120 = vadd.f32 %v32, %v119
    %v121 = vpop.f32.mrf.mxu0
    %122 = vdwg.mxu0
    %v123 = vpack.c.bf16 %v112, %v109
    %v124 = vpack.c.bf16 %v120, %v117
    %v125 = vld [vmem:[%s1 + $0x20] sm:$0xf]
    %v126 = vld [vmem:[%s1 + $0x24] sm:$0xf]
    %v127 = vld [vmem:[%s1 + $0x28] sm:$0xf]
    %v128 = vld [vmem:[%s1 + $0x2c] sm:$0xf]
    %v129 = vld [vmem:[%s2 + $0x48] sm:$0x1]
    %v130 = vlaneseq
    %v131 = vshrl.u32 %v130, 7
    %v132 = vsub.s32 0, %v131
    %v133 = vrot.slane %v129, %v132
    %v138 = vunpack.c.l.b16 %v125
    %v139 = vunpack.c.l.b16 %v126
    %v140 = vunpack.c.l.b16 %v127
    %v141 = vunpack.c.l.b16 %v128
    %v142 = vpack.c.b16 %v139, %v138
    %v143 = vpack.c.b16 %v141, %v140
    %vm146 = vcmask 261120
    %v148 = vsel %vm146, %v123, 0
    %v151 = vsel %vm146, %v124, 0
    %153 = vmatprep.subr.bf16.mxu0 0
    %154 = vmatpush1.bf16.msra.mxu0 0
    %155 = vmatprep.subr.bf16.mxu0 0
    %156 = vmatpush1.bf16.msra.mxu0 0
    %157 = vmatprep.subr.bf16.mxu0 0
    %158 = vmatpush1.bf16.msra.mxu0 0
    %159 = vmatprep.subr.bf16.mxu0 0
    %160 = vmatpush1.bf16.msra.mxu0 0
    %161 = vmatprep.subr.bf16.mxu0 0
    %162 = vmatpush1.bf16.msra.mxu0 0
    %163 = vmatprep.subr.bf16.mxu0 0
    %164 = vmatpush1.bf16.msra.mxu0 0
    %165 = vmatprep.subr.bf16.mxu0 0
    %166 = vmatpush1.bf16.msra.mxu0 %v143
    %167 = vmatprep.subr.bf16.mxu0 0
    %168 = vmatpush1.bf16.msra.mxu0 %v142
    %169 = vmatprep.subr.bf16.mxu0 0
    %170 = vmatpush2.bf16.msra.mxu0 0
    %171 = vmatprep.subr.bf16.mxu0 0
    %172 = vmatpush2.bf16.msra.mxu0 0
    %173 = vmatprep.subr.bf16.mxu0 0
    %174 = vmatpush2.bf16.msra.mxu0 0
    %175 = vmatprep.subr.bf16.mxu0 0
    %176 = vmatpush2.bf16.msra.mxu0 0
    %177 = vmatprep.subr.bf16.mxu0 0
    %178 = vmatpush2.bf16.msra.mxu0 0
    %179 = vmatprep.subr.bf16.mxu0 0
    %180 = vmatpush2.bf16.msra.mxu0 0
    %181 = vmatprep.subr.bf16.mxu0 0
    %182 = vmatpush2.bf16.msra.mxu0 0
    %183 = vmatprep.subr.bf16.mxu0 0
    %184 = vmatpush2.bf16.msra.mxu0 0
    %185 = vmatprep.mubr.bf16.mxu0 0
    %186 = vmatmul.mubr.bf16.gmra.mxu0 %v148
    %v187 = vpop.f32.mrf.mxu0
    %v188 = vadd.f32 %v133, %v187
    %v189 = vpop.f32.mrf.mxu0
    %v190 = vpop.f32.mrf.mxu0
    %v191 = vadd.f32 %v133, %v190
    %v192 = vpop.f32.mrf.mxu0
    %193 = vmatprep.mubr.bf16.mxu0 0
    %194 = vmatmul.mubr.bf16.gmra.mxu0 %v151
    %v195 = vpop.f32.mrf.mxu0
    %v196 = vadd.f32 %v133, %v195
    %v197 = vpop.f32.mrf.mxu0
    %v198 = vpop.f32.mrf.mxu0
    %v199 = vadd.f32 %v133, %v198
    %v200 = vpop.f32.mrf.mxu0
    %201 = vdwg.mxu0
    %v202 = vpack.c.bf16 %v191, %v188
    %v203 = vpack.c.bf16 %v199, %v196
    %v206 = vunpack.c.l.b16 %v202
    %v207 = vunpack.c.h.b16 %v202
    %v208 = vunpack.c.l.b16 %v203
    %v209 = vunpack.c.h.b16 %v203
    %v210 = vpack.c.b16 %v206, %v206
    %v211 = vpack.c.b16 %v207, %v207
    %v212 = vpack.c.b16 %v208, %v208
    %v213 = vpack.c.b16 %v209, %v209
    %vm218 = vcmask 781312
    %219 = vst.msk [vmem:[#allocation2] sm:$0xf] %vm218, %v210
    %220 = vst.msk [vmem:[#allocation2 + $0x4] sm:$0xf] %vm218, %v211
    %221 = vst.msk [vmem:[#allocation2 + $0x8] sm:$0xf] %vm218, %v212
    %222 = vst.msk [vmem:[#allocation2 + $0xc] sm:$0xf] %vm218, %v213
    %v223 = vld [vmem:[#allocation2] sm:$0xf]
    %v224 = vld [vmem:[#allocation2 + $0x4] sm:$0xf]
    %v227 = vunpack.c.l.b16 %v223
    %v228 = vunpack.c.l.b16 %v224
    %v229 = vpack.c.b16 %v228, %v227
    %230 = vrot.lane.b32.xlu0 %v229, 96
    %v231 = vpop.permute.xlu0 %230
    %vm232 = vcmask 64512
    %v234 = vsel %vm232, %v229, 0
    %v237 = vsel %vm232, %v231, 0
    %239 = vmatprep.subr.bf16.mxu0 0
    %240 = vmatpush1.bf16.xpose.msra.mxu0 0
    %241 = vmatprep.subr.bf16.mxu0 0
    %242 = vmatpush1.bf16.xpose.msra.mxu0 0
    %243 = vmatprep.subr.bf16.mxu0 0
    %244 = vmatpush1.bf16.xpose.msra.mxu0 0
    %245 = vmatprep.subr.bf16.mxu0 0
    %246 = vmatpush1.bf16.xpose.msra.mxu0 0
    %247 = vmatprep.subr.bf16.mxu0 0
    %248 = vmatpush1.bf16.xpose.msra.mxu0 0
    %249 = vmatprep.subr.bf16.mxu0 0
    %250 = vmatpush1.bf16.xpose.msra.mxu0 0
    %251 = vmatprep.subr.bf16.mxu0 0
    %252 = vmatpush1.bf16.xpose.msra.mxu0 0
    %253 = vmatprep.subr.bf16.mxu0 0
    %254 = vmatpush1.bf16.xpose.msra.mxu0 %v237
    %255 = vmatprep.subr.bf16.mxu0 0
    %256 = vmatpush2.bf16.xpose.msra.mxu0 0
    %257 = vmatprep.subr.bf16.mxu0 0
    %258 = vmatpush2.bf16.xpose.msra.mxu0 0
    %259 = vmatprep.subr.bf16.mxu0 0
    %260 = vmatpush2.bf16.xpose.msra.mxu0 0
    %261 = vmatprep.subr.bf16.mxu0 0
    %262 = vmatpush2.bf16.xpose.msra.mxu0 0
    %263 = vmatprep.subr.bf16.mxu0 0
    %264 = vmatpush2.bf16.xpose.msra.mxu0 0
    %265 = vmatprep.subr.bf16.mxu0 0
    %266 = vmatpush2.bf16.xpose.msra.mxu0 0
    %267 = vmatprep.subr.bf16.mxu0 0
    %268 = vmatpush2.bf16.xpose.msra.mxu0 0
    %269 = vmatprep.subr.bf16.mxu0 0
    %270 = vmatpush2.bf16.xpose.msra.mxu0 0
    %271 = vmatprep.mubr.bf16.mxu0 0
    %272 = vmatmul.mubr.bf16.gmra.mxu0 %v234
    %v273 = vpop.f32.mrf.mxu0
    %v274 = vadd.f32 0.0, %v273
    %v275 = vpop.f32.mrf.mxu0
    %v276 = vpop.f32.mrf.mxu0
    %v277 = vadd.f32 0.0, %v276
    %v278 = vpop.f32.mrf.mxu0
    %279 = vdwg.mxu0
    %vm280 = vcmask 130048
    %281 = vst.msk [vmem:[#allocation3] sm:$0xff] %vm280, %v274
    %282 = vst.msk [vmem:[#allocation3 + $0x8] sm:$0xff] %vm280, %v277
    %v283 = vld [vmem:[#allocation2] sm:$0xf]
    %v284 = vld [vmem:[#allocation2 + $0x4] sm:$0xf]
    %v287 = vunpack.c.l.b16 %v283
    %v288 = vunpack.c.l.b16 %v284
    %v289 = vpack.c.b16 %v288, %v287
    %290 = vrot.lane.b32.xlu0 %v289, 120
    %v291 = vpop.permute.xlu0 %290
    %292 = vrot.lane.b32.xlu0 %v289, 88
    %v293 = vpop.permute.xlu0 %292
    %v295 = vsel %vm232, %v291, 0
    %v298 = vsel %vm232, %v293, 0
    %300 = vmatprep.subr.bf16.mxu0 0
    %301 = vmatpush1.bf16.xpose.msra.mxu0 0
    %302 = vmatprep.subr.bf16.mxu0 0
    %303 = vmatpush1.bf16.xpose.msra.mxu0 0
    %304 = vmatprep.subr.bf16.mxu0 0
    %305 = vmatpush1.bf16.xpose.msra.mxu0 0
    %306 = vmatprep.subr.bf16.mxu0 0
    %307 = vmatpush1.bf16.xpose.msra.mxu0 0
    %308 = vmatprep.subr.bf16.mxu0 0
    %309 = vmatpush1.bf16.xpose.msra.mxu0 0
    %310 = vmatprep.subr.bf16.mxu0 0
    %311 = vmatpush1.bf16.xpose.msra.mxu0 0
    %312 = vmatprep.subr.bf16.mxu0 0
    %313 = vmatpush1.bf16.xpose.msra.mxu0 0
    %314 = vmatprep.subr.bf16.mxu0 0
    %315 = vmatpush1.bf16.xpose.msra.mxu0 %v298
    %316 = vmatprep.subr.bf16.mxu0 0
    %317 = vmatpush2.bf16.xpose.msra.mxu0 0
    %318 = vmatprep.subr.bf16.mxu0 0
    %319 = vmatpush2.bf16.xpose.msra.mxu0 0
    %320 = vmatprep.subr.bf16.mxu0 0
    %321 = vmatpush2.bf16.xpose.msra.mxu0 0
    %322 = vmatprep.subr.bf16.mxu0 0
    %323 = vmatpush2.bf16.xpose.msra.mxu0 0
    %324 = vmatprep.subr.bf16.mxu0 0
    %325 = vmatpush2.bf16.xpose.msra.mxu0 0
    %326 = vmatprep.subr.bf16.mxu0 0
    %327 = vmatpush2.bf16.xpose.msra.mxu0 0
    %328 = vmatprep.subr.bf16.mxu0 0
    %329 = vmatpush2.bf16.xpose.msra.mxu0 0
    %330 = vmatprep.subr.bf16.mxu0 0
    %331 = vmatpush2.bf16.xpose.msra.mxu0 0
    %332 = vmatprep.mubr.bf16.mxu0 0
    %333 = vmatmul.mubr.bf16.gmra.mxu0 %v295
    %v334 = vpop.f32.mrf.mxu0
    %v335 = vadd.f32 0.0, %v334
    %v336 = vpop.f32.mrf.mxu0
    %v337 = vpop.f32.mrf.mxu0
    %v338 = vadd.f32 0.0, %v337
    %v339 = vpop.f32.mrf.mxu0
    %340 = vdwg.mxu0
    %341 = vst.msk [vmem:[#allocation3 + $0x10] sm:$0xff] %vm280, %v335
    %342 = vst.msk [vmem:[#allocation3 + $0x18] sm:$0xff] %vm280, %v338
    %v343 = vld [vmem:[#allocation2] sm:$0xf]
    %v344 = vld [vmem:[#allocation2 + $0x4] sm:$0xf]
    %v347 = vunpack.c.l.b16 %v343
    %v348 = vunpack.c.l.b16 %v344
    %v349 = vpack.c.b16 %v348, %v347
    %350 = vrot.lane.b32.xlu0 %v349, 112
    %v351 = vpop.permute.xlu0 %350
    %352 = vrot.lane.b32.xlu0 %v349, 80
    %v353 = vpop.permute.xlu0 %352
    %v355 = vsel %vm232, %v351, 0
    %v358 = vsel %vm232, %v353, 0
    %360 = vmatprep.subr.bf16.mxu0 0
    %361 = vmatpush1.bf16.xpose.msra.mxu0 0
    %362 = vmatprep.subr.bf16.mxu0 0
    %363 = vmatpush1.bf16.xpose.msra.mxu0 0
    %364 = vmatprep.subr.bf16.mxu0 0
    %365 = vmatpush1.bf16.xpose.msra.mxu0 0
    %366 = vmatprep.subr.bf16.mxu0 0
    %367 = vmatpush1.bf16.xpose.msra.mxu0 0
    %368 = vmatprep.subr.bf16.mxu0 0
    %369 = vmatpush1.bf16.xpose.msra.mxu0 0
    %370 = vmatprep.subr.bf16.mxu0 0
    %371 = vmatpush1.bf16.xpose.msra.mxu0 0
    %372 = vmatprep.subr.bf16.mxu0 0
    %373 = vmatpush1.bf16.xpose.msra.mxu0 0
    %374 = vmatprep.subr.bf16.mxu0 0
    %375 = vmatpush1.bf16.xpose.msra.mxu0 %v358
    %376 = vmatprep.subr.bf16.mxu0 0
    %377 = vmatpush2.bf16.xpose.msra.mxu0 0
    %378 = vmatprep.subr.bf16.mxu0 0
    %379 = vmatpush2.bf16.xpose.msra.mxu0 0
    %380 = vmatprep.subr.bf16.mxu0 0
    %381 = vmatpush2.bf16.xpose.msra.mxu0 0
    %382 = vmatprep.subr.bf16.mxu0 0
    %383 = vmatpush2.bf16.xpose.msra.mxu0 0
    %384 = vmatprep.subr.bf16.mxu0 0
    %385 = vmatpush2.bf16.xpose.msra.mxu0 0
    %386 = vmatprep.subr.bf16.mxu0 0
    %387 = vmatpush2.bf16.xpose.msra.mxu0 0
    %388 = vmatprep.subr.bf16.mxu0 0
    %389 = vmatpush2.bf16.xpose.msra.mxu0 0
    %390 = vmatprep.subr.bf16.mxu0 0
    %391 = vmatpush2.bf16.xpose.msra.mxu0 0
    %392 = vmatprep.mubr.bf16.mxu0 0
    %393 = vmatmul.mubr.bf16.gmra.mxu0 %v355
    %v394 = vpop.f32.mrf.mxu0
    %v395 = vadd.f32 0.0, %v394
    %v396 = vpop.f32.mrf.mxu0
    %v397 = vpop.f32.mrf.mxu0
    %v398 = vadd.f32 0.0, %v397
    %v399 = vpop.f32.mrf.mxu0
    %400 = vdwg.mxu0
    %401 = vst.msk [vmem:[#allocation3 + $0x20] sm:$0xff] %vm280, %v395
    %402 = vst.msk [vmem:[#allocation3 + $0x28] sm:$0xff] %vm280, %v398
    %v403 = vld [vmem:[#allocation2] sm:$0xf]
    %v404 = vld [vmem:[#allocation2 + $0x4] sm:$0xf]
    %v407 = vunpack.c.l.b16 %v403
    %v408 = vunpack.c.l.b16 %v404
    %v409 = vpack.c.b16 %v408, %v407
    %410 = vrot.lane.b32.xlu0 %v409, 104
    %v411 = vpop.permute.xlu0 %410
    %412 = vrot.lane.b32.xlu0 %v409, 72
    %v413 = vpop.permute.xlu0 %412
    %v415 = vsel %vm232, %v411, 0
    %v418 = vsel %vm232, %v413, 0
    %420 = vmatprep.subr.bf16.mxu0 0
    %421 = vmatpush1.bf16.xpose.msra.mxu0 0
    %422 = vmatprep.subr.bf16.mxu0 0
    %423 = vmatpush1.bf16.xpose.msra.mxu0 0
    %424 = vmatprep.subr.bf16.mxu0 0
    %425 = vmatpush1.bf16.xpose.msra.mxu0 0
    %426 = vmatprep.subr.bf16.mxu0 0
    %427 = vmatpush1.bf16.xpose.msra.mxu0 0
    %428 = vmatprep.subr.bf16.mxu0 0
    %429 = vmatpush1.bf16.xpose.msra.mxu0 0
    %430 = vmatprep.subr.bf16.mxu0 0
    %431 = vmatpush1.bf16.xpose.msra.mxu0 0
    %432 = vmatprep.subr.bf16.mxu0 0
    %433 = vmatpush1.bf16.xpose.msra.mxu0 0
    %434 = vmatprep.subr.bf16.mxu0 0
    %435 = vmatpush1.bf16.xpose.msra.mxu0 %v418
    %436 = vmatprep.subr.bf16.mxu0 0
    %437 = vmatpush2.bf16.xpose.msra.mxu0 0
    %438 = vmatprep.subr.bf16.mxu0 0
    %439 = vmatpush2.bf16.xpose.msra.mxu0 0
    %440 = vmatprep.subr.bf16.mxu0 0
    %441 = vmatpush2.bf16.xpose.msra.mxu0 0
    %442 = vmatprep.subr.bf16.mxu0 0
    %443 = vmatpush2.bf16.xpose.msra.mxu0 0
    %444 = vmatprep.subr.bf16.mxu0 0
    %445 = vmatpush2.bf16.xpose.msra.mxu0 0
    %446 = vmatprep.subr.bf16.mxu0 0
    %447 = vmatpush2.bf16.xpose.msra.mxu0 0
    %448 = vmatprep.subr.bf16.mxu0 0
    %449 = vmatpush2.bf16.xpose.msra.mxu0 0
    %450 = vmatprep.subr.bf16.mxu0 0
    %451 = vmatpush2.bf16.xpose.msra.mxu0 0
    %452 = vmatprep.mubr.bf16.mxu0 0
    %453 = vmatmul.mubr.bf16.gmra.mxu0 %v415
    %v454 = vpop.f32.mrf.mxu0
    %v455 = vadd.f32 0.0, %v454
    %v456 = vpop.f32.mrf.mxu0
    %v457 = vpop.f32.mrf.mxu0
    %v458 = vadd.f32 0.0, %v457
    %v459 = vpop.f32.mrf.mxu0
    %460 = vdwg.mxu0
    %461 = vst.msk [vmem:[#allocation3 + $0x30] sm:$0xff] %vm280, %v455
    %462 = vst.msk [vmem:[#allocation3 + $0x38] sm:$0xff] %vm280, %v458
    %v463 = vld [vmem:[#allocation3] sm:$0xff]
    %v464 = vld [vmem:[#allocation3 + $0x8] sm:$0xff]
    %v465 = vld [vmem:[#allocation3 + $0x10] sm:$0xff]
    %v466 = vld [vmem:[#allocation3 + $0x18] sm:$0xff]
    %v467 = vld [vmem:[#allocation3 + $0x20] sm:$0xff]
    %v468 = vld [vmem:[#allocation3 + $0x28] sm:$0xff]
    %v469 = vld [vmem:[#allocation3 + $0x30] sm:$0xff]
    %v470 = vld [vmem:[#allocation3 + $0x38] sm:$0xff]
    %v471 = vmul.f32 %v463, 0.35355338
    %v472 = vmul.f32 %v464, 0.35355338
    %v473 = vmul.f32 %v465, 0.35355338
    %v474 = vmul.f32 %v466, 0.35355338
    %v475 = vmul.f32 %v467, 0.35355338
    %v476 = vmul.f32 %v468, 0.35355338
    %v477 = vmul.f32 %v469, 0.35355338
    %v478 = vmul.f32 %v470, 0.35355338
    %v479 = vld [vmem:[%s2] sm:$0xff]
    %v480 = vld [vmem:[%s2 + $0x8] sm:$0xff]
    %v481 = vld [vmem:[%s2 + $0x10] sm:$0xff]
    %v482 = vld [vmem:[%s2 + $0x18] sm:$0xff]
    %v483 = vld [vmem:[%s2 + $0x20] sm:$0xff]
    %v484 = vld [vmem:[%s2 + $0x28] sm:$0xff]
    %v485 = vld [vmem:[%s2 + $0x30] sm:$0xff]
    %v486 = vld [vmem:[%s2 + $0x38] sm:$0xff]
    %v487 = vadd.f32 %v471, %v479
    %v488 = vadd.f32 %v472, %v480
    %v489 = vadd.f32 %v473, %v481
    %v490 = vadd.f32 %v474, %v482
    %v491 = vadd.f32 %v475, %v483
    %v492 = vadd.f32 %v476, %v484
    %v493 = vadd.f32 %v477, %v485
    %v494 = vadd.f32 %v478, %v486
    %v495 = vsel %vm280, %v487, -inf
    %496 = vmax.xlane.f32.xlu0 %v495
    %v497 = vpop.xlane.xlu0 %496
    %v498 = vsel %vm280, %v488, -inf
    %499 = vmax.xlane.f32.xlu0 %v498
    %v500 = vpop.xlane.xlu0 %499
    %v501 = vsel %vm280, %v489, -inf
    %502 = vmax.xlane.f32.xlu0 %v501
    %v503 = vpop.xlane.xlu0 %502
    %v504 = vsel %vm280, %v490, -inf
    %505 = vmax.xlane.f32.xlu0 %v504
    %v506 = vpop.xlane.xlu0 %505
    %v507 = vsel %vm280, %v491, -inf
    %508 = vmax.xlane.f32.xlu0 %v507
    %v509 = vpop.xlane.xlu0 %508
    %v510 = vsel %vm280, %v492, -inf
    %511 = vmax.xlane.f32.xlu0 %v510
    %v512 = vpop.xlane.xlu0 %511
    %v513 = vsel %vm280, %v493, -inf
    %514 = vmax.xlane.f32.xlu0 %v513
    %v515 = vpop.xlane.xlu0 %514
    %v516 = vsel %vm280, %v494, -inf
    %517 = vmax.xlane.f32.xlu0 %v516
    %v518 = vpop.xlane.xlu0 %517
    %v519 = vsub.f32 %v487, %v497
    %v520 = vsub.f32 %v488, %v500
    %v521 = vsub.f32 %v489, %v503
    %v522 = vsub.f32 %v490, %v506
    %v523 = vsub.f32 %v491, %v509
    %v524 = vsub.f32 %v492, %v512
    %v525 = vsub.f32 %v493, %v515
    %v526 = vsub.f32 %v494, %v518
    %v527 = vmul.f32 %v519, 1.442695
    %v528 = vpow.pop %v527
    %v529 = vmul.f32 %v520, 1.442695
    %v530 = vpow.pop %v529
    %v531 = vmul.f32 %v521, 1.442695
    %v532 = vpow.pop %v531
    %v533 = vmul.f32 %v522, 1.442695
    %v534 = vpow.pop %v533
    %v535 = vmul.f32 %v523, 1.442695
    %v536 = vpow.pop %v535
    %v537 = vmul.f32 %v524, 1.442695
    %v538 = vpow.pop %v537
    %v539 = vmul.f32 %v525, 1.442695
    %v540 = vpow.pop %v539
    %v541 = vmul.f32 %v526, 1.442695
    %v542 = vpow.pop %v541
    %v543 = vsel %vm280, %v528, 0.0
    %544 = vadd.xlane.f32.xlu0 %v543
    %v545 = vpop.xlane.xlu0 %544
    %v546 = vsel %vm280, %v530, 0.0
    %547 = vadd.xlane.f32.xlu0 %v546
    %v548 = vpop.xlane.xlu0 %547
    %v549 = vsel %vm280, %v532, 0.0
    %550 = vadd.xlane.f32.xlu0 %v549
    %v551 = vpop.xlane.xlu0 %550
    %v552 = vsel %vm280, %v534, 0.0
    %553 = vadd.xlane.f32.xlu0 %v552
    %v554 = vpop.xlane.xlu0 %553
    %v555 = vsel %vm280, %v536, 0.0
    %556 = vadd.xlane.f32.xlu0 %v555
    %v557 = vpop.xlane.xlu0 %556
    %v558 = vsel %vm280, %v538, 0.0
    %559 = vadd.xlane.f32.xlu0 %v558
    %v560 = vpop.xlane.xlu0 %559
    %v561 = vsel %vm280, %v540, 0.0
    %562 = vadd.xlane.f32.xlu0 %v561
    %v563 = vpop.xlane.xlu0 %562
    %v564 = vsel %vm280, %v542, 0.0
    %565 = vadd.xlane.f32.xlu0 %v564
    %v566 = vpop.xlane.xlu0 %565
    %v567 = vrcp.pop %v545
    %v568 = vrcp.pop %v548
    %v569 = vrcp.pop %v551
    %v570 = vrcp.pop %v554
    %v571 = vrcp.pop %v557
    %v572 = vrcp.pop %v560
    %v573 = vrcp.pop %v563
    %v574 = vrcp.pop %v566
    %v575 = vmul.f32 %v528, %v567
    %v576 = vmul.f32 %v530, %v568
    %v577 = vmul.f32 %v532, %v569
    %v578 = vmul.f32 %v534, %v570
    %v579 = vmul.f32 %v536, %v571
    %v580 = vmul.f32 %v538, %v572
    %v581 = vmul.f32 %v540, %v573
    %v582 = vmul.f32 %v542, %v574
    %v583 = vpack.c.bf16 %v576, %v575
    %v584 = vpack.c.bf16 %v578, %v577
    %v585 = vpack.c.bf16 %v580, %v579
    %v586 = vpack.c.bf16 %v582, %v581
    %v591 = vunpack.c.l.b16 %v583
    %v592 = vunpack.c.h.b16 %v583
    %v593 = vunpack.c.l.b16 %v584
    %v594 = vunpack.c.h.b16 %v584
    %v595 = vunpack.c.l.b16 %v585
    %v596 = vunpack.c.h.b16 %v585
    %v597 = vunpack.c.l.b16 %v586
    %v598 = vunpack.c.h.b16 %v586
    %v599 = vpack.c.b16 %v591, %v591
    %v600 = vpack.c.b16 %v592, %v592
    %v601 = vpack.c.b16 %v593, %v593
    %v602 = vpack.c.b16 %v594, %v594
    %v603 = vpack.c.b16 %v595, %v595
    %v604 = vpack.c.b16 %v596, %v596
    %v605 = vpack.c.b16 %v597, %v597
    %v606 = vpack.c.b16 %v598, %v598
    %vm615 = vcmask 125952
    %616 = vst.msk [vmem:[#allocation4] sm:$0xf] %vm615, %v599
    %617 = vst.msk [vmem:[#allocation4 + $0x4] sm:$0xf] %vm615, %v600
    %618 = vst.msk [vmem:[#allocation4 + $0x8] sm:$0xf] %vm615, %v601
    %619 = vst.msk [vmem:[#allocation4 + $0xc] sm:$0xf] %vm615, %v602
    %620 = vst.msk [vmem:[#allocation4 + $0x10] sm:$0xf] %vm615, %v603
    %621 = vst.msk [vmem:[#allocation4 + $0x14] sm:$0xf] %vm615, %v604
    %622 = vst.msk [vmem:[#allocation4 + $0x18] sm:$0xf] %vm615, %v605
    %623 = vst.msk [vmem:[#allocation4 + $0x1c] sm:$0xf] %vm615, %v606
    %v624 = vld [vmem:[#allocation2] sm:$0xf]
    %v625 = vld [vmem:[#allocation2 + $0x4] sm:$0xf]
    %v626 = vld [vmem:[#allocation4] sm:$0xf]
    %v627 = vld [vmem:[#allocation4 + $0x4] sm:$0xf]
    %v630 = vunpack.c.l.b16 %v626
    %v631 = vunpack.c.l.b16 %v627
    %v632 = vpack.c.b16 %v631, %v630
    %v635 = vunpack.c.l.b16 %v624
    %v636 = vunpack.c.l.b16 %v625
    %v637 = vpack.c.b16 %v636, %v635
    %638 = vrot.lane.b32.xlu0 %v637, 64
    %v639 = vpop.permute.xlu0 %638
    %v642 = vsel %vm280, %v632, 0
    %644 = vmatprep.subr.bf16.mxu0 0
    %645 = vmatpush1.bf16.msra.mxu0 0
    %646 = vmatprep.subr.bf16.mxu0 0
    %647 = vmatpush1.bf16.msra.mxu0 0
    %648 = vmatprep.subr.bf16.mxu0 0
    %649 = vmatpush1.bf16.msra.mxu0 0
    %650 = vmatprep.subr.bf16.mxu0 0
    %651 = vmatpush1.bf16.msra.mxu0 0
    %652 = vmatprep.subr.bf16.mxu0 0
    %653 = vmatpush1.bf16.msra.mxu0 0
    %654 = vmatprep.subr.bf16.mxu0 0
    %655 = vmatpush1.bf16.msra.mxu0 0
    %656 = vmatprep.subr.bf16.mxu0 0
    %657 = vmatpush1.bf16.msra.mxu0 0
    %658 = vmatprep.subr.bf16.mxu0 0
    %659 = vmatpush1.bf16.msra.mxu0 %v639
    %660 = vmatprep.subr.bf16.mxu0 0
    %661 = vmatpush2.bf16.msra.mxu0 0
    %662 = vmatprep.subr.bf16.mxu0 0
    %663 = vmatpush2.bf16.msra.mxu0 0
    %664 = vmatprep.subr.bf16.mxu0 0
    %665 = vmatpush2.bf16.msra.mxu0 0
    %666 = vmatprep.subr.bf16.mxu0 0
    %667 = vmatpush2.bf16.msra.mxu0 0
    %668 = vmatprep.subr.bf16.mxu0 0
    %669 = vmatpush2.bf16.msra.mxu0 0
    %670 = vmatprep.subr.bf16.mxu0 0
    %671 = vmatpush2.bf16.msra.mxu0 0
    %672 = vmatprep.subr.bf16.mxu0 0
    %673 = vmatpush2.bf16.msra.mxu0 0
    %674 = vmatprep.subr.bf16.mxu0 0
    %675 = vmatpush2.bf16.msra.mxu0 0
    %676 = vmatprep.mubr.bf16.mxu0 0
    %677 = vmatmul.mubr.bf16.gmra.mxu0 %v642
    %v678 = vpop.f32.mrf.mxu0
    %v679 = vadd.f32 0.0, %v678
    %v680 = vpop.f32.mrf.mxu0
    %v681 = vpop.f32.mrf.mxu0
    %v682 = vadd.f32 0.0, %v681
    %v683 = vpop.f32.mrf.mxu0
    %684 = vdwg.mxu0
    %v685 = vpack.c.bf16 %v682, %v679
    %v687 = vunpack.c.l.b16 %v685
    %v688 = vunpack.c.h.b16 %v685
    %v689 = vpack.c.b16 %v687, %v687
    %v690 = vpack.c.b16 %v688, %v688
    %vm693 = vcmask 60416
    %694 = vst.msk [vmem:[#allocation5] sm:$0xf] %vm693, %v689
    %695 = vst.msk [vmem:[#allocation5 + $0x4] sm:$0xf] %vm693, %v690
    %v696 = vld [vmem:[#allocation2] sm:$0xf]
    %v697 = vld [vmem:[#allocation2 + $0x4] sm:$0xf]
    %v698 = vld [vmem:[#allocation4 + $0x8] sm:$0xf]
    %v699 = vld [vmem:[#allocation4 + $0xc] sm:$0xf]
    %v702 = vunpack.c.l.b16 %v698
    %v703 = vunpack.c.l.b16 %v699
    %v704 = vpack.c.b16 %v703, %v702
    %v707 = vunpack.c.l.b16 %v696
    %v708 = vunpack.c.l.b16 %v697
    %v709 = vpack.c.b16 %v708, %v707
    %710 = vrot.lane.b32.xlu0 %v709, 56
    %v711 = vpop.permute.xlu0 %710
    %v714 = vsel %vm280, %v704, 0
    %716 = vmatprep.subr.bf16.mxu0 0
    %717 = vmatpush1.bf16.msra.mxu0 0
    %718 = vmatprep.subr.bf16.mxu0 0
    %719 = vmatpush1.bf16.msra.mxu0 0
    %720 = vmatprep.subr.bf16.mxu0 0
    %721 = vmatpush1.bf16.msra.mxu0 0
    %722 = vmatprep.subr.bf16.mxu0 0
    %723 = vmatpush1.bf16.msra.mxu0 0
    %724 = vmatprep.subr.bf16.mxu0 0
    %725 = vmatpush1.bf16.msra.mxu0 0
    %726 = vmatprep.subr.bf16.mxu0 0
    %727 = vmatpush1.bf16.msra.mxu0 0
    %728 = vmatprep.subr.bf16.mxu0 0
    %729 = vmatpush1.bf16.msra.mxu0 0
    %730 = vmatprep.subr.bf16.mxu0 0
    %731 = vmatpush1.bf16.msra.mxu0 %v711
    %732 = vmatprep.subr.bf16.mxu0 0
    %733 = vmatpush2.bf16.msra.mxu0 0
    %734 = vmatprep.subr.bf16.mxu0 0
    %735 = vmatpush2.bf16.msra.mxu0 0
    %736 = vmatprep.subr.bf16.mxu0 0
    %737 = vmatpush2.bf16.msra.mxu0 0
    %738 = vmatprep.subr.bf16.mxu0 0
    %739 = vmatpush2.bf16.msra.mxu0 0
    %740 = vmatprep.subr.bf16.mxu0 0
    %741 = vmatpush2.bf16.msra.mxu0 0
    %742 = vmatprep.subr.bf16.mxu0 0
    %743 = vmatpush2.bf16.msra.mxu0 0
    %744 = vmatprep.subr.bf16.mxu0 0
    %745 = vmatpush2.bf16.msra.mxu0 0
    %746 = vmatprep.subr.bf16.mxu0 0
    %747 = vmatpush2.bf16.msra.mxu0 0
    %748 = vmatprep.mubr.bf16.mxu0 0
    %749 = vmatmul.mubr.bf16.gmra.mxu0 %v714
    %v750 = vpop.f32.mrf.mxu0
    %v751 = vadd.f32 0.0, %v750
    %v752 = vpop.f32.mrf.mxu0
    %v753 = vpop.f32.mrf.mxu0
    %v754 = vadd.f32 0.0, %v753
    %v755 = vpop.f32.mrf.mxu0
    %756 = vdwg.mxu0
    %v757 = vpack.c.bf16 %v754, %v751
    %v759 = vunpack.c.l.b16 %v757
    %v760 = vunpack.c.h.b16 %v757
    %v761 = vpack.c.b16 %v759, %v759
    %v762 = vpack.c.b16 %v760, %v760
    %763 = vrot.lane.b32.xlu0 %v761, 8
    %v764 = vpop.permute.xlu0 %763
    %765 = vrot.lane.b32.xlu0 %v762, 8
    %v766 = vpop.permute.xlu0 %765
    %vm769 = vcmask 126016
    %770 = vst.msk [vmem:[#allocation5] sm:$0xf] %vm769, %v764
    %771 = vst.msk [vmem:[#allocation5 + $0x4] sm:$0xf] %vm769, %v766
    %v772 = vld [vmem:[#allocation2] sm:$0xf]
    %v773 = vld [vmem:[#allocation2 + $0x4] sm:$0xf]
    %v774 = vld [vmem:[#allocation4 + $0x10] sm:$0xf]
    %v775 = vld [vmem:[#allocation4 + $0x14] sm:$0xf]
    %v778 = vunpack.c.l.b16 %v774
    %v779 = vunpack.c.l.b16 %v775
    %v780 = vpack.c.b16 %v779, %v778
    %v783 = vunpack.c.l.b16 %v772
    %v784 = vunpack.c.l.b16 %v773
    %v785 = vpack.c.b16 %v784, %v783
    %786 = vrot.lane.b32.xlu0 %v785, 48
    %v787 = vpop.permute.xlu0 %786
    %v790 = vsel %vm280, %v780, 0
    %792 = vmatprep.subr.bf16.mxu0 0
    %793 = vmatpush1.bf16.msra.mxu0 0
    %794 = vmatprep.subr.bf16.mxu0 0
    %795 = vmatpush1.bf16.msra.mxu0 0
    %796 = vmatprep.subr.bf16.mxu0 0
    %797 = vmatpush1.bf16.msra.mxu0 0
    %798 = vmatprep.subr.bf16.mxu0 0
    %799 = vmatpush1.bf16.msra.mxu0 0
    %800 = vmatprep.subr.bf16.mxu0 0
    %801 = vmatpush1.bf16.msra.mxu0 0
    %802 = vmatprep.subr.bf16.mxu0 0
    %803 = vmatpush1.bf16.msra.mxu0 0
    %804 = vmatprep.subr.bf16.mxu0 0
    %805 = vmatpush1.bf16.msra.mxu0 0
    %806 = vmatprep.subr.bf16.mxu0 0
    %807 = vmatpush1.bf16.msra.mxu0 %v787
    %808 = vmatprep.subr.bf16.mxu0 0
    %809 = vmatpush2.bf16.msra.mxu0 0
    %810 = vmatprep.subr.bf16.mxu0 0
    %811 = vmatpush2.bf16.msra.mxu0 0
    %812 = vmatprep.subr.bf16.mxu0 0
    %813 = vmatpush2.bf16.msra.mxu0 0
    %814 = vmatprep.subr.bf16.mxu0 0
    %815 = vmatpush2.bf16.msra.mxu0 0
    %816 = vmatprep.subr.bf16.mxu0 0
    %817 = vmatpush2.bf16.msra.mxu0 0
    %818 = vmatprep.subr.bf16.mxu0 0
    %819 = vmatpush2.bf16.msra.mxu0 0
    %820 = vmatprep.subr.bf16.mxu0 0
    %821 = vmatpush2.bf16.msra.mxu0 0
    %822 = vmatprep.subr.bf16.mxu0 0
    %823 = vmatpush2.bf16.msra.mxu0 0
    %824 = vmatprep.mubr.bf16.mxu0 0
    %825 = vmatmul.mubr.bf16.gmra.mxu0 %v790
    %v826 = vpop.f32.mrf.mxu0
    %v827 = vadd.f32 0.0, %v826
    %v828 = vpop.f32.mrf.mxu0
    %v829 = vpop.f32.mrf.mxu0
    %v830 = vadd.f32 0.0, %v829
    %v831 = vpop.f32.mrf.mxu0
    %832 = vdwg.mxu0
    %v833 = vpack.c.bf16 %v830, %v827
    %v835 = vunpack.c.l.b16 %v833
    %v836 = vunpack.c.h.b16 %v833
    %v837 = vpack.c.b16 %v835, %v835
    %v838 = vpack.c.b16 %v836, %v836
    %839 = vrot.lane.b32.xlu0 %v837, 16
    %v840 = vpop.permute.xlu0 %839
    %841 = vrot.lane.b32.xlu0 %v838, 16
    %v842 = vpop.permute.xlu0 %841
    %vm845 = vcmask 191616
    %846 = vst.msk [vmem:[#allocation5] sm:$0xf] %vm845, %v840
    %847 = vst.msk [vmem:[#allocation5 + $0x4] sm:$0xf] %vm845, %v842
    %v848 = vld [vmem:[#allocation2] sm:$0xf]
    %v849 = vld [vmem:[#allocation2 + $0x4] sm:$0xf]
    %v850 = vld [vmem:[#allocation4 + $0x18] sm:$0xf]
    %v851 = vld [vmem:[#allocation4 + $0x1c] sm:$0xf]
    %v854 = vunpack.c.l.b16 %v850
    %v855 = vunpack.c.l.b16 %v851
    %v856 = vpack.c.b16 %v855, %v854
    %v859 = vunpack.c.l.b16 %v848
    %v860 = vunpack.c.l.b16 %v849
    %v861 = vpack.c.b16 %v860, %v859
    %862 = vrot.lane.b32.xlu0 %v861, 40
    %v863 = vpop.permute.xlu0 %862
    %v866 = vsel %vm280, %v856, 0
    %868 = vmatprep.subr.bf16.mxu0 0
    %869 = vmatpush1.bf16.msra.mxu0 0
    %870 = vmatprep.subr.bf16.mxu0 0
    %871 = vmatpush1.bf16.msra.mxu0 0
    %872 = vmatprep.subr.bf16.mxu0 0
    %873 = vmatpush1.bf16.msra.mxu0 0
    %874 = vmatprep.subr.bf16.mxu0 0
    %875 = vmatpush1.bf16.msra.mxu0 0
    %876 = vmatprep.subr.bf16.mxu0 0
    %877 = vmatpush1.bf16.msra.mxu0 0
    %878 = vmatprep.subr.bf16.mxu0 0
    %879 = vmatpush1.bf16.msra.mxu0 0
    %880 = vmatprep.subr.bf16.mxu0 0
    %881 = vmatpush1.bf16.msra.mxu0 0
    %882 = vmatprep.subr.bf16.mxu0 0
    %883 = vmatpush1.bf16.msra.mxu0 %v863
    %884 = vmatprep.subr.bf16.mxu0 0
    %885 = vmatpush2.bf16.msra.mxu0 0
    %886 = vmatprep.subr.bf16.mxu0 0
    %887 = vmatpush2.bf16.msra.mxu0 0
    %888 = vmatprep.subr.bf16.mxu0 0
    %889 = vmatpush2.bf16.msra.mxu0 0
    %890 = vmatprep.subr.bf16.mxu0 0
    %891 = vmatpush2.bf16.msra.mxu0 0
    %892 = vmatprep.subr.bf16.mxu0 0
    %893 = vmatpush2.bf16.msra.mxu0 0
    %894 = vmatprep.subr.bf16.mxu0 0
    %895 = vmatpush2.bf16.msra.mxu0 0
    %896 = vmatprep.subr.bf16.mxu0 0
    %897 = vmatpush2.bf16.msra.mxu0 0
    %898 = vmatprep.subr.bf16.mxu0 0
    %899 = vmatpush2.bf16.msra.mxu0 0
    %900 = vmatprep.mubr.bf16.mxu0 0
    %901 = vmatmul.mubr.bf16.gmra.mxu0 %v866
    %v902 = vpop.f32.mrf.mxu0
    %v903 = vadd.f32 0.0, %v902
    %v904 = vpop.f32.mrf.mxu0
    %v905 = vpop.f32.mrf.mxu0
    %v906 = vadd.f32 0.0, %v905
    %v907 = vpop.f32.mrf.mxu0
    %908 = vdwg.mxu0
    %v909 = vpack.c.bf16 %v906, %v903
    %v911 = vunpack.c.l.b16 %v909
    %v912 = vunpack.c.h.b16 %v909
    %v913 = vpack.c.b16 %v911, %v911
    %v914 = vpack.c.b16 %v912, %v912
    %915 = vrot.lane.b32.xlu0 %v913, 24
    %v916 = vpop.permute.xlu0 %915
    %917 = vrot.lane.b32.xlu0 %v914, 24
    %v918 = vpop.permute.xlu0 %917
    %vm921 = vcmask 257216
    %922 = vst.msk [vmem:[#allocation5] sm:$0xf] %vm921, %v916
    %923 = vst.msk [vmem:[#allocation5 + $0x4] sm:$0xf] %vm921, %v918
    %v924 = vld [vmem:[#allocation2 + $0x8] sm:$0xf]
    %v925 = vld [vmem:[#allocation2 + $0xc] sm:$0xf]
    %v928 = vunpack.c.l.b16 %v924
    %v929 = vunpack.c.l.b16 %v925
    %v930 = vpack.c.b16 %v929, %v928
    %931 = vrot.lane.b32.xlu0 %v930, 96
    %v932 = vpop.permute.xlu0 %931
    %v934 = vsel %vm232, %v930, 0
    %v937 = vsel %vm232, %v932, 0
    %939 = vmatprep.subr.bf16.mxu0 0
    %940 = vmatpush1.bf16.xpose.msra.mxu0 0
    %941 = vmatprep.subr.bf16.mxu0 0
    %942 = vmatpush1.bf16.xpose.msra.mxu0 0
    %943 = vmatprep.subr.bf16.mxu0 0
    %944 = vmatpush1.bf16.xpose.msra.mxu0 0
    %945 = vmatprep.subr.bf16.mxu0 0
    %946 = vmatpush1.bf16.xpose.msra.mxu0 0
    %947 = vmatprep.subr.bf16.mxu0 0
    %948 = vmatpush1.bf16.xpose.msra.mxu0 0
    %949 = vmatprep.subr.bf16.mxu0 0
    %950 = vmatpush1.bf16.xpose.msra.mxu0 0
    %951 = vmatprep.subr.bf16.mxu0 0
    %952 = vmatpush1.bf16.xpose.msra.mxu0 0
    %953 = vmatprep.subr.bf16.mxu0 0
    %954 = vmatpush1.bf16.xpose.msra.mxu0 %v937
    %955 = vmatprep.subr.bf16.mxu0 0
    %956 = vmatpush2.bf16.xpose.msra.mxu0 0
    %957 = vmatprep.subr.bf16.mxu0 0
    %958 = vmatpush2.bf16.xpose.msra.mxu0 0
    %959 = vmatprep.subr.bf16.mxu0 0
    %960 = vmatpush2.bf16.xpose.msra.mxu0 0
    %961 = vmatprep.subr.bf16.mxu0 0
    %962 = vmatpush2.bf16.xpose.msra.mxu0 0
    %963 = vmatprep.subr.bf16.mxu0 0
    %964 = vmatpush2.bf16.xpose.msra.mxu0 0
    %965 = vmatprep.subr.bf16.mxu0 0
    %966 = vmatpush2.bf16.xpose.msra.mxu0 0
    %967 = vmatprep.subr.bf16.mxu0 0
    %968 = vmatpush2.bf16.xpose.msra.mxu0 0
    %969 = vmatprep.subr.bf16.mxu0 0
    %970 = vmatpush2.bf16.xpose.msra.mxu0 0
    %971 = vmatprep.mubr.bf16.mxu0 0
    %972 = vmatmul.mubr.bf16.gmra.mxu0 %v934
    %v973 = vpop.f32.mrf.mxu0
    %v974 = vadd.f32 0.0, %v973
    %v975 = vpop.f32.mrf.mxu0
    %v976 = vpop.f32.mrf.mxu0
    %v977 = vadd.f32 0.0, %v976
    %v978 = vpop.f32.mrf.mxu0
    %979 = vdwg.mxu0
    %980 = vst.msk [vmem:[#allocation3] sm:$0xff] %vm280, %v974
    %981 = vst.msk [vmem:[#allocation3 + $0x8] sm:$0xff] %vm280, %v977
    %v982 = vld [vmem:[#allocation2 + $0x8] sm:$0xf]
    %v983 = vld [vmem:[#allocation2 + $0xc] sm:$0xf]
    %v986 = vunpack.c.l.b16 %v982
    %v987 = vunpack.c.l.b16 %v983
    %v988 = vpack.c.b16 %v987, %v986
    %989 = vrot.lane.b32.xlu0 %v988, 120
    %v990 = vpop.permute.xlu0 %989
    %991 = vrot.lane.b32.xlu0 %v988, 88
    %v992 = vpop.permute.xlu0 %991
    %v994 = vsel %vm232, %v990, 0
    %v997 = vsel %vm232, %v992, 0
    %999 = vmatprep.subr.bf16.mxu0 0
    %1000 = vmatpush1.bf16.xpose.msra.mxu0 0
    %1001 = vmatprep.subr.bf16.mxu0 0
    %1002 = vmatpush1.bf16.xpose.msra.mxu0 0
    %1003 = vmatprep.subr.bf16.mxu0 0
    %1004 = vmatpush1.bf16.xpose.msra.mxu0 0
    %1005 = vmatprep.subr.bf16.mxu0 0
    %1006 = vmatpush1.bf16.xpose.msra.mxu0 0
    %1007 = vmatprep.subr.bf16.mxu0 0
    %1008 = vmatpush1.bf16.xpose.msra.mxu0 0
    %1009 = vmatprep.subr.bf16.mxu0 0
    %1010 = vmatpush1.bf16.xpose.msra.mxu0 0
    %1011 = vmatprep.subr.bf16.mxu0 0
    %1012 = vmatpush1.bf16.xpose.msra.mxu0 0
    %1013 = vmatprep.subr.bf16.mxu0 0
    %1014 = vmatpush1.bf16.xpose.msra.mxu0 %v997
    %1015 = vmatprep.subr.bf16.mxu0 0
    %1016 = vmatpush2.bf16.xpose.msra.mxu0 0
    %1017 = vmatprep.subr.bf16.mxu0 0
    %1018 = vmatpush2.bf16.xpose.msra.mxu0 0
    %1019 = vmatprep.subr.bf16.mxu0 0
    %1020 = vmatpush2.bf16.xpose.msra.mxu0 0
    %1021 = vmatprep.subr.bf16.mxu0 0
    %1022 = vmatpush2.bf16.xpose.msra.mxu0 0
    %1023 = vmatprep.subr.bf16.mxu0 0
    %1024 = vmatpush2.bf16.xpose.msra.mxu0 0
    %1025 = vmatprep.subr.bf16.mxu0 0
    %1026 = vmatpush2.bf16.xpose.msra.mxu0 0
    %1027 = vmatprep.subr.bf16.mxu0 0
    %1028 = vmatpush2.bf16.xpose.msra.mxu0 0
    %1029 = vmatprep.subr.bf16.mxu0 0
    %1030 = vmatpush2.bf16.xpose.msra.mxu0 0
    %1031 = vmatprep.mubr.bf16.mxu0 0
    %1032 = vmatmul.mubr.bf16.gmra.mxu0 %v994
    %v1033 = vpop.f32.mrf.mxu0
    %v1034 = vadd.f32 0.0, %v1033
    %v1035 = vpop.f32.mrf.mxu0
    %v1036 = vpop.f32.mrf.mxu0
    %v1037 = vadd.f32 0.0, %v1036
    %v1038 = vpop.f32.mrf.mxu0
    %1039 = vdwg.mxu0
    %1040 = vst.msk [vmem:[#allocation3 + $0x10] sm:$0xff] %vm280, %v1034
    %1041 = vst.msk [vmem:[#allocation3 + $0x18] sm:$0xff] %vm280, %v1037
    %v1042 = vld [vmem:[#allocation2 + $0x8] sm:$0xf]
    %v1043 = vld [vmem:[#allocation2 + $0xc] sm:$0xf]
    %v1046 = vunpack.c.l.b16 %v1042
    %v1047 = vunpack.c.l.b16 %v1043
    %v1048 = vpack.c.b16 %v1047, %v1046
    %1049 = vrot.lane.b32.xlu0 %v1048, 112
    %v1050 = vpop.permute.xlu0 %1049
    %1051 = vrot.lane.b32.xlu0 %v1048, 80
    %v1052 = vpop.permute.xlu0 %1051
    %v1054 = vsel %vm232, %v1050, 0
    %v1057 = vsel %vm232, %v1052, 0
    %1059 = vmatprep.subr.bf16.mxu0 0
    %1060 = vmatpush1.bf16.xpose.msra.mxu0 0
    %1061 = vmatprep.subr.bf16.mxu0 0
    %1062 = vmatpush1.bf16.xpose.msra.mxu0 0
    %1063 = vmatprep.subr.bf16.mxu0 0
    %1064 = vmatpush1.bf16.xpose.msra.mxu0 0
    %1065 = vmatprep.subr.bf16.mxu0 0
    %1066 = vmatpush1.bf16.xpose.msra.mxu0 0
    %1067 = vmatprep.subr.bf16.mxu0 0
    %1068 = vmatpush1.bf16.xpose.msra.mxu0 0
    %1069 = vmatprep.subr.bf16.mxu0 0
    %1070 = vmatpush1.bf16.xpose.msra.mxu0 0
    %1071 = vmatprep.subr.bf16.mxu0 0
    %1072 = vmatpush1.bf16.xpose.msra.mxu0 0
    %1073 = vmatprep.subr.bf16.mxu0 0
    %1074 = vmatpush1.bf16.xpose.msra.mxu0 %v1057
    %1075 = vmatprep.subr.bf16.mxu0 0
    %1076 = vmatpush2.bf16.xpose.msra.mxu0 0
    %1077 = vmatprep.subr.bf16.mxu0 0
    %1078 = vmatpush2.bf16.xpose.msra.mxu0 0
    %1079 = vmatprep.subr.bf16.mxu0 0
    %1080 = vmatpush2.bf16.xpose.msra.mxu0 0
    %1081 = vmatprep.subr.bf16.mxu0 0
    %1082 = vmatpush2.bf16.xpose.msra.mxu0 0
    %1083 = vmatprep.subr.bf16.mxu0 0
    %1084 = vmatpush2.bf16.xpose.msra.mxu0 0
    %1085 = vmatprep.subr.bf16.mxu0 0
    %1086 = vmatpush2.bf16.xpose.msra.mxu0 0
    %1087 = vmatprep.subr.bf16.mxu0 0
    %1088 = vmatpush2.bf16.xpose.msra.mxu0 0
    %1089 = vmatprep.subr.bf16.mxu0 0
    %1090 = vmatpush2.bf16.xpose.msra.mxu0 0
    %1091 = vmatprep.mubr.bf16.mxu0 0
    %1092 = vmatmul.mubr.bf16.gmra.mxu0 %v1054
    %v1093 = vpop.f32.mrf.mxu0
    %v1094 = vadd.f32 0.0, %v1093
    %v1095 = vpop.f32.mrf.mxu0
    %v1096 = vpop.f32.mrf.mxu0
    %v1097 = vadd.f32 0.0, %v1096
    %v1098 = vpop.f32.mrf.mxu0
    %1099 = vdwg.mxu0
    %1100 = vst.msk [vmem:[#allocation3 + $0x20] sm:$0xff] %vm280, %v1094
    %1101 = vst.msk [vmem:[#allocation3 + $0x28] sm:$0xff] %vm280, %v1097
    %v1102 = vld [vmem:[#allocation2 + $0x8] sm:$0xf]
    %v1103 = vld [vmem:[#allocation2 + $0xc] sm:$0xf]
    %v1106 = vunpack.c.l.b16 %v1102
    %v1107 = vunpack.c.l.b16 %v1103
    %v1108 = vpack.c.b16 %v1107, %v1106
    %1109 = vrot.lane.b32.xlu0 %v1108, 104
    %v1110 = vpop.permute.xlu0 %1109
    %1111 = vrot.lane.b32.xlu0 %v1108, 72
    %v1112 = vpop.permute.xlu0 %1111
    %v1114 = vsel %vm232, %v1110, 0
    %v1117 = vsel %vm232, %v1112, 0
    %1119 = vmatprep.subr.bf16.mxu0 0
    %1120 = vmatpush1.bf16.xpose.msra.mxu0 0
    %1121 = vmatprep.subr.bf16.mxu0 0
    %1122 = vmatpush1.bf16.xpose.msra.mxu0 0
    %1123 = vmatprep.subr.bf16.mxu0 0
    %1124 = vmatpush1.bf16.xpose.msra.mxu0 0
    %1125 = vmatprep.subr.bf16.mxu0 0
    %1126 = vmatpush1.bf16.xpose.msra.mxu0 0
    %1127 = vmatprep.subr.bf16.mxu0 0
    %1128 = vmatpush1.bf16.xpose.msra.mxu0 0
    %1129 = vmatprep.subr.bf16.mxu0 0
    %1130 = vmatpush1.bf16.xpose.msra.mxu0 0
    %1131 = vmatprep.subr.bf16.mxu0 0
    %1132 = vmatpush1.bf16.xpose.msra.mxu0 0
    %1133 = vmatprep.subr.bf16.mxu0 0
    %1134 = vmatpush1.bf16.xpose.msra.mxu0 %v1117
    %1135 = vmatprep.subr.bf16.mxu0 0
    %1136 = vmatpush2.bf16.xpose.msra.mxu0 0
    %1137 = vmatprep.subr.bf16.mxu0 0
    %1138 = vmatpush2.bf16.xpose.msra.mxu0 0
    %1139 = vmatprep.subr.bf16.mxu0 0
    %1140 = vmatpush2.bf16.xpose.msra.mxu0 0
    %1141 = vmatprep.subr.bf16.mxu0 0
    %1142 = vmatpush2.bf16.xpose.msra.mxu0 0
    %1143 = vmatprep.subr.bf16.mxu0 0
    %1144 = vmatpush2.bf16.xpose.msra.mxu0 0
    %1145 = vmatprep.subr.bf16.mxu0 0
    %1146 = vmatpush2.bf16.xpose.msra.mxu0 0
    %1147 = vmatprep.subr.bf16.mxu0 0
    %1148 = vmatpush2.bf16.xpose.msra.mxu0 0
    %1149 = vmatprep.subr.bf16.mxu0 0
    %1150 = vmatpush2.bf16.xpose.msra.mxu0 0
    %1151 = vmatprep.mubr.bf16.mxu0 0
    %1152 = vmatmul.mubr.bf16.gmra.mxu0 %v1114
    %v1153 = vpop.f32.mrf.mxu0
    %v1154 = vadd.f32 0.0, %v1153
    %v1155 = vpop.f32.mrf.mxu0
    %v1156 = vpop.f32.mrf.mxu0
    %v1157 = vadd.f32 0.0, %v1156
    %v1158 = vpop.f32.mrf.mxu0
    %1159 = vdwg.mxu0
    %1160 = vst.msk [vmem:[#allocation3 + $0x30] sm:$0xff] %vm280, %v1154
    %1161 = vst.msk [vmem:[#allocation3 + $0x38] sm:$0xff] %vm280, %v1157
    %v1162 = vld [vmem:[#allocation3] sm:$0xff]
    %v1163 = vld [vmem:[#allocation3 + $0x8] sm:$0xff]
    %v1164 = vld [vmem:[#allocation3 + $0x10] sm:$0xff]
    %v1165 = vld [vmem:[#allocation3 + $0x18] sm:$0xff]
    %v1166 = vld [vmem:[#allocation3 + $0x20] sm:$0xff]
    %v1167 = vld [vmem:[#allocation3 + $0x28] sm:$0xff]
    %v1168 = vld [vmem:[#allocation3 + $0x30] sm:$0xff]
    %v1169 = vld [vmem:[#allocation3 + $0x38] sm:$0xff]
    %v1170 = vmul.f32 %v1162, 0.35355338
    %v1171 = vmul.f32 %v1163, 0.35355338
    %v1172 = vmul.f32 %v1164, 0.35355338
    %v1173 = vmul.f32 %v1165, 0.35355338
    %v1174 = vmul.f32 %v1166, 0.35355338
    %v1175 = vmul.f32 %v1167, 0.35355338
    %v1176 = vmul.f32 %v1168, 0.35355338
    %v1177 = vmul.f32 %v1169, 0.35355338
    %v1178 = vld [vmem:[%s2] sm:$0xff]
    %v1179 = vld [vmem:[%s2 + $0x8] sm:$0xff]
    %v1180 = vld [vmem:[%s2 + $0x10] sm:$0xff]
    %v1181 = vld [vmem:[%s2 + $0x18] sm:$0xff]
    %v1182 = vld [vmem:[%s2 + $0x20] sm:$0xff]
    %v1183 = vld [vmem:[%s2 + $0x28] sm:$0xff]
    %v1184 = vld [vmem:[%s2 + $0x30] sm:$0xff]
    %v1185 = vld [vmem:[%s2 + $0x38] sm:$0xff]
    %v1186 = vadd.f32 %v1170, %v1178
    %v1187 = vadd.f32 %v1171, %v1179
    %v1188 = vadd.f32 %v1172, %v1180
    %v1189 = vadd.f32 %v1173, %v1181
    %v1190 = vadd.f32 %v1174, %v1182
    %v1191 = vadd.f32 %v1175, %v1183
    %v1192 = vadd.f32 %v1176, %v1184
    %v1193 = vadd.f32 %v1177, %v1185
    %v1194 = vsel %vm280, %v1186, -inf
    %1195 = vmax.xlane.f32.xlu0 %v1194
    %v1196 = vpop.xlane.xlu0 %1195
    %v1197 = vsel %vm280, %v1187, -inf
    %1198 = vmax.xlane.f32.xlu0 %v1197
    %v1199 = vpop.xlane.xlu0 %1198
    %v1200 = vsel %vm280, %v1188, -inf
    %1201 = vmax.xlane.f32.xlu0 %v1200
    %v1202 = vpop.xlane.xlu0 %1201
    %v1203 = vsel %vm280, %v1189, -inf
    %1204 = vmax.xlane.f32.xlu0 %v1203
    %v1205 = vpop.xlane.xlu0 %1204
    %v1206 = vsel %vm280, %v1190, -inf
    %1207 = vmax.xlane.f32.xlu0 %v1206
    %v1208 = vpop.xlane.xlu0 %1207
    %v1209 = vsel %vm280, %v1191, -inf
    %1210 = vmax.xlane.f32.xlu0 %v1209
    %v1211 = vpop.xlane.xlu0 %1210
    %v1212 = vsel %vm280, %v1192, -inf
    %1213 = vmax.xlane.f32.xlu0 %v1212
    %v1214 = vpop.xlane.xlu0 %1213
    %v1215 = vsel %vm280, %v1193, -inf
    %1216 = vmax.xlane.f32.xlu0 %v1215
    %v1217 = vpop.xlane.xlu0 %1216
    %v1218 = vsub.f32 %v1186, %v1196
    %v1219 = vsub.f32 %v1187, %v1199
    %v1220 = vsub.f32 %v1188, %v1202
    %v1221 = vsub.f32 %v1189, %v1205
    %v1222 = vsub.f32 %v1190, %v1208
    %v1223 = vsub.f32 %v1191, %v1211
    %v1224 = vsub.f32 %v1192, %v1214
    %v1225 = vsub.f32 %v1193, %v1217
    %v1226 = vmul.f32 %v1218, 1.442695
    %v1227 = vpow.pop %v1226
    %v1228 = vmul.f32 %v1219, 1.442695
    %v1229 = vpow.pop %v1228
    %v1230 = vmul.f32 %v1220, 1.442695
    %v1231 = vpow.pop %v1230
    %v1232 = vmul.f32 %v1221, 1.442695
    %v1233 = vpow.pop %v1232
    %v1234 = vmul.f32 %v1222, 1.442695
    %v1235 = vpow.pop %v1234
    %v1236 = vmul.f32 %v1223, 1.442695
    %v1237 = vpow.pop %v1236
    %v1238 = vmul.f32 %v1224, 1.442695
    %v1239 = vpow.pop %v1238
    %v1240 = vmul.f32 %v1225, 1.442695
    %v1241 = vpow.pop %v1240
    %v1242 = vsel %vm280, %v1227, 0.0
    %1243 = vadd.xlane.f32.xlu0 %v1242
    %v1244 = vpop.xlane.xlu0 %1243
    %v1245 = vsel %vm280, %v1229, 0.0
    %1246 = vadd.xlane.f32.xlu0 %v1245
    %v1247 = vpop.xlane.xlu0 %1246
    %v1248 = vsel %vm280, %v1231, 0.0
    %1249 = vadd.xlane.f32.xlu0 %v1248
    %v1250 = vpop.xlane.xlu0 %1249
    %v1251 = vsel %vm280, %v1233, 0.0
    %1252 = vadd.xlane.f32.xlu0 %v1251
    %v1253 = vpop.xlane.xlu0 %1252
    %v1254 = vsel %vm280, %v1235, 0.0
    %1255 = vadd.xlane.f32.xlu0 %v1254
    %v1256 = vpop.xlane.xlu0 %1255
    %v1257 = vsel %vm280, %v1237, 0.0
    %1258 = vadd.xlane.f32.xlu0 %v1257
    %v1259 = vpop.xlane.xlu0 %1258
    %v1260 = vsel %vm280, %v1239, 0.0
    %1261 = vadd.xlane.f32.xlu0 %v1260
    %v1262 = vpop.xlane.xlu0 %1261
    %v1263 = vsel %vm280, %v1241, 0.0
    %1264 = vadd.xlane.f32.xlu0 %v1263
    %v1265 = vpop.xlane.xlu0 %1264
    %v1266 = vrcp.pop %v1244
    %v1267 = vrcp.pop %v1247
    %v1268 = vrcp.pop %v1250
    %v1269 = vrcp.pop %v1253
    %v1270 = vrcp.pop %v1256
    %v1271 = vrcp.pop %v1259
    %v1272 = vrcp.pop %v1262
    %v1273 = vrcp.pop %v1265
    %v1274 = vmul.f32 %v1227, %v1266
    %v1275 = vmul.f32 %v1229, %v1267
    %v1276 = vmul.f32 %v1231, %v1268
    %v1277 = vmul.f32 %v1233, %v1269
    %v1278 = vmul.f32 %v1235, %v1270
    %v1279 = vmul.f32 %v1237, %v1271
    %v1280 = vmul.f32 %v1239, %v1272
    %v1281 = vmul.f32 %v1241, %v1273
    %v1282 = vpack.c.bf16 %v1275, %v1274
    %v1283 = vpack.c.bf16 %v1277, %v1276
    %v1284 = vpack.c.bf16 %v1279, %v1278
    %v1285 = vpack.c.bf16 %v1281, %v1280
    %v1290 = vunpack.c.l.b16 %v1282
    %v1291 = vunpack.c.h.b16 %v1282
    %v1292 = vunpack.c.l.b16 %v1283
    %v1293 = vunpack.c.h.b16 %v1283
    %v1294 = vunpack.c.l.b16 %v1284
    %v1295 = vunpack.c.h.b16 %v1284
    %v1296 = vunpack.c.l.b16 %v1285
    %v1297 = vunpack.c.h.b16 %v1285
    %v1298 = vpack.c.b16 %v1290, %v1290
    %v1299 = vpack.c.b16 %v1291, %v1291
    %v1300 = vpack.c.b16 %v1292, %v1292
    %v1301 = vpack.c.b16 %v1293, %v1293
    %v1302 = vpack.c.b16 %v1294, %v1294
    %v1303 = vpack.c.b16 %v1295, %v1295
    %v1304 = vpack.c.b16 %v1296, %v1296
    %v1305 = vpack.c.b16 %v1297, %v1297
    %1314 = vst.msk [vmem:[#allocation4] sm:$0xf] %vm615, %v1298
    %1315 = vst.msk [vmem:[#allocation4 + $0x4] sm:$0xf] %vm615, %v1299
    %1316 = vst.msk [vmem:[#allocation4 + $0x8] sm:$0xf] %vm615, %v1300
    %1317 = vst.msk [vmem:[#allocation4 + $0xc] sm:$0xf] %vm615, %v1301
    %1318 = vst.msk [vmem:[#allocation4 + $0x10] sm:$0xf] %vm615, %v1302
    %1319 = vst.msk [vmem:[#allocation4 + $0x14] sm:$0xf] %vm615, %v1303
    %1320 = vst.msk [vmem:[#allocation4 + $0x18] sm:$0xf] %vm615, %v1304
    %1321 = vst.msk [vmem:[#allocation4 + $0x1c] sm:$0xf] %vm615, %v1305
    %v1322 = vld [vmem:[#allocation2 + $0x8] sm:$0xf]
    %v1323 = vld [vmem:[#allocation2 + $0xc] sm:$0xf]
    %v1324 = vld [vmem:[#allocation4] sm:$0xf]
    %v1325 = vld [vmem:[#allocation4 + $0x4] sm:$0xf]
    %v1328 = vunpack.c.l.b16 %v1324
    %v1329 = vunpack.c.l.b16 %v1325
    %v1330 = vpack.c.b16 %v1329, %v1328
    %v1333 = vunpack.c.l.b16 %v1322
    %v1334 = vunpack.c.l.b16 %v1323
    %v1335 = vpack.c.b16 %v1334, %v1333
    %1336 = vrot.lane.b32.xlu0 %v1335, 64
    %v1337 = vpop.permute.xlu0 %1336
    %v1340 = vsel %vm280, %v1330, 0
    %1342 = vmatprep.subr.bf16.mxu0 0
    %1343 = vmatpush1.bf16.msra.mxu0 0
    %1344 = vmatprep.subr.bf16.mxu0 0
    %1345 = vmatpush1.bf16.msra.mxu0 0
    %1346 = vmatprep.subr.bf16.mxu0 0
    %1347 = vmatpush1.bf16.msra.mxu0 0
    %1348 = vmatprep.subr.bf16.mxu0 0
    %1349 = vmatpush1.bf16.msra.mxu0 0
    %1350 = vmatprep.subr.bf16.mxu0 0
    %1351 = vmatpush1.bf16.msra.mxu0 0
    %1352 = vmatprep.subr.bf16.mxu0 0
    %1353 = vmatpush1.bf16.msra.mxu0 0
    %1354 = vmatprep.subr.bf16.mxu0 0
    %1355 = vmatpush1.bf16.msra.mxu0 0
    %1356 = vmatprep.subr.bf16.mxu0 0
    %1357 = vmatpush1.bf16.msra.mxu0 %v1337
    %1358 = vmatprep.subr.bf16.mxu0 0
    %1359 = vmatpush2.bf16.msra.mxu0 0
    %1360 = vmatprep.subr.bf16.mxu0 0
    %1361 = vmatpush2.bf16.msra.mxu0 0
    %1362 = vmatprep.subr.bf16.mxu0 0
    %1363 = vmatpush2.bf16.msra.mxu0 0
    %1364 = vmatprep.subr.bf16.mxu0 0
    %1365 = vmatpush2.bf16.msra.mxu0 0
    %1366 = vmatprep.subr.bf16.mxu0 0
    %1367 = vmatpush2.bf16.msra.mxu0 0
    %1368 = vmatprep.subr.bf16.mxu0 0
    %1369 = vmatpush2.bf16.msra.mxu0 0
    %1370 = vmatprep.subr.bf16.mxu0 0
    %1371 = vmatpush2.bf16.msra.mxu0 0
    %1372 = vmatprep.subr.bf16.mxu0 0
    %1373 = vmatpush2.bf16.msra.mxu0 0
    %1374 = vmatprep.mubr.bf16.mxu0 0
    %1375 = vmatmul.mubr.bf16.gmra.mxu0 %v1340
    %v1376 = vpop.f32.mrf.mxu0
    %v1377 = vadd.f32 0.0, %v1376
    %v1378 = vpop.f32.mrf.mxu0
    %v1379 = vpop.f32.mrf.mxu0
    %v1380 = vadd.f32 0.0, %v1379
    %v1381 = vpop.f32.mrf.mxu0
    %1382 = vdwg.mxu0
    %v1383 = vpack.c.bf16 %v1380, %v1377
    %v1385 = vunpack.c.l.b16 %v1383
    %v1386 = vunpack.c.h.b16 %v1383
    %v1387 = vpack.c.b16 %v1385, %v1385
    %v1388 = vpack.c.b16 %v1386, %v1386
    %1391 = vst.msk [vmem:[#allocation5 + $0x8] sm:$0xf] %vm693, %v1387
    %1392 = vst.msk [vmem:[#allocation5 + $0xc] sm:$0xf] %vm693, %v1388
    %v1393 = vld [vmem:[#allocation2 + $0x8] sm:$0xf]
    %v1394 = vld [vmem:[#allocation2 + $0xc] sm:$0xf]
    %v1395 = vld [vmem:[#allocation4 + $0x8] sm:$0xf]
    %v1396 = vld [vmem:[#allocation4 + $0xc] sm:$0xf]
    %v1399 = vunpack.c.l.b16 %v1395
    %v1400 = vunpack.c.l.b16 %v1396
    %v1401 = vpack.c.b16 %v1400, %v1399
    %v1404 = vunpack.c.l.b16 %v1393
    %v1405 = vunpack.c.l.b16 %v1394
    %v1406 = vpack.c.b16 %v1405, %v1404
    %1407 = vrot.lane.b32.xlu0 %v1406, 56
    %v1408 = vpop.permute.xlu0 %1407
    %v1411 = vsel %vm280, %v1401, 0
    %1413 = vmatprep.subr.bf16.mxu0 0
    %1414 = vmatpush1.bf16.msra.mxu0 0
    %1415 = vmatprep.subr.bf16.mxu0 0
    %1416 = vmatpush1.bf16.msra.mxu0 0
    %1417 = vmatprep.subr.bf16.mxu0 0
    %1418 = vmatpush1.bf16.msra.mxu0 0
    %1419 = vmatprep.subr.bf16.mxu0 0
    %1420 = vmatpush1.bf16.msra.mxu0 0
    %1421 = vmatprep.subr.bf16.mxu0 0
    %1422 = vmatpush1.bf16.msra.mxu0 0
    %1423 = vmatprep.subr.bf16.mxu0 0
    %1424 = vmatpush1.bf16.msra.mxu0 0
    %1425 = vmatprep.subr.bf16.mxu0 0
    %1426 = vmatpush1.bf16.msra.mxu0 0
    %1427 = vmatprep.subr.bf16.mxu0 0
    %1428 = vmatpush1.bf16.msra.mxu0 %v1408
    %1429 = vmatprep.subr.bf16.mxu0 0
    %1430 = vmatpush2.bf16.msra.mxu0 0
    %1431 = vmatprep.subr.bf16.mxu0 0
    %1432 = vmatpush2.bf16.msra.mxu0 0
    %1433 = vmatprep.subr.bf16.mxu0 0
    %1434 = vmatpush2.bf16.msra.mxu0 0
    %1435 = vmatprep.subr.bf16.mxu0 0
    %1436 = vmatpush2.bf16.msra.mxu0 0
    %1437 = vmatprep.subr.bf16.mxu0 0
    %1438 = vmatpush2.bf16.msra.mxu0 0
    %1439 = vmatprep.subr.bf16.mxu0 0
    %1440 = vmatpush2.bf16.msra.mxu0 0
    %1441 = vmatprep.subr.bf16.mxu0 0
    %1442 = vmatpush2.bf16.msra.mxu0 0
    %1443 = vmatprep.subr.bf16.mxu0 0
    %1444 = vmatpush2.bf16.msra.mxu0 0
    %1445 = vmatprep.mubr.bf16.mxu0 0
    %1446 = vmatmul.mubr.bf16.gmra.mxu0 %v1411
    %v1447 = vpop.f32.mrf.mxu0
    %v1448 = vadd.f32 0.0, %v1447
    %v1449 = vpop.f32.mrf.mxu0
    %v1450 = vpop.f32.mrf.mxu0
    %v1451 = vadd.f32 0.0, %v1450
    %v1452 = vpop.f32.mrf.mxu0
    %1453 = vdwg.mxu0
    %v1454 = vpack.c.bf16 %v1451, %v1448
    %v1456 = vunpack.c.l.b16 %v1454
    %v1457 = vunpack.c.h.b16 %v1454
    %v1458 = vpack.c.b16 %v1456, %v1456
    %v1459 = vpack.c.b16 %v1457, %v1457
    %1460 = vrot.lane.b32.xlu0 %v1458, 8
    %v1461 = vpop.permute.xlu0 %1460
    %1462 = vrot.lane.b32.xlu0 %v1459, 8
    %v1463 = vpop.permute.xlu0 %1462
    %1466 = vst.msk [vmem:[#allocation5 + $0x8] sm:$0xf] %vm769, %v1461
    %1467 = vst.msk [vmem:[#allocation5 + $0xc] sm:$0xf] %vm769, %v1463
    %v1468 = vld [vmem:[#allocation2 + $0x8] sm:$0xf]
    %v1469 = vld [vmem:[#allocation2 + $0xc] sm:$0xf]
    %v1470 = vld [vmem:[#allocation4 + $0x10] sm:$0xf]
    %v1471 = vld [vmem:[#allocation4 + $0x14] sm:$0xf]
    %v1474 = vunpack.c.l.b16 %v1470
    %v1475 = vunpack.c.l.b16 %v1471
    %v1476 = vpack.c.b16 %v1475, %v1474
    %v1479 = vunpack.c.l.b16 %v1468
    %v1480 = vunpack.c.l.b16 %v1469
    %v1481 = vpack.c.b16 %v1480, %v1479
    %1482 = vrot.lane.b32.xlu0 %v1481, 48
    %v1483 = vpop.permute.xlu0 %1482
    %v1486 = vsel %vm280, %v1476, 0
    %1488 = vmatprep.subr.bf16.mxu0 0
    %1489 = vmatpush1.bf16.msra.mxu0 0
    %1490 = vmatprep.subr.bf16.mxu0 0
    %1491 = vmatpush1.bf16.msra.mxu0 0
    %1492 = vmatprep.subr.bf16.mxu0 0
    %1493 = vmatpush1.bf16.msra.mxu0 0
    %1494 = vmatprep.subr.bf16.mxu0 0
    %1495 = vmatpush1.bf16.msra.mxu0 0
    %1496 = vmatprep.subr.bf16.mxu0 0
    %1497 = vmatpush1.bf16.msra.mxu0 0
    %1498 = vmatprep.subr.bf16.mxu0 0
    %1499 = vmatpush1.bf16.msra.mxu0 0
    %1500 = vmatprep.subr.bf16.mxu0 0
    %1501 = vmatpush1.bf16.msra.mxu0 0
    %1502 = vmatprep.subr.bf16.mxu0 0
    %1503 = vmatpush1.bf16.msra.mxu0 %v1483
    %1504 = vmatprep.subr.bf16.mxu0 0
    %1505 = vmatpush2.bf16.msra.mxu0 0
    %1506 = vmatprep.subr.bf16.mxu0 0
    %1507 = vmatpush2.bf16.msra.mxu0 0
    %1508 = vmatprep.subr.bf16.mxu0 0
    %1509 = vmatpush2.bf16.msra.mxu0 0
    %1510 = vmatprep.subr.bf16.mxu0 0
    %1511 = vmatpush2.bf16.msra.mxu0 0
    %1512 = vmatprep.subr.bf16.mxu0 0
    %1513 = vmatpush2.bf16.msra.mxu0 0
    %1514 = vmatprep.subr.bf16.mxu0 0
    %1515 = vmatpush2.bf16.msra.mxu0 0
    %1516 = vmatprep.subr.bf16.mxu0 0
    %1517 = vmatpush2.bf16.msra.mxu0 0
    %1518 = vmatprep.subr.bf16.mxu0 0
    %1519 = vmatpush2.bf16.msra.mxu0 0
    %1520 = vmatprep.mubr.bf16.mxu0 0
    %1521 = vmatmul.mubr.bf16.gmra.mxu0 %v1486
    %v1522 = vpop.f32.mrf.mxu0
    %v1523 = vadd.f32 0.0, %v1522
    %v1524 = vpop.f32.mrf.mxu0
    %v1525 = vpop.f32.mrf.mxu0
    %v1526 = vadd.f32 0.0, %v1525
    %v1527 = vpop.f32.mrf.mxu0
    %1528 = vdwg.mxu0
    %v1529 = vpack.c.bf16 %v1526, %v1523
    %v1531 = vunpack.c.l.b16 %v1529
    %v1532 = vunpack.c.h.b16 %v1529
    %v1533 = vpack.c.b16 %v1531, %v1531
    %v1534 = vpack.c.b16 %v1532, %v1532
    %1535 = vrot.lane.b32.xlu0 %v1533, 16
    %v1536 = vpop.permute.xlu0 %1535
    %1537 = vrot.lane.b32.xlu0 %v1534, 16
    %v1538 = vpop.permute.xlu0 %1537
    %1541 = vst.msk [vmem:[#allocation5 + $0x8] sm:$0xf] %vm845, %v1536
    %1542 = vst.msk [vmem:[#allocation5 + $0xc] sm:$0xf] %vm845, %v1538
    %v1543 = vld [vmem:[#allocation2 + $0x8] sm:$0xf]
    %v1544 = vld [vmem:[#allocation2 + $0xc] sm:$0xf]
    %v1545 = vld [vmem:[#allocation4 + $0x18] sm:$0xf]
    %v1546 = vld [vmem:[#allocation4 + $0x1c] sm:$0xf]
    %v1549 = vunpack.c.l.b16 %v1545
    %v1550 = vunpack.c.l.b16 %v1546
    %v1551 = vpack.c.b16 %v1550, %v1549
    %v1554 = vunpack.c.l.b16 %v1543
    %v1555 = vunpack.c.l.b16 %v1544
    %v1556 = vpack.c.b16 %v1555, %v1554
    %1557 = vrot.lane.b32.xlu0 %v1556, 40
    %v1558 = vpop.permute.xlu0 %1557
    %v1561 = vsel %vm280, %v1551, 0
    %1563 = vmatprep.subr.bf16.mxu0 0
    %1564 = vmatpush1.bf16.msra.mxu0 0
    %1565 = vmatprep.subr.bf16.mxu0 0
    %1566 = vmatpush1.bf16.msra.mxu0 0
    %1567 = vmatprep.subr.bf16.mxu0 0
    %1568 = vmatpush1.bf16.msra.mxu0 0
    %1569 = vmatprep.subr.bf16.mxu0 0
    %1570 = vmatpush1.bf16.msra.mxu0 0
    %1571 = vmatprep.subr.bf16.mxu0 0
    %1572 = vmatpush1.bf16.msra.mxu0 0
    %1573 = vmatprep.subr.bf16.mxu0 0
    %1574 = vmatpush1.bf16.msra.mxu0 0
    %1575 = vmatprep.subr.bf16.mxu0 0
    %1576 = vmatpush1.bf16.msra.mxu0 0
    %1577 = vmatprep.subr.bf16.mxu0 0
    %1578 = vmatpush1.bf16.msra.mxu0 %v1558
    %1579 = vmatprep.subr.bf16.mxu0 0
    %1580 = vmatpush2.bf16.msra.mxu0 0
    %1581 = vmatprep.subr.bf16.mxu0 0
    %1582 = vmatpush2.bf16.msra.mxu0 0
    %1583 = vmatprep.subr.bf16.mxu0 0
    %1584 = vmatpush2.bf16.msra.mxu0 0
    %1585 = vmatprep.subr.bf16.mxu0 0
    %1586 = vmatpush2.bf16.msra.mxu0 0
    %1587 = vmatprep.subr.bf16.mxu0 0
    %1588 = vmatpush2.bf16.msra.mxu0 0
    %1589 = vmatprep.subr.bf16.mxu0 0
    %1590 = vmatpush2.bf16.msra.mxu0 0
    %1591 = vmatprep.subr.bf16.mxu0 0
    %1592 = vmatpush2.bf16.msra.mxu0 0
    %1593 = vmatprep.subr.bf16.mxu0 0
    %1594 = vmatpush2.bf16.msra.mxu0 0
    %1595 = vmatprep.mubr.bf16.mxu0 0
    %1596 = vmatmul.mubr.bf16.gmra.mxu0 %v1561
    %v1597 = vpop.f32.mrf.mxu0
    %v1598 = vadd.f32 0.0, %v1597
    %v1599 = vpop.f32.mrf.mxu0
    %v1600 = vpop.f32.mrf.mxu0
    %v1601 = vadd.f32 0.0, %v1600
    %v1602 = vpop.f32.mrf.mxu0
    %1603 = vdwg.mxu0
    %v1604 = vpack.c.bf16 %v1601, %v1598
    %v1606 = vunpack.c.l.b16 %v1604
    %v1607 = vunpack.c.h.b16 %v1604
    %v1608 = vpack.c.b16 %v1606, %v1606
    %v1609 = vpack.c.b16 %v1607, %v1607
    %1610 = vrot.lane.b32.xlu0 %v1608, 24
    %v1611 = vpop.permute.xlu0 %1610
    %1612 = vrot.lane.b32.xlu0 %v1609, 24
    %v1613 = vpop.permute.xlu0 %1612
    %1616 = vst.msk [vmem:[#allocation5 + $0x8] sm:$0xf] %vm921, %v1611
    %1617 = vst.msk [vmem:[#allocation5 + $0xc] sm:$0xf] %vm921, %v1613
    %v1618 = vld [vmem:[#allocation5] sm:$0xf]
    %v1619 = vld [vmem:[#allocation5 + $0x4] sm:$0xf]
    %v1620 = vld [vmem:[#allocation5 + $0x8] sm:$0xf]
    %v1621 = vld [vmem:[#allocation5 + $0xc] sm:$0xf]
    %v1622 = vld [vmem:[%s1 + $0x30] sm:$0xf]
    %v1623 = vld [vmem:[%s1 + $0x34] sm:$0xf]
    %v1624 = vld [vmem:[%s1 + $0x38] sm:$0xf]
    %v1625 = vld [vmem:[%s1 + $0x3c] sm:$0xf]
    %v1626 = vld [vmem:[%s2 + $0x50] sm:$0x1]
    %v1627 = vlaneseq
    %v1628 = vshrl.u32 %v1627, 7
    %v1629 = vsub.s32 0, %v1628
    %v1630 = vrot.slane %v1626, %v1629
    %v1635 = vunpack.c.l.b16 %v1618
    %v1636 = vunpack.c.l.b16 %v1619
    %v1637 = vunpack.c.l.b16 %v1620
    %v1638 = vunpack.c.l.b16 %v1621
    %v1639 = vpack.c.b16 %v1636, %v1635
    %v1640 = vpack.c.b16 %v1638, %v1637
    %v1645 = vunpack.c.l.b16 %v1622
    %v1646 = vunpack.c.l.b16 %v1623
    %v1647 = vunpack.c.l.b16 %v1624
    %v1648 = vunpack.c.l.b16 %v1625
    %v1649 = vpack.c.b16 %v1646, %v1645
    %v1650 = vpack.c.b16 %v1648, %v1647
    %v1654 = vsel %vm146, %v1639, 0
    %v1657 = vsel %vm146, %v1640, 0
    %1659 = vmatprep.subr.bf16.mxu0 0
    %1660 = vmatpush1.bf16.msra.mxu0 0
    %1661 = vmatprep.subr.bf16.mxu0 0
    %1662 = vmatpush1.bf16.msra.mxu0 0
    %1663 = vmatprep.subr.bf16.mxu0 0
    %1664 = vmatpush1.bf16.msra.mxu0 0
    %1665 = vmatprep.subr.bf16.mxu0 0
    %1666 = vmatpush1.bf16.msra.mxu0 0
    %1667 = vmatprep.subr.bf16.mxu0 0
    %1668 = vmatpush1.bf16.msra.mxu0 0
    %1669 = vmatprep.subr.bf16.mxu0 0
    %1670 = vmatpush1.bf16.msra.mxu0 0
    %1671 = vmatprep.subr.bf16.mxu0 0
    %1672 = vmatpush1.bf16.msra.mxu0 %v1650
    %1673 = vmatprep.subr.bf16.mxu0 0
    %1674 = vmatpush1.bf16.msra.mxu0 %v1649
    %1675 = vmatprep.subr.bf16.mxu0 0
    %1676 = vmatpush2.bf16.msra.mxu0 0
    %1677 = vmatprep.subr.bf16.mxu0 0
    %1678 = vmatpush2.bf16.msra.mxu0 0
    %1679 = vmatprep.subr.bf16.mxu0 0
    %1680 = vmatpush2.bf16.msra.mxu0 0
    %1681 = vmatprep.subr.bf16.mxu0 0
    %1682 = vmatpush2.bf16.msra.mxu0 0
    %1683 = vmatprep.subr.bf16.mxu0 0
    %1684 = vmatpush2.bf16.msra.mxu0 0
    %1685 = vmatprep.subr.bf16.mxu0 0
    %1686 = vmatpush2.bf16.msra.mxu0 0
    %1687 = vmatprep.subr.bf16.mxu0 0
    %1688 = vmatpush2.bf16.msra.mxu0 0
    %1689 = vmatprep.subr.bf16.mxu0 0
    %1690 = vmatpush2.bf16.msra.mxu0 0
    %1691 = vmatprep.mubr.bf16.mxu0 0
    %1692 = vmatmul.mubr.bf16.gmra.mxu0 %v1654
    %v1693 = vpop.f32.mrf.mxu0
    %v1694 = vadd.f32 %v1630, %v1693
    %v1695 = vpop.f32.mrf.mxu0
    %v1696 = vpop.f32.mrf.mxu0
    %v1697 = vadd.f32 %v1630, %v1696
    %v1698 = vpop.f32.mrf.mxu0
    %1699 = vmatprep.mubr.bf16.mxu0 0
    %1700 = vmatmul.mubr.bf16.gmra.mxu0 %v1657
    %v1701 = vpop.f32.mrf.mxu0
    %v1702 = vadd.f32 %v1630, %v1701
    %v1703 = vpop.f32.mrf.mxu0
    %v1704 = vpop.f32.mrf.mxu0
    %v1705 = vadd.f32 %v1630, %v1704
    %v1706 = vpop.f32.mrf.mxu0
    %1707 = vdwg.mxu0
    %v1708 = vadd.f32 %v109, %v1694
    %v1709 = vadd.f32 %v112, %v1697
    %v1710 = vadd.f32 %v117, %v1702
    %v1711 = vadd.f32 %v120, %v1705
    %v1712 = vld [vmem:[%s2 + $0x58] sm:$0x1]
    %v1713 = vld [vmem:[%s2 + $0x60] sm:$0x1]
    %v1714 = vsel %vm146, %v1708, 0.0
    %1715 = vadd.xlane.f32.xlu0 %v1714
    %v1716 = vpop.xlane.xlu0 %1715
    %v1717 = vsel %vm146, %v1709, 0.0
    %1718 = vadd.xlane.f32.xlu0 %v1717
    %v1719 = vpop.xlane.xlu0 %1718
    %v1720 = vsel %vm146, %v1710, 0.0
    %1721 = vadd.xlane.f32.xlu0 %v1720
    %v1722 = vpop.xlane.xlu0 %1721
    %v1723 = vsel %vm146, %v1711, 0.0
    %1724 = vadd.xlane.f32.xlu0 %v1723
    %v1725 = vpop.xlane.xlu0 %1724
    %v1726 = vrcp.pop 32.0
    %v1727 = vmul.f32 %v1716, %v1726
    %v1728 = vmul.f32 %v1719, %v1726
    %v1729 = vmul.f32 %v1722, %v1726
    %v1730 = vmul.f32 %v1725, %v1726
    %v1731 = vsub.f32 %v1708, %v1727
    %v1732 = vsub.f32 %v1709, %v1728
    %v1733 = vsub.f32 %v1710, %v1729
    %v1734 = vsub.f32 %v1711, %v1730
    %v1735 = vmul.f32 %v1731, %v1731
    %v1736 = vmul.f32 %v1732, %v1732
    %v1737 = vmul.f32 %v1733, %v1733
    %v1738 = vmul.f32 %v1734, %v1734
    %v1739 = vsel %vm146, %v1735, 0.0
    %1740 = vadd.xlane.f32.xlu0 %v1739
    %v1741 = vpop.xlane.xlu0 %1740
    %v1742 = vsel %vm146, %v1736, 0.0
    %1743 = vadd.xlane.f32.xlu0 %v1742
    %v1744 = vpop.xlane.xlu0 %1743
    %v1745 = vsel %vm146, %v1737, 0.0
    %1746 = vadd.xlane.f32.xlu0 %v1745
    %v1747 = vpop.xlane.xlu0 %1746
    %v1748 = vsel %vm146, %v1738, 0.0
    %1749 = vadd.xlane.f32.xlu0 %v1748
    %v1750 = vpop.xlane.xlu0 %1749
    %v1751 = vmul.f32 %v1741, %v1726
    %v1752 = vmul.f32 %v1744, %v1726
    %v1753 = vmul.f32 %v1747, %v1726
    %v1754 = vmul.f32 %v1750, %v1726
    %v1755 = vadd.f32 %v1751, 1e-05
    %v1756 = vadd.f32 %v1752, 1e-05
    %v1757 = vadd.f32 %v1753, 1e-05
    %v1758 = vadd.f32 %v1754, 1e-05
    %v1759 = vrsqrt.pop %v1755
    %v1760 = vrsqrt.pop %v1756
    %v1761 = vrsqrt.pop %v1757
    %v1762 = vrsqrt.pop %v1758
    %v1763 = vmul.f32 %v1731, %v1759
    %v1764 = vmul.f32 %v1732, %v1760
    %v1765 = vmul.f32 %v1733, %v1761
    %v1766 = vmul.f32 %v1734, %v1762
    %v1767 = vlaneseq
    %v1768 = vshrl.u32 %v1767, 7
    %v1769 = vsub.s32 0, %v1768
    %v1770 = vrot.slane %v1712, %v1769
    %v1771 = vmul.f32 %v1763, %v1770
    %v1772 = vmul.f32 %v1764, %v1770
    %v1773 = vmul.f32 %v1765, %v1770
    %v1774 = vmul.f32 %v1766, %v1770
    %v1775 = vlaneseq
    %v1776 = vshrl.u32 %v1775, 7
    %v1777 = vsub.s32 0, %v1776
    %v1778 = vrot.slane %v1713, %v1777
    %v1779 = vadd.f32 %v1771, %v1778
    %v1780 = vadd.f32 %v1772, %v1778
    %v1781 = vadd.f32 %v1773, %v1778
    %v1782 = vadd.f32 %v1774, %v1778
    %v1783 = vpack.c.bf16 %v1780, %v1779
    %v1784 = vpack.c.bf16 %v1782, %v1781
    %v1785 = vld [vmem:[%s1 + $0x40] sm:$0xf]
    %v1786 = vld [vmem:[%s1 + $0x44] sm:$0xf]
    %v1787 = vld [vmem:[%s1 + $0x48] sm:$0xf]
    %v1788 = vld [vmem:[%s1 + $0x4c] sm:$0xf]
    %v1789 = vld [vmem:[%s2 + $0x68] sm:$0x1]
    %v1790 = vlaneseq
    %v1791 = vshrl.u32 %v1790, 7
    %v1792 = vsub.s32 0, %v1791
    %v1793 = vrot.slane %v1789, %v1792
    %v1798 = vunpack.c.l.b16 %v1785
    %v1799 = vunpack.c.l.b16 %v1786
    %v1800 = vunpack.c.l.b16 %v1787
    %v1801 = vunpack.c.l.b16 %v1788
    %v1802 = vpack.c.b16 %v1799, %v1798
    %v1803 = vpack.c.b16 %v1801, %v1800
    %v1807 = vsel %vm146, %v1783, 0
    %v1810 = vsel %vm146, %v1784, 0
    %1812 = vmatprep.subr.bf16.mxu0 0
    %1813 = vmatpush1.bf16.msra.mxu0 0
    %1814 = vmatprep.subr.bf16.mxu0 0
    %1815 = vmatpush1.bf16.msra.mxu0 0
    %1816 = vmatprep.subr.bf16.mxu0 0
    %1817 = vmatpush1.bf16.msra.mxu0 0
    %1818 = vmatprep.subr.bf16.mxu0 0
    %1819 = vmatpush1.bf16.msra.mxu0 0
    %1820 = vmatprep.subr.bf16.mxu0 0
    %1821 = vmatpush1.bf16.msra.mxu0 0
    %1822 = vmatprep.subr.bf16.mxu0 0
    %1823 = vmatpush1.bf16.msra.mxu0 0
    %1824 = vmatprep.subr.bf16.mxu0 0
    %1825 = vmatpush1.bf16.msra.mxu0 %v1803
    %1826 = vmatprep.subr.bf16.mxu0 0
    %1827 = vmatpush1.bf16.msra.mxu0 %v1802
    %1828 = vmatprep.subr.bf16.mxu0 0
    %1829 = vmatpush2.bf16.msra.mxu0 0
    %1830 = vmatprep.subr.bf16.mxu0 0
    %1831 = vmatpush2.bf16.msra.mxu0 0
    %1832 = vmatprep.subr.bf16.mxu0 0
    %1833 = vmatpush2.bf16.msra.mxu0 0
    %1834 = vmatprep.subr.bf16.mxu0 0
    %1835 = vmatpush2.bf16.msra.mxu0 0
    %1836 = vmatprep.subr.bf16.mxu0 0
    %1837 = vmatpush2.bf16.msra.mxu0 0
    %1838 = vmatprep.subr.bf16.mxu0 0
    %1839 = vmatpush2.bf16.msra.mxu0 0
    %1840 = vmatprep.subr.bf16.mxu0 0
    %1841 = vmatpush2.bf16.msra.mxu0 0
    %1842 = vmatprep.subr.bf16.mxu0 0
    %1843 = vmatpush2.bf16.msra.mxu0 0
    %1844 = vmatprep.mubr.bf16.mxu0 0
    %1845 = vmatmul.mubr.bf16.gmra.mxu0 %v1807
    %v1846 = vpop.f32.mrf.mxu0
    %v1847 = vadd.f32 %v1793, %v1846
    %v1848 = vpop.f32.mrf.mxu0
    %v1849 = vpop.f32.mrf.mxu0
    %v1850 = vadd.f32 %v1793, %v1849
    %v1851 = vpop.f32.mrf.mxu0
    %1852 = vmatprep.mubr.bf16.mxu0 0
    %1853 = vmatmul.mubr.bf16.gmra.mxu0 %v1810
    %v1854 = vpop.f32.mrf.mxu0
    %v1855 = vadd.f32 %v1793, %v1854
    %v1856 = vpop.f32.mrf.mxu0
    %v1857 = vpop.f32.mrf.mxu0
    %v1858 = vadd.f32 %v1793, %v1857
    %v1859 = vpop.f32.mrf.mxu0
    %1860 = vdwg.mxu0
    %v1861 = vmul.f32 %v1847, 0.5
    %v1862 = vmul.f32 %v1850, 0.5
    %v1863 = vmul.f32 %v1855, 0.5
    %v1864 = vmul.f32 %v1858, 0.5
    %v1865 = vmul.f32 %v1847, 0.70710677
    %v1866 = vmul.f32 %v1850, 0.70710677
    %v1867 = vmul.f32 %v1855, 0.70710677
    %v1868 = vmul.f32 %v1858, 0.70710677
    %v1869 = verf.f32.pop %v1865
    %v1870 = verf.f32.pop %v1866
    %v1871 = verf.f32.pop %v1867
    %v1872 = verf.f32.pop %v1868
    %v1873 = vadd.f32 %v1869, 1.0
    %v1874 = vadd.f32 %v1870, 1.0
    %v1875 = vadd.f32 %v1871, 1.0
    %v1876 = vadd.f32 %v1872, 1.0
    %v1877 = vmul.f32 %v1861, %v1873
    %v1878 = vmul.f32 %v1862, %v1874
    %v1879 = vmul.f32 %v1863, %v1875
    %v1880 = vmul.f32 %v1864, %v1876
    %v1881 = vpack.c.bf16 %v1878, %v1877
    %v1882 = vpack.c.bf16 %v1880, %v1879
    %v1883 = vld [vmem:[%s1 + $0x50] sm:$0xf]
    %v1884 = vld [vmem:[%s1 + $0x54] sm:$0xf]
    %v1885 = vld [vmem:[%s1 + $0x58] sm:$0xf]
    %v1886 = vld [vmem:[%s1 + $0x5c] sm:$0xf]
    %v1887 = vld [vmem:[%s1 + $0x60] sm:$0xf]
    %v1888 = vld [vmem:[%s1 + $0x64] sm:$0xf]
    %v1889 = vld [vmem:[%s1 + $0x68] sm:$0xf]
    %v1890 = vld [vmem:[%s1 + $0x6c] sm:$0xf]
    %v1891 = vld [vmem:[%s2 + $0x70] sm:$0x1]
    %v1892 = vlaneseq
    %v1893 = vshrl.u32 %v1892, 7
    %v1894 = vsub.s32 0, %v1893
    %v1895 = vrot.slane %v1891, %v1894
    %v1904 = vunpack.c.l.b16 %v1883
    %v1905 = vunpack.c.l.b16 %v1884
    %v1906 = vunpack.c.l.b16 %v1885
    %v1907 = vunpack.c.l.b16 %v1886
    %v1908 = vunpack.c.l.b16 %v1887
    %v1909 = vunpack.c.l.b16 %v1888
    %v1910 = vunpack.c.l.b16 %v1889
    %v1911 = vunpack.c.l.b16 %v1890
    %v1912 = vpack.c.b16 %v1905, %v1904
    %v1913 = vpack.c.b16 %v1907, %v1906
    %v1914 = vpack.c.b16 %v1909, %v1908
    %v1915 = vpack.c.b16 %v1911, %v1910
    %v1921 = vsel %vm67, %v1881, 0
    %v1924 = vsel %vm67, %v1882, 0
    %1926 = vmatprep.subr.bf16.mxu0 0
    %1927 = vmatpush1.bf16.msra.mxu0 0
    %1928 = vmatprep.subr.bf16.mxu0 0
    %1929 = vmatpush1.bf16.msra.mxu0 0
    %1930 = vmatprep.subr.bf16.mxu0 0
    %1931 = vmatpush1.bf16.msra.mxu0 0
    %1932 = vmatprep.subr.bf16.mxu0 0
    %1933 = vmatpush1.bf16.msra.mxu0 0
    %1934 = vmatprep.subr.bf16.mxu0 0
    %1935 = vmatpush1.bf16.msra.mxu0 %v1915
    %1936 = vmatprep.subr.bf16.mxu0 0
    %1937 = vmatpush1.bf16.msra.mxu0 %v1914
    %1938 = vmatprep.subr.bf16.mxu0 0
    %1939 = vmatpush1.bf16.msra.mxu0 %v1913
    %1940 = vmatprep.subr.bf16.mxu0 0
    %1941 = vmatpush1.bf16.msra.mxu0 %v1912
    %1942 = vmatprep.subr.bf16.mxu0 0
    %1943 = vmatpush2.bf16.msra.mxu0 0
    %1944 = vmatprep.subr.bf16.mxu0 0
    %1945 = vmatpush2.bf16.msra.mxu0 0
    %1946 = vmatprep.subr.bf16.mxu0 0
    %1947 = vmatpush2.bf16.msra.mxu0 0
    %1948 = vmatprep.subr.bf16.mxu0 0
    %1949 = vmatpush2.bf16.msra.mxu0 0
    %1950 = vmatprep.subr.bf16.mxu0 0
    %1951 = vmatpush2.bf16.msra.mxu0 0
    %1952 = vmatprep.subr.bf16.mxu0 0
    %1953 = vmatpush2.bf16.msra.mxu0 0
    %1954 = vmatprep.subr.bf16.mxu0 0
    %1955 = vmatpush2.bf16.msra.mxu0 0
    %1956 = vmatprep.subr.bf16.mxu0 0
    %1957 = vmatpush2.bf16.msra.mxu0 0
    %1958 = vmatprep.mubr.bf16.mxu0 0
    %1959 = vmatmul.mubr.bf16.gmra.mxu0 %v1921
    %v1960 = vpop.f32.mrf.mxu0
    %v1961 = vadd.f32 %v1895, %v1960
    %v1962 = vpop.f32.mrf.mxu0
    %v1963 = vpop.f32.mrf.mxu0
    %v1964 = vadd.f32 %v1895, %v1963
    %v1965 = vpop.f32.mrf.mxu0
    %1966 = vmatprep.mubr.bf16.mxu0 0
    %1967 = vmatmul.mubr.bf16.gmra.mxu0 %v1924
    %v1968 = vpop.f32.mrf.mxu0
    %v1969 = vadd.f32 %v1895, %v1968
    %v1970 = vpop.f32.mrf.mxu0
    %v1971 = vpop.f32.mrf.mxu0
    %v1972 = vadd.f32 %v1895, %v1971
    %v1973 = vpop.f32.mrf.mxu0
    %1974 = vdwg.mxu0
    %v1975 = vadd.f32 %v1708, %v1961
    %v1976 = vadd.f32 %v1709, %v1964
    %v1977 = vadd.f32 %v1710, %v1969
    %v1978 = vadd.f32 %v1711, %v1972
    %v1979 = vpack.c.bf16 %v1976, %v1975
    %v1980 = vpack.c.bf16 %v1978, %v1977
    %v1981 = vld [vmem:[%s1 + $0x20] sm:$0xf]
    %v1982 = vld [vmem:[%s1 + $0x24] sm:$0xf]
    %v1983 = vld [vmem:[%s1 + $0x28] sm:$0xf]
    %v1984 = vld [vmem:[%s1 + $0x2c] sm:$0xf]
    %v1985 = vld [vmem:[%s2 + $0x48] sm:$0x1]
    %v1986 = vlaneseq
    %v1987 = vshrl.u32 %v1986, 7
    %v1988 = vsub.s32 0, %v1987
    %v1989 = vrot.slane %v1985, %v1988
    %v1994 = vunpack.c.l.b16 %v1981
    %v1995 = vunpack.c.l.b16 %v1982
    %v1996 = vunpack.c.l.b16 %v1983
    %v1997 = vunpack.c.l.b16 %v1984
    %v1998 = vpack.c.b16 %v1995, %v1994
    %v1999 = vpack.c.b16 %v1997, %v1996
    %v2003 = vsel %vm146, %v1979, 0
    %v2006 = vsel %vm146, %v1980, 0
    %2008 = vmatprep.subr.bf16.mxu0 0
    %2009 = vmatpush1.bf16.msra.mxu0 0
    %2010 = vmatprep.subr.bf16.mxu0 0
    %2011 = vmatpush1.bf16.msra.mxu0 0
    %2012 = vmatprep.subr.bf16.mxu0 0
    %2013 = vmatpush1.bf16.msra.mxu0 0
    %2014 = vmatprep.subr.bf16.mxu0 0
    %2015 = vmatpush1.bf16.msra.mxu0 0
    %2016 = vmatprep.subr.bf16.mxu0 0
    %2017 = vmatpush1.bf16.msra.mxu0 0
    %2018 = vmatprep.subr.bf16.mxu0 0
    %2019 = vmatpush1.bf16.msra.mxu0 0
    %2020 = vmatprep.subr.bf16.mxu0 0
    %2021 = vmatpush1.bf16.msra.mxu0 %v1999
    %2022 = vmatprep.subr.bf16.mxu0 0
    %2023 = vmatpush1.bf16.msra.mxu0 %v1998
    %2024 = vmatprep.subr.bf16.mxu0 0
    %2025 = vmatpush2.bf16.msra.mxu0 0
    %2026 = vmatprep.subr.bf16.mxu0 0
    %2027 = vmatpush2.bf16.msra.mxu0 0
    %2028 = vmatprep.subr.bf16.mxu0 0
    %2029 = vmatpush2.bf16.msra.mxu0 0
    %2030 = vmatprep.subr.bf16.mxu0 0
    %2031 = vmatpush2.bf16.msra.mxu0 0
    %2032 = vmatprep.subr.bf16.mxu0 0
    %2033 = vmatpush2.bf16.msra.mxu0 0
    %2034 = vmatprep.subr.bf16.mxu0 0
    %2035 = vmatpush2.bf16.msra.mxu0 0
    %2036 = vmatprep.subr.bf16.mxu0 0
    %2037 = vmatpush2.bf16.msra.mxu0 0
    %2038 = vmatprep.subr.bf16.mxu0 0
    %2039 = vmatpush2.bf16.msra.mxu0 0
    %2040 = vmatprep.mubr.bf16.mxu0 0
    %2041 = vmatmul.mubr.bf16.gmra.mxu0 %v2003
    %v2042 = vpop.f32.mrf.mxu0
    %v2043 = vadd.f32 %v1989, %v2042
    %v2044 = vpop.f32.mrf.mxu0
    %v2045 = vpop.f32.mrf.mxu0
    %v2046 = vadd.f32 %v1989, %v2045
    %v2047 = vpop.f32.mrf.mxu0
    %2048 = vmatprep.mubr.bf16.mxu0 0
    %2049 = vmatmul.mubr.bf16.gmra.mxu0 %v2006
    %v2050 = vpop.f32.mrf.mxu0
    %v2051 = vadd.f32 %v1989, %v2050
    %v2052 = vpop.f32.mrf.mxu0
    %v2053 = vpop.f32.mrf.mxu0
    %v2054 = vadd.f32 %v1989, %v2053
    %v2055 = vpop.f32.mrf.mxu0
    %2056 = vdwg.mxu0
    %v2057 = vpack.c.bf16 %v2046, %v2043
    %v2058 = vpack.c.bf16 %v2054, %v2051
    %v2061 = vunpack.c.l.b16 %v2057
    %v2062 = vunpack.c.h.b16 %v2057
    %v2063 = vunpack.c.l.b16 %v2058
    %v2064 = vunpack.c.h.b16 %v2058
    %v2065 = vpack.c.b16 %v2061, %v2061
    %v2066 = vpack.c.b16 %v2062, %v2062
    %v2067 = vpack.c.b16 %v2063, %v2063
    %v2068 = vpack.c.b16 %v2064, %v2064
    %2073 = vst.msk [vmem:[#allocation2] sm:$0xf] %vm218, %v2065
    %2074 = vst.msk [vmem:[#allocation2 + $0x4] sm:$0xf] %vm218, %v2066
    %2075 = vst.msk [vmem:[#allocation2 + $0x8] sm:$0xf] %vm218, %v2067
    %2076 = vst.msk [vmem:[#allocation2 + $0xc] sm:$0xf] %vm218, %v2068
    %v2077 = vld [vmem:[#allocation2] sm:$0xf]
    %v2078 = vld [vmem:[#allocation2 + $0x4] sm:$0xf]
    %v2081 = vunpack.c.l.b16 %v2077
    %v2082 = vunpack.c.l.b16 %v2078
    %v2083 = vpack.c.b16 %v2082, %v2081
    %2084 = vrot.lane.b32.xlu0 %v2083, 96
    %v2085 = vpop.permute.xlu0 %2084
    %v2087 = vsel %vm232, %v2083, 0
    %v2090 = vsel %vm232, %v2085, 0
    %2092 = vmatprep.subr.bf16.mxu0 0
    %2093 = vmatpush1.bf16.xpose.msra.mxu0 0
    %2094 = vmatprep.subr.bf16.mxu0 0
    %2095 = vmatpush1.bf16.xpose.msra.mxu0 0
    %2096 = vmatprep.subr.bf16.mxu0 0
    %2097 = vmatpush1.bf16.xpose.msra.mxu0 0
    %2098 = vmatprep.subr.bf16.mxu0 0
    %2099 = vmatpush1.bf16.xpose.msra.mxu0 0
    %2100 = vmatprep.subr.bf16.mxu0 0
    %2101 = vmatpush1.bf16.xpose.msra.mxu0 0
    %2102 = vmatprep.subr.bf16.mxu0 0
    %2103 = vmatpush1.bf16.xpose.msra.mxu0 0
    %2104 = vmatprep.subr.bf16.mxu0 0
    %2105 = vmatpush1.bf16.xpose.msra.mxu0 0
    %2106 = vmatprep.subr.bf16.mxu0 0
    %2107 = vmatpush1.bf16.xpose.msra.mxu0 %v2090
    %2108 = vmatprep.subr.bf16.mxu0 0
    %2109 = vmatpush2.bf16.xpose.msra.mxu0 0
    %2110 = vmatprep.subr.bf16.mxu0 0
    %2111 = vmatpush2.bf16.xpose.msra.mxu0 0
    %2112 = vmatprep.subr.bf16.mxu0 0
    %2113 = vmatpush2.bf16.xpose.msra.mxu0 0
    %2114 = vmatprep.subr.bf16.mxu0 0
    %2115 = vmatpush2.bf16.xpose.msra.mxu0 0
    %2116 = vmatprep.subr.bf16.mxu0 0
    %2117 = vmatpush2.bf16.xpose.msra.mxu0 0
    %2118 = vmatprep.subr.bf16.mxu0 0
    %2119 = vmatpush2.bf16.xpose.msra.mxu0 0
    %2120 = vmatprep.subr.bf16.mxu0 0
    %2121 = vmatpush2.bf16.xpose.msra.mxu0 0
    %2122 = vmatprep.subr.bf16.mxu0 0
    %2123 = vmatpush2.bf16.xpose.msra.mxu0 0
    %2124 = vmatprep.mubr.bf16.mxu0 0
    %2125 = vmatmul.mubr.bf16.gmra.mxu0 %v2087
    %v2126 = vpop.f32.mrf.mxu0
    %v2127 = vadd.f32 0.0, %v2126
    %v2128 = vpop.f32.mrf.mxu0
    %v2129 = vpop.f32.mrf.mxu0
    %v2130 = vadd.f32 0.0, %v2129
    %v2131 = vpop.f32.mrf.mxu0
    %2132 = vdwg.mxu0
    %2133 = vst.msk [vmem:[#allocation3] sm:$0xff] %vm280, %v2127
    %2134 = vst.msk [vmem:[#allocation3 + $0x8] sm:$0xff] %vm280, %v2130
    %v2135 = vld [vmem:[#allocation2] sm:$0xf]
    %v2136 = vld [vmem:[#allocation2 + $0x4] sm:$0xf]
    %v2139 = vunpack.c.l.b16 %v2135
    %v2140 = vunpack.c.l.b16 %v2136
    %v2141 = vpack.c.b16 %v2140, %v2139
    %2142 = vrot.lane.b32.xlu0 %v2141, 120
    %v2143 = vpop.permute.xlu0 %2142
    %2144 = vrot.lane.b32.xlu0 %v2141, 88
    %v2145 = vpop.permute.xlu0 %2144
    %v2147 = vsel %vm232, %v2143, 0
    %v2150 = vsel %vm232, %v2145, 0
    %2152 = vmatprep.subr.bf16.mxu0 0
    %2153 = vmatpush1.bf16.xpose.msra.mxu0 0
    %2154 = vmatprep.subr.bf16.mxu0 0
    %2155 = vmatpush1.bf16.xpose.msra.mxu0 0
    %2156 = vmatprep.subr.bf16.mxu0 0
    %2157 = vmatpush1.bf16.xpose.msra.mxu0 0
    %2158 = vmatprep.subr.bf16.mxu0 0
    %2159 = vmatpush1.bf16.xpose.msra.mxu0 0
    %2160 = vmatprep.subr.bf16.mxu0 0
    %2161 = vmatpush1.bf16.xpose.msra.mxu0 0
    %2162 = vmatprep.subr.bf16.mxu0 0
    %2163 = vmatpush1.bf16.xpose.msra.mxu0 0
    %2164 = vmatprep.subr.bf16.mxu0 0
    %2165 = vmatpush1.bf16.xpose.msra.mxu0 0
    %2166 = vmatprep.subr.bf16.mxu0 0
    %2167 = vmatpush1.bf16.xpose.msra.mxu0 %v2150
    %2168 = vmatprep.subr.bf16.mxu0 0
    %2169 = vmatpush2.bf16.xpose.msra.mxu0 0
    %2170 = vmatprep.subr.bf16.mxu0 0
    %2171 = vmatpush2.bf16.xpose.msra.mxu0 0
    %2172 = vmatprep.subr.bf16.mxu0 0
    %2173 = vmatpush2.bf16.xpose.msra.mxu0 0
    %2174 = vmatprep.subr.bf16.mxu0 0
    %2175 = vmatpush2.bf16.xpose.msra.mxu0 0
    %2176 = vmatprep.subr.bf16.mxu0 0
    %2177 = vmatpush2.bf16.xpose.msra.mxu0 0
    %2178 = vmatprep.subr.bf16.mxu0 0
    %2179 = vmatpush2.bf16.xpose.msra.mxu0 0
    %2180 = vmatprep.subr.bf16.mxu0 0
    %2181 = vmatpush2.bf16.xpose.msra.mxu0 0
    %2182 = vmatprep.subr.bf16.mxu0 0
    %2183 = vmatpush2.bf16.xpose.msra.mxu0 0
    %2184 = vmatprep.mubr.bf16.mxu0 0
    %2185 = vmatmul.mubr.bf16.gmra.mxu0 %v2147
    %v2186 = vpop.f32.mrf.mxu0
    %v2187 = vadd.f32 0.0, %v2186
    %v2188 = vpop.f32.mrf.mxu0
    %v2189 = vpop.f32.mrf.mxu0
    %v2190 = vadd.f32 0.0, %v2189
    %v2191 = vpop.f32.mrf.mxu0
    %2192 = vdwg.mxu0
    %2193 = vst.msk [vmem:[#allocation3 + $0x10] sm:$0xff] %vm280, %v2187
    %2194 = vst.msk [vmem:[#allocation3 + $0x18] sm:$0xff] %vm280, %v2190
    %v2195 = vld [vmem:[#allocation2] sm:$0xf]
    %v2196 = vld [vmem:[#allocation2 + $0x4] sm:$0xf]
    %v2199 = vunpack.c.l.b16 %v2195
    %v2200 = vunpack.c.l.b16 %v2196
    %v2201 = vpack.c.b16 %v2200, %v2199
    %2202 = vrot.lane.b32.xlu0 %v2201, 112
    %v2203 = vpop.permute.xlu0 %2202
    %2204 = vrot.lane.b32.xlu0 %v2201, 80
    %v2205 = vpop.permute.xlu0 %2204
    %v2207 = vsel %vm232, %v2203, 0
    %v2210 = vsel %vm232, %v2205, 0
    %2212 = vmatprep.subr.bf16.mxu0 0
    %2213 = vmatpush1.bf16.xpose.msra.mxu0 0
    %2214 = vmatprep.subr.bf16.mxu0 0
    %2215 = vmatpush1.bf16.xpose.msra.mxu0 0
    %2216 = vmatprep.subr.bf16.mxu0 0
    %2217 = vmatpush1.bf16.xpose.msra.mxu0 0
    %2218 = vmatprep.subr.bf16.mxu0 0
    %2219 = vmatpush1.bf16.xpose.msra.mxu0 0
    %2220 = vmatprep.subr.bf16.mxu0 0
    %2221 = vmatpush1.bf16.xpose.msra.mxu0 0
    %2222 = vmatprep.subr.bf16.mxu0 0
    %2223 = vmatpush1.bf16.xpose.msra.mxu0 0
    %2224 = vmatprep.subr.bf16.mxu0 0
    %2225 = vmatpush1.bf16.xpose.msra.mxu0 0
    %2226 = vmatprep.subr.bf16.mxu0 0
    %2227 = vmatpush1.bf16.xpose.msra.mxu0 %v2210
    %2228 = vmatprep.subr.bf16.mxu0 0
    %2229 = vmatpush2.bf16.xpose.msra.mxu0 0
    %2230 = vmatprep.subr.bf16.mxu0 0
    %2231 = vmatpush2.bf16.xpose.msra.mxu0 0
    %2232 = vmatprep.subr.bf16.mxu0 0
    %2233 = vmatpush2.bf16.xpose.msra.mxu0 0
    %2234 = vmatprep.subr.bf16.mxu0 0
    %2235 = vmatpush2.bf16.xpose.msra.mxu0 0
    %2236 = vmatprep.subr.bf16.mxu0 0
    %2237 = vmatpush2.bf16.xpose.msra.mxu0 0
    %2238 = vmatprep.subr.bf16.mxu0 0
    %2239 = vmatpush2.bf16.xpose.msra.mxu0 0
    %2240 = vmatprep.subr.bf16.mxu0 0
    %2241 = vmatpush2.bf16.xpose.msra.mxu0 0
    %2242 = vmatprep.subr.bf16.mxu0 0
    %2243 = vmatpush2.bf16.xpose.msra.mxu0 0
    %2244 = vmatprep.mubr.bf16.mxu0 0
    %2245 = vmatmul.mubr.bf16.gmra.mxu0 %v2207
    %v2246 = vpop.f32.mrf.mxu0
    %v2247 = vadd.f32 0.0, %v2246
    %v2248 = vpop.f32.mrf.mxu0
    %v2249 = vpop.f32.mrf.mxu0
    %v2250 = vadd.f32 0.0, %v2249
    %v2251 = vpop.f32.mrf.mxu0
    %2252 = vdwg.mxu0
    %2253 = vst.msk [vmem:[#allocation3 + $0x20] sm:$0xff] %vm280, %v2247
    %2254 = vst.msk [vmem:[#allocation3 + $0x28] sm:$0xff] %vm280, %v2250
    %v2255 = vld [vmem:[#allocation2] sm:$0xf]
    %v2256 = vld [vmem:[#allocation2 + $0x4] sm:$0xf]
    %v2259 = vunpack.c.l.b16 %v2255
    %v2260 = vunpack.c.l.b16 %v2256
    %v2261 = vpack.c.b16 %v2260, %v2259
    %2262 = vrot.lane.b32.xlu0 %v2261, 104
    %v2263 = vpop.permute.xlu0 %2262
    %2264 = vrot.lane.b32.xlu0 %v2261, 72
    %v2265 = vpop.permute.xlu0 %2264
    %v2267 = vsel %vm232, %v2263, 0
    %v2270 = vsel %vm232, %v2265, 0
    %2272 = vmatprep.subr.bf16.mxu0 0
    %2273 = vmatpush1.bf16.xpose.msra.mxu0 0
    %2274 = vmatprep.subr.bf16.mxu0 0
    %2275 = vmatpush1.bf16.xpose.msra.mxu0 0
    %2276 = vmatprep.subr.bf16.mxu0 0
    %2277 = vmatpush1.bf16.xpose.msra.mxu0 0
    %2278 = vmatprep.subr.bf16.mxu0 0
    %2279 = vmatpush1.bf16.xpose.msra.mxu0 0
    %2280 = vmatprep.subr.bf16.mxu0 0
    %2281 = vmatpush1.bf16.xpose.msra.mxu0 0
    %2282 = vmatprep.subr.bf16.mxu0 0
    %2283 = vmatpush1.bf16.xpose.msra.mxu0 0
    %2284 = vmatprep.subr.bf16.mxu0 0
    %2285 = vmatpush1.bf16.xpose.msra.mxu0 0
    %2286 = vmatprep.subr.bf16.mxu0 0
    %2287 = vmatpush1.bf16.xpose.msra.mxu0 %v2270
    %2288 = vmatprep.subr.bf16.mxu0 0
    %2289 = vmatpush2.bf16.xpose.msra.mxu0 0
    %2290 = vmatprep.subr.bf16.mxu0 0
    %2291 = vmatpush2.bf16.xpose.msra.mxu0 0
    %2292 = vmatprep.subr.bf16.mxu0 0
    %2293 = vmatpush2.bf16.xpose.msra.mxu0 0
    %2294 = vmatprep.subr.bf16.mxu0 0
    %2295 = vmatpush2.bf16.xpose.msra.mxu0 0
    %2296 = vmatprep.subr.bf16.mxu0 0
    %2297 = vmatpush2.bf16.xpose.msra.mxu0 0
    %2298 = vmatprep.subr.bf16.mxu0 0
    %2299 = vmatpush2.bf16.xpose.msra.mxu0 0
    %2300 = vmatprep.subr.bf16.mxu0 0
    %2301 = vmatpush2.bf16.xpose.msra.mxu0 0
    %2302 = vmatprep.subr.bf16.mxu0 0
    %2303 = vmatpush2.bf16.xpose.msra.mxu0 0
    %2304 = vmatprep.mubr.bf16.mxu0 0
    %2305 = vmatmul.mubr.bf16.gmra.mxu0 %v2267
    %v2306 = vpop.f32.mrf.mxu0
    %v2307 = vadd.f32 0.0, %v2306
    %v2308 = vpop.f32.mrf.mxu0
    %v2309 = vpop.f32.mrf.mxu0
    %v2310 = vadd.f32 0.0, %v2309
    %v2311 = vpop.f32.mrf.mxu0
    %2312 = vdwg.mxu0
    %2313 = vst.msk [vmem:[#allocation3 + $0x30] sm:$0xff] %vm280, %v2307
    %2314 = vst.msk [vmem:[#allocation3 + $0x38] sm:$0xff] %vm280, %v2310
    %v2315 = vld [vmem:[#allocation3] sm:$0xff]
    %v2316 = vld [vmem:[#allocation3 + $0x8] sm:$0xff]
    %v2317 = vld [vmem:[#allocation3 + $0x10] sm:$0xff]
    %v2318 = vld [vmem:[#allocation3 + $0x18] sm:$0xff]
    %v2319 = vld [vmem:[#allocation3 + $0x20] sm:$0xff]
    %v2320 = vld [vmem:[#allocation3 + $0x28] sm:$0xff]
    %v2321 = vld [vmem:[#allocation3 + $0x30] sm:$0xff]
    %v2322 = vld [vmem:[#allocation3 + $0x38] sm:$0xff]
    %v2323 = vmul.f32 %v2315, 0.35355338
    %v2324 = vmul.f32 %v2316, 0.35355338
    %v2325 = vmul.f32 %v2317, 0.35355338
    %v2326 = vmul.f32 %v2318, 0.35355338
    %v2327 = vmul.f32 %v2319, 0.35355338
    %v2328 = vmul.f32 %v2320, 0.35355338
    %v2329 = vmul.f32 %v2321, 0.35355338
    %v2330 = vmul.f32 %v2322, 0.35355338
    %v2331 = vld [vmem:[%s2] sm:$0xff]
    %v2332 = vld [vmem:[%s2 + $0x8] sm:$0xff]
    %v2333 = vld [vmem:[%s2 + $0x10] sm:$0xff]
    %v2334 = vld [vmem:[%s2 + $0x18] sm:$0xff]
    %v2335 = vld [vmem:[%s2 + $0x20] sm:$0xff]
    %v2336 = vld [vmem:[%s2 + $0x28] sm:$0xff]
    %v2337 = vld [vmem:[%s2 + $0x30] sm:$0xff]
    %v2338 = vld [vmem:[%s2 + $0x38] sm:$0xff]
    %v2339 = vadd.f32 %v2323, %v2331
    %v2340 = vadd.f32 %v2324, %v2332
    %v2341 = vadd.f32 %v2325, %v2333
    %v2342 = vadd.f32 %v2326, %v2334
    %v2343 = vadd.f32 %v2327, %v2335
    %v2344 = vadd.f32 %v2328, %v2336
    %v2345 = vadd.f32 %v2329, %v2337
    %v2346 = vadd.f32 %v2330, %v2338
    %v2347 = vsel %vm280, %v2339, -inf
    %2348 = vmax.xlane.f32.xlu0 %v2347
    %v2349 = vpop.xlane.xlu0 %2348
    %v2350 = vsel %vm280, %v2340, -inf
    %2351 = vmax.xlane.f32.xlu0 %v2350
    %v2352 = vpop.xlane.xlu0 %2351
    %v2353 = vsel %vm280, %v2341, -inf
    %2354 = vmax.xlane.f32.xlu0 %v2353
    %v2355 = vpop.xlane.xlu0 %2354
    %v2356 = vsel %vm280, %v2342, -inf
    %2357 = vmax.xlane.f32.xlu0 %v2356
    %v2358 = vpop.xlane.xlu0 %2357
    %v2359 = vsel %vm280, %v2343, -inf
    %2360 = vmax.xlane.f32.xlu0 %v2359
    %v2361 = vpop.xlane.xlu0 %2360
    %v2362 = vsel %vm280, %v2344, -inf
    %2363 = vmax.xlane.f32.xlu0 %v2362
    %v2364 = vpop.xlane.xlu0 %2363
    %v2365 = vsel %vm280, %v2345, -inf
    %2366 = vmax.xlane.f32.xlu0 %v2365
    %v2367 = vpop.xlane.xlu0 %2366
    %v2368 = vsel %vm280, %v2346, -inf
    %2369 = vmax.xlane.f32.xlu0 %v2368
    %v2370 = vpop.xlane.xlu0 %2369
    %v2371 = vsub.f32 %v2339, %v2349
    %v2372 = vsub.f32 %v2340, %v2352
    %v2373 = vsub.f32 %v2341, %v2355
    %v2374 = vsub.f32 %v2342, %v2358
    %v2375 = vsub.f32 %v2343, %v2361
    %v2376 = vsub.f32 %v2344, %v2364
    %v2377 = vsub.f32 %v2345, %v2367
    %v2378 = vsub.f32 %v2346, %v2370
    %v2379 = vmul.f32 %v2371, 1.442695
    %v2380 = vpow.pop %v2379
    %v2381 = vmul.f32 %v2372, 1.442695
    %v2382 = vpow.pop %v2381
    %v2383 = vmul.f32 %v2373, 1.442695
    %v2384 = vpow.pop %v2383
    %v2385 = vmul.f32 %v2374, 1.442695
    %v2386 = vpow.pop %v2385
    %v2387 = vmul.f32 %v2375, 1.442695
    %v2388 = vpow.pop %v2387
    %v2389 = vmul.f32 %v2376, 1.442695
    %v2390 = vpow.pop %v2389
    %v2391 = vmul.f32 %v2377, 1.442695
    %v2392 = vpow.pop %v2391
    %v2393 = vmul.f32 %v2378, 1.442695
    %v2394 = vpow.pop %v2393
    %v2395 = vsel %vm280, %v2380, 0.0
    %2396 = vadd.xlane.f32.xlu0 %v2395
    %v2397 = vpop.xlane.xlu0 %2396
    %v2398 = vsel %vm280, %v2382, 0.0
    %2399 = vadd.xlane.f32.xlu0 %v2398
    %v2400 = vpop.xlane.xlu0 %2399
    %v2401 = vsel %vm280, %v2384, 0.0
    %2402 = vadd.xlane.f32.xlu0 %v2401
    %v2403 = vpop.xlane.xlu0 %2402
    %v2404 = vsel %vm280, %v2386, 0.0
    %2405 = vadd.xlane.f32.xlu0 %v2404
    %v2406 = vpop.xlane.xlu0 %2405
    %v2407 = vsel %vm280, %v2388, 0.0
    %2408 = vadd.xlane.f32.xlu0 %v2407
    %v2409 = vpop.xlane.xlu0 %2408
    %v2410 = vsel %vm280, %v2390, 0.0
    %2411 = vadd.xlane.f32.xlu0 %v2410
    %v2412 = vpop.xlane.xlu0 %2411
    %v2413 = vsel %vm280, %v2392, 0.0
    %2414 = vadd.xlane.f32.xlu0 %v2413
    %v2415 = vpop.xlane.xlu0 %2414
    %v2416 = vsel %vm280, %v2394, 0.0
    %2417 = vadd.xlane.f32.xlu0 %v2416
    %v2418 = vpop.xlane.xlu0 %2417
    %v2419 = vrcp.pop %v2397
    %v2420 = vrcp.pop %v2400
    %v2421 = vrcp.pop %v2403
    %v2422 = vrcp.pop %v2406
    %v2423 = vrcp.pop %v2409
    %v2424 = vrcp.pop %v2412
    %v2425 = vrcp.pop %v2415
    %v2426 = vrcp.pop %v2418
    %v2427 = vmul.f32 %v2380, %v2419
    %v2428 = vmul.f32 %v2382, %v2420
    %v2429 = vmul.f32 %v2384, %v2421
    %v2430 = vmul.f32 %v2386, %v2422
    %v2431 = vmul.f32 %v2388, %v2423
    %v2432 = vmul.f32 %v2390, %v2424
    %v2433 = vmul.f32 %v2392, %v2425
    %v2434 = vmul.f32 %v2394, %v2426
    %v2435 = vpack.c.bf16 %v2428, %v2427
    %v2436 = vpack.c.bf16 %v2430, %v2429
    %v2437 = vpack.c.bf16 %v2432, %v2431
    %v2438 = vpack.c.bf16 %v2434, %v2433
    %v2443 = vunpack.c.l.b16 %v2435
    %v2444 = vunpack.c.h.b16 %v2435
    %v2445 = vunpack.c.l.b16 %v2436
    %v2446 = vunpack.c.h.b16 %v2436
    %v2447 = vunpack.c.l.b16 %v2437
    %v2448 = vunpack.c.h.b16 %v2437
    %v2449 = vunpack.c.l.b16 %v2438
    %v2450 = vunpack.c.h.b16 %v2438
    %v2451 = vpack.c.b16 %v2443, %v2443
    %v2452 = vpack.c.b16 %v2444, %v2444
    %v2453 = vpack.c.b16 %v2445, %v2445
    %v2454 = vpack.c.b16 %v2446, %v2446
    %v2455 = vpack.c.b16 %v2447, %v2447
    %v2456 = vpack.c.b16 %v2448, %v2448
    %v2457 = vpack.c.b16 %v2449, %v2449
    %v2458 = vpack.c.b16 %v2450, %v2450
    %2467 = vst.msk [vmem:[#allocation4] sm:$0xf] %vm615, %v2451
    %2468 = vst.msk [vmem:[#allocation4 + $0x4] sm:$0xf] %vm615, %v2452
    %2469 = vst.msk [vmem:[#allocation4 + $0x8] sm:$0xf] %vm615, %v2453
    %2470 = vst.msk [vmem:[#allocation4 + $0xc] sm:$0xf] %vm615, %v2454
    %2471 = vst.msk [vmem:[#allocation4 + $0x10] sm:$0xf] %vm615, %v2455
    %2472 = vst.msk [vmem:[#allocation4 + $0x14] sm:$0xf] %vm615, %v2456
    %2473 = vst.msk [vmem:[#allocation4 + $0x18] sm:$0xf] %vm615, %v2457
    %2474 = vst.msk [vmem:[#allocation4 + $0x1c] sm:$0xf] %vm615, %v2458
    %v2475 = vld [vmem:[#allocation2] sm:$0xf]
    %v2476 = vld [vmem:[#allocation2 + $0x4] sm:$0xf]
    %v2477 = vld [vmem:[#allocation4] sm:$0xf]
    %v2478 = vld [vmem:[#allocation4 + $0x4] sm:$0xf]
    %v2481 = vunpack.c.l.b16 %v2477
    %v2482 = vunpack.c.l.b16 %v2478
    %v2483 = vpack.c.b16 %v2482, %v2481
    %v2486 = vunpack.c.l.b16 %v2475
    %v2487 = vunpack.c.l.b16 %v2476
    %v2488 = vpack.c.b16 %v2487, %v2486
    %2489 = vrot.lane.b32.xlu0 %v2488, 64
    %v2490 = vpop.permute.xlu0 %2489
    %v2493 = vsel %vm280, %v2483, 0
    %2495 = vmatprep.subr.bf16.mxu0 0
    %2496 = vmatpush1.bf16.msra.mxu0 0
    %2497 = vmatprep.subr.bf16.mxu0 0
    %2498 = vmatpush1.bf16.msra.mxu0 0
    %2499 = vmatprep.subr.bf16.mxu0 0
    %2500 = vmatpush1.bf16.msra.mxu0 0
    %2501 = vmatprep.subr.bf16.mxu0 0
    %2502 = vmatpush1.bf16.msra.mxu0 0
    %2503 = vmatprep.subr.bf16.mxu0 0
    %2504 = vmatpush1.bf16.msra.mxu0 0
    %2505 = vmatprep.subr.bf16.mxu0 0
    %2506 = vmatpush1.bf16.msra.mxu0 0
    %2507 = vmatprep.subr.bf16.mxu0 0
    %2508 = vmatpush1.bf16.msra.mxu0 0
    %2509 = vmatprep.subr.bf16.mxu0 0
    %2510 = vmatpush1.bf16.msra.mxu0 %v2490
    %2511 = vmatprep.subr.bf16.mxu0 0
    %2512 = vmatpush2.bf16.msra.mxu0 0
    %2513 = vmatprep.subr.bf16.mxu0 0
    %2514 = vmatpush2.bf16.msra.mxu0 0
    %2515 = vmatprep.subr.bf16.mxu0 0
    %2516 = vmatpush2.bf16.msra.mxu0 0
    %2517 = vmatprep.subr.bf16.mxu0 0
    %2518 = vmatpush2.bf16.msra.mxu0 0
    %2519 = vmatprep.subr.bf16.mxu0 0
    %2520 = vmatpush2.bf16.msra.mxu0 0
    %2521 = vmatprep.subr.bf16.mxu0 0
    %2522 = vmatpush2.bf16.msra.mxu0 0
    %2523 = vmatprep.subr.bf16.mxu0 0
    %2524 = vmatpush2.bf16.msra.mxu0 0
    %2525 = vmatprep.subr.bf16.mxu0 0
    %2526 = vmatpush2.bf16.msra.mxu0 0
    %2527 = vmatprep.mubr.bf16.mxu0 0
    %2528 = vmatmul.mubr.bf16.gmra.mxu0 %v2493
    %v2529 = vpop.f32.mrf.mxu0
    %v2530 = vadd.f32 0.0, %v2529
    %v2531 = vpop.f32.mrf.mxu0
    %v2532 = vpop.f32.mrf.mxu0
    %v2533 = vadd.f32 0.0, %v2532
    %v2534 = vpop.f32.mrf.mxu0
    %2535 = vdwg.mxu0
    %v2536 = vpack.c.bf16 %v2533, %v2530
    %v2538 = vunpack.c.l.b16 %v2536
    %v2539 = vunpack.c.h.b16 %v2536
    %v2540 = vpack.c.b16 %v2538, %v2538
    %v2541 = vpack.c.b16 %v2539, %v2539
    %2544 = vst.msk [vmem:[#allocation5] sm:$0xf] %vm693, %v2540
    %2545 = vst.msk [vmem:[#allocation5 + $0x4] sm:$0xf] %vm693, %v2541
    %v2546 = vld [vmem:[#allocation2] sm:$0xf]
    %v2547 = vld [vmem:[#allocation2 + $0x4] sm:$0xf]
    %v2548 = vld [vmem:[#allocation4 + $0x8] sm:$0xf]
    %v2549 = vld [vmem:[#allocation4 + $0xc] sm:$0xf]
    %v2552 = vunpack.c.l.b16 %v2548
    %v2553 = vunpack.c.l.b16 %v2549
    %v2554 = vpack.c.b16 %v2553, %v2552
    %v2557 = vunpack.c.l.b16 %v2546
    %v2558 = vunpack.c.l.b16 %v2547
    %v2559 = vpack.c.b16 %v2558, %v2557
    %2560 = vrot.lane.b32.xlu0 %v2559, 56
    %v2561 = vpop.permute.xlu0 %2560
    %v2564 = vsel %vm280, %v2554, 0
    %2566 = vmatprep.subr.bf16.mxu0 0
    %2567 = vmatpush1.bf16.msra.mxu0 0
    %2568 = vmatprep.subr.bf16.mxu0 0
    %2569 = vmatpush1.bf16.msra.mxu0 0
    %2570 = vmatprep.subr.bf16.mxu0 0
    %2571 = vmatpush1.bf16.msra.mxu0 0
    %2572 = vmatprep.subr.bf16.mxu0 0
    %2573 = vmatpush1.bf16.msra.mxu0 0
    %2574 = vmatprep.subr.bf16.mxu0 0
    %2575 = vmatpush1.bf16.msra.mxu0 0
    %2576 = vmatprep.subr.bf16.mxu0 0
    %2577 = vmatpush1.bf16.msra.mxu0 0
    %2578 = vmatprep.subr.bf16.mxu0 0
    %2579 = vmatpush1.bf16.msra.mxu0 0
    %2580 = vmatprep.subr.bf16.mxu0 0
    %2581 = vmatpush1.bf16.msra.mxu0 %v2561
    %2582 = vmatprep.subr.bf16.mxu0 0
    %2583 = vmatpush2.bf16.msra.mxu0 0
    %2584 = vmatprep.subr.bf16.mxu0 0
    %2585 = vmatpush2.bf16.msra.mxu0 0
    %2586 = vmatprep.subr.bf16.mxu0 0
    %2587 = vmatpush2.bf16.msra.mxu0 0
    %2588 = vmatprep.subr.bf16.mxu0 0
    %2589 = vmatpush2.bf16.msra.mxu0 0
    %2590 = vmatprep.subr.bf16.mxu0 0
    %2591 = vmatpush2.bf16.msra.mxu0 0
    %2592 = vmatprep.subr.bf16.mxu0 0
    %2593 = vmatpush2.bf16.msra.mxu0 0
    %2594 = vmatprep.subr.bf16.mxu0 0
    %2595 = vmatpush2.bf16.msra.mxu0 0
    %2596 = vmatprep.subr.bf16.mxu0 0
    %2597 = vmatpush2.bf16.msra.mxu0 0
    %2598 = vmatprep.mubr.bf16.mxu0 0
    %2599 = vmatmul.mubr.bf16.gmra.mxu0 %v2564
    %v2600 = vpop.f32.mrf.mxu0
    %v2601 = vadd.f32 0.0, %v2600
    %v2602 = vpop.f32.mrf.mxu0
    %v2603 = vpop.f32.mrf.mxu0
    %v2604 = vadd.f32 0.0, %v2603
    %v2605 = vpop.f32.mrf.mxu0
    %2606 = vdwg.mxu0
    %v2607 = vpack.c.bf16 %v2604, %v2601
    %v2609 = vunpack.c.l.b16 %v2607
    %v2610 = vunpack.c.h.b16 %v2607
    %v2611 = vpack.c.b16 %v2609, %v2609
    %v2612 = vpack.c.b16 %v2610, %v2610
    %2613 = vrot.lane.b32.xlu0 %v2611, 8
    %v2614 = vpop.permute.xlu0 %2613
    %2615 = vrot.lane.b32.xlu0 %v2612, 8
    %v2616 = vpop.permute.xlu0 %2615
    %2619 = vst.msk [vmem:[#allocation5] sm:$0xf] %vm769, %v2614
    %2620 = vst.msk [vmem:[#allocation5 + $0x4] sm:$0xf] %vm769, %v2616
    %v2621 = vld [vmem:[#allocation2] sm:$0xf]
    %v2622 = vld [vmem:[#allocation2 + $0x4] sm:$0xf]
    %v2623 = vld [vmem:[#allocation4 + $0x10] sm:$0xf]
    %v2624 = vld [vmem:[#allocation4 + $0x14] sm:$0xf]
    %v2627 = vunpack.c.l.b16 %v2623
    %v2628 = vunpack.c.l.b16 %v2624
    %v2629 = vpack.c.b16 %v2628, %v2627
    %v2632 = vunpack.c.l.b16 %v2621
    %v2633 = vunpack.c.l.b16 %v2622
    %v2634 = vpack.c.b16 %v2633, %v2632
    %2635 = vrot.lane.b32.xlu0 %v2634, 48
    %v2636 = vpop.permute.xlu0 %2635
    %v2639 = vsel %vm280, %v2629, 0
    %2641 = vmatprep.subr.bf16.mxu0 0
    %2642 = vmatpush1.bf16.msra.mxu0 0
    %2643 = vmatprep.subr.bf16.mxu0 0
    %2644 = vmatpush1.bf16.msra.mxu0 0
    %2645 = vmatprep.subr.bf16.mxu0 0
    %2646 = vmatpush1.bf16.msra.mxu0 0
    %2647 = vmatprep.subr.bf16.mxu0 0
    %2648 = vmatpush1.bf16.msra.mxu0 0
    %2649 = vmatprep.subr.bf16.mxu0 0
    %2650 = vmatpush1.bf16.msra.mxu0 0
    %2651 = vmatprep.subr.bf16.mxu0 0
    %2652 = vmatpush1.bf16.msra.mxu0 0
    %2653 = vmatprep.subr.bf16.mxu0 0
    %2654 = vmatpush1.bf16.msra.mxu0 0
    %2655 = vmatprep.subr.bf16.mxu0 0
    %2656 = vmatpush1.bf16.msra.mxu0 %v2636
    %2657 = vmatprep.subr.bf16.mxu0 0
    %2658 = vmatpush2.bf16.msra.mxu0 0
    %2659 = vmatprep.subr.bf16.mxu0 0
    %2660 = vmatpush2.bf16.msra.mxu0 0
    %2661 = vmatprep.subr.bf16.mxu0 0
    %2662 = vmatpush2.bf16.msra.mxu0 0
    %2663 = vmatprep.subr.bf16.mxu0 0
    %2664 = vmatpush2.bf16.msra.mxu0 0
    %2665 = vmatprep.subr.bf16.mxu0 0
    %2666 = vmatpush2.bf16.msra.mxu0 0
    %2667 = vmatprep.subr.bf16.mxu0 0
    %2668 = vmatpush2.bf16.msra.mxu0 0
    %2669 = vmatprep.subr.bf16.mxu0 0
    %2670 = vmatpush2.bf16.msra.mxu0 0
    %2671 = vmatprep.subr.bf16.mxu0 0
    %2672 = vmatpush2.bf16.msra.mxu0 0
    %2673 = vmatprep.mubr.bf16.mxu0 0
    %2674 = vmatmul.mubr.bf16.gmra.mxu0 %v2639
    %v2675 = vpop.f32.mrf.mxu0
    %v2676 = vadd.f32 0.0, %v2675
    %v2677 = vpop.f32.mrf.mxu0
    %v2678 = vpop.f32.mrf.mxu0
    %v2679 = vadd.f32 0.0, %v2678
    %v2680 = vpop.f32.mrf.mxu0
    %2681 = vdwg.mxu0
    %v2682 = vpack.c.bf16 %v2679, %v2676
    %v2684 = vunpack.c.l.b16 %v2682
    %v2685 = vunpack.c.h.b16 %v2682
    %v2686 = vpack.c.b16 %v2684, %v2684
    %v2687 = vpack.c.b16 %v2685, %v2685
    %2688 = vrot.lane.b32.xlu0 %v2686, 16
    %v2689 = vpop.permute.xlu0 %2688
    %2690 = vrot.lane.b32.xlu0 %v2687, 16
    %v2691 = vpop.permute.xlu0 %2690
    %2694 = vst.msk [vmem:[#allocation5] sm:$0xf] %vm845, %v2689
    %2695 = vst.msk [vmem:[#allocation5 + $0x4] sm:$0xf] %vm845, %v2691
    %v2696 = vld [vmem:[#allocation2] sm:$0xf]
    %v2697 = vld [vmem:[#allocation2 + $0x4] sm:$0xf]
    %v2698 = vld [vmem:[#allocation4 + $0x18] sm:$0xf]
    %v2699 = vld [vmem:[#allocation4 + $0x1c] sm:$0xf]
    %v2702 = vunpack.c.l.b16 %v2698
    %v2703 = vunpack.c.l.b16 %v2699
    %v2704 = vpack.c.b16 %v2703, %v2702
    %v2707 = vunpack.c.l.b16 %v2696
    %v2708 = vunpack.c.l.b16 %v2697
    %v2709 = vpack.c.b16 %v2708, %v2707
    %2710 = vrot.lane.b32.xlu0 %v2709, 40
    %v2711 = vpop.permute.xlu0 %2710
    %v2714 = vsel %vm280, %v2704, 0
    %2716 = vmatprep.subr.bf16.mxu0 0
    %2717 = vmatpush1.bf16.msra.mxu0 0
    %2718 = vmatprep.subr.bf16.mxu0 0
    %2719 = vmatpush1.bf16.msra.mxu0 0
    %2720 = vmatprep.subr.bf16.mxu0 0
    %2721 = vmatpush1.bf16.msra.mxu0 0
    %2722 = vmatprep.subr.bf16.mxu0 0
    %2723 = vmatpush1.bf16.msra.mxu0 0
    %2724 = vmatprep.subr.bf16.mxu0 0
    %2725 = vmatpush1.bf16.msra.mxu0 0
    %2726 = vmatprep.subr.bf16.mxu0 0
    %2727 = vmatpush1.bf16.msra.mxu0 0
    %2728 = vmatprep.subr.bf16.mxu0 0
    %2729 = vmatpush1.bf16.msra.mxu0 0
    %2730 = vmatprep.subr.bf16.mxu0 0
    %2731 = vmatpush1.bf16.msra.mxu0 %v2711
    %2732 = vmatprep.subr.bf16.mxu0 0
    %2733 = vmatpush2.bf16.msra.mxu0 0
    %2734 = vmatprep.subr.bf16.mxu0 0
    %2735 = vmatpush2.bf16.msra.mxu0 0
    %2736 = vmatprep.subr.bf16.mxu0 0
    %2737 = vmatpush2.bf16.msra.mxu0 0
    %2738 = vmatprep.subr.bf16.mxu0 0
    %2739 = vmatpush2.bf16.msra.mxu0 0
    %2740 = vmatprep.subr.bf16.mxu0 0
    %2741 = vmatpush2.bf16.msra.mxu0 0
    %2742 = vmatprep.subr.bf16.mxu0 0
    %2743 = vmatpush2.bf16.msra.mxu0 0
    %2744 = vmatprep.subr.bf16.mxu0 0
    %2745 = vmatpush2.bf16.msra.mxu0 0
    %2746 = vmatprep.subr.bf16.mxu0 0
    %2747 = vmatpush2.bf16.msra.mxu0 0
    %2748 = vmatprep.mubr.bf16.mxu0 0
    %2749 = vmatmul.mubr.bf16.gmra.mxu0 %v2714
    %v2750 = vpop.f32.mrf.mxu0
    %v2751 = vadd.f32 0.0, %v2750
    %v2752 = vpop.f32.mrf.mxu0
    %v2753 = vpop.f32.mrf.mxu0
    %v2754 = vadd.f32 0.0, %v2753
    %v2755 = vpop.f32.mrf.mxu0
    %2756 = vdwg.mxu0
    %v2757 = vpack.c.bf16 %v2754, %v2751
    %v2759 = vunpack.c.l.b16 %v2757
    %v2760 = vunpack.c.h.b16 %v2757
    %v2761 = vpack.c.b16 %v2759, %v2759
    %v2762 = vpack.c.b16 %v2760, %v2760
    %2763 = vrot.lane.b32.xlu0 %v2761, 24
    %v2764 = vpop.permute.xlu0 %2763
    %2765 = vrot.lane.b32.xlu0 %v2762, 24
    %v2766 = vpop.permute.xlu0 %2765
    %2769 = vst.msk [vmem:[#allocation5] sm:$0xf] %vm921, %v2764
    %2770 = vst.msk [vmem:[#allocation5 + $0x4] sm:$0xf] %vm921, %v2766
    %v2771 = vld [vmem:[#allocation2 + $0x8] sm:$0xf]
    %v2772 = vld [vmem:[#allocation2 + $0xc] sm:$0xf]
    %v2775 = vunpack.c.l.b16 %v2771
    %v2776 = vunpack.c.l.b16 %v2772
    %v2777 = vpack.c.b16 %v2776, %v2775
    %2778 = vrot.lane.b32.xlu0 %v2777, 96
    %v2779 = vpop.permute.xlu0 %2778
    %v2781 = vsel %vm232, %v2777, 0
    %v2784 = vsel %vm232, %v2779, 0
    %2786 = vmatprep.subr.bf16.mxu0 0
    %2787 = vmatpush1.bf16.xpose.msra.mxu0 0
    %2788 = vmatprep.subr.bf16.mxu0 0
    %2789 = vmatpush1.bf16.xpose.msra.mxu0 0
    %2790 = vmatprep.subr.bf16.mxu0 0
    %2791 = vmatpush1.bf16.xpose.msra.mxu0 0
    %2792 = vmatprep.subr.bf16.mxu0 0
    %2793 = vmatpush1.bf16.xpose.msra.mxu0 0
    %2794 = vmatprep.subr.bf16.mxu0 0
    %2795 = vmatpush1.bf16.xpose.msra.mxu0 0
    %2796 = vmatprep.subr.bf16.mxu0 0
    %2797 = vmatpush1.bf16.xpose.msra.mxu0 0
    %2798 = vmatprep.subr.bf16.mxu0 0
    %2799 = vmatpush1.bf16.xpose.msra.mxu0 0
    %2800 = vmatprep.subr.bf16.mxu0 0
    %2801 = vmatpush1.bf16.xpose.msra.mxu0 %v2784
    %2802 = vmatprep.subr.bf16.mxu0 0
    %2803 = vmatpush2.bf16.xpose.msra.mxu0 0
    %2804 = vmatprep.subr.bf16.mxu0 0
    %2805 = vmatpush2.bf16.xpose.msra.mxu0 0
    %2806 = vmatprep.subr.bf16.mxu0 0
    %2807 = vmatpush2.bf16.xpose.msra.mxu0 0
    %2808 = vmatprep.subr.bf16.mxu0 0
    %2809 = vmatpush2.bf16.xpose.msra.mxu0 0
    %2810 = vmatprep.subr.bf16.mxu0 0
    %2811 = vmatpush2.bf16.xpose.msra.mxu0 0
    %2812 = vmatprep.subr.bf16.mxu0 0
    %2813 = vmatpush2.bf16.xpose.msra.mxu0 0
    %2814 = vmatprep.subr.bf16.mxu0 0
    %2815 = vmatpush2.bf16.xpose.msra.mxu0 0
    %2816 = vmatprep.subr.bf16.mxu0 0
    %2817 = vmatpush2.bf16.xpose.msra.mxu0 0
    %2818 = vmatprep.mubr.bf16.mxu0 0
    %2819 = vmatmul.mubr.bf16.gmra.mxu0 %v2781
    %v2820 = vpop.f32.mrf.mxu0
    %v2821 = vadd.f32 0.0, %v2820
    %v2822 = vpop.f32.mrf.mxu0
    %v2823 = vpop.f32.mrf.mxu0
    %v2824 = vadd.f32 0.0, %v2823
    %v2825 = vpop.f32.mrf.mxu0
    %2826 = vdwg.mxu0
    %2827 = vst.msk [vmem:[#allocation3] sm:$0xff] %vm280, %v2821
    %2828 = vst.msk [vmem:[#allocation3 + $0x8] sm:$0xff] %vm280, %v2824
    %v2829 = vld [vmem:[#allocation2 + $0x8] sm:$0xf]
    %v2830 = vld [vmem:[#allocation2 + $0xc] sm:$0xf]
    %v2833 = vunpack.c.l.b16 %v2829
    %v2834 = vunpack.c.l.b16 %v2830
    %v2835 = vpack.c.b16 %v2834, %v2833
    %2836 = vrot.lane.b32.xlu0 %v2835, 120
    %v2837 = vpop.permute.xlu0 %2836
    %2838 = vrot.lane.b32.xlu0 %v2835, 88
    %v2839 = vpop.permute.xlu0 %2838
    %v2841 = vsel %vm232, %v2837, 0
    %v2844 = vsel %vm232, %v2839, 0
    %2846 = vmatprep.subr.bf16.mxu0 0
    %2847 = vmatpush1.bf16.xpose.msra.mxu0 0
    %2848 = vmatprep.subr.bf16.mxu0 0
    %2849 = vmatpush1.bf16.xpose.msra.mxu0 0
    %2850 = vmatprep.subr.bf16.mxu0 0
    %2851 = vmatpush1.bf16.xpose.msra.mxu0 0
    %2852 = vmatprep.subr.bf16.mxu0 0
    %2853 = vmatpush1.bf16.xpose.msra.mxu0 0
    %2854 = vmatprep.subr.bf16.mxu0 0
    %2855 = vmatpush1.bf16.xpose.msra.mxu0 0
    %2856 = vmatprep.subr.bf16.mxu0 0
    %2857 = vmatpush1.bf16.xpose.msra.mxu0 0
    %2858 = vmatprep.subr.bf16.mxu0 0
    %2859 = vmatpush1.bf16.xpose.msra.mxu0 0
    %2860 = vmatprep.subr.bf16.mxu0 0
    %2861 = vmatpush1.bf16.xpose.msra.mxu0 %v2844
    %2862 = vmatprep.subr.bf16.mxu0 0
    %2863 = vmatpush2.bf16.xpose.msra.mxu0 0
    %2864 = vmatprep.subr.bf16.mxu0 0
    %2865 = vmatpush2.bf16.xpose.msra.mxu0 0
    %2866 = vmatprep.subr.bf16.mxu0 0
    %2867 = vmatpush2.bf16.xpose.msra.mxu0 0
    %2868 = vmatprep.subr.bf16.mxu0 0
    %2869 = vmatpush2.bf16.xpose.msra.mxu0 0
    %2870 = vmatprep.subr.bf16.mxu0 0
    %2871 = vmatpush2.bf16.xpose.msra.mxu0 0
    %2872 = vmatprep.subr.bf16.mxu0 0
    %2873 = vmatpush2.bf16.xpose.msra.mxu0 0
    %2874 = vmatprep.subr.bf16.mxu0 0
    %2875 = vmatpush2.bf16.xpose.msra.mxu0 0
    %2876 = vmatprep.subr.bf16.mxu0 0
    %2877 = vmatpush2.bf16.xpose.msra.mxu0 0
    %2878 = vmatprep.mubr.bf16.mxu0 0
    %2879 = vmatmul.mubr.bf16.gmra.mxu0 %v2841
    %v2880 = vpop.f32.mrf.mxu0
    %v2881 = vadd.f32 0.0, %v2880
    %v2882 = vpop.f32.mrf.mxu0
    %v2883 = vpop.f32.mrf.mxu0
    %v2884 = vadd.f32 0.0, %v2883
    %v2885 = vpop.f32.mrf.mxu0
    %2886 = vdwg.mxu0
    %2887 = vst.msk [vmem:[#allocation3 + $0x10] sm:$0xff] %vm280, %v2881
    %2888 = vst.msk [vmem:[#allocation3 + $0x18] sm:$0xff] %vm280, %v2884
    %v2889 = vld [vmem:[#allocation2 + $0x8] sm:$0xf]
    %v2890 = vld [vmem:[#allocation2 + $0xc] sm:$0xf]
    %v2893 = vunpack.c.l.b16 %v2889
    %v2894 = vunpack.c.l.b16 %v2890
    %v2895 = vpack.c.b16 %v2894, %v2893
    %2896 = vrot.lane.b32.xlu0 %v2895, 112
    %v2897 = vpop.permute.xlu0 %2896
    %2898 = vrot.lane.b32.xlu0 %v2895, 80
    %v2899 = vpop.permute.xlu0 %2898
    %v2901 = vsel %vm232, %v2897, 0
    %v2904 = vsel %vm232, %v2899, 0
    %2906 = vmatprep.subr.bf16.mxu0 0
    %2907 = vmatpush1.bf16.xpose.msra.mxu0 0
    %2908 = vmatprep.subr.bf16.mxu0 0
    %2909 = vmatpush1.bf16.xpose.msra.mxu0 0
    %2910 = vmatprep.subr.bf16.mxu0 0
    %2911 = vmatpush1.bf16.xpose.msra.mxu0 0
    %2912 = vmatprep.subr.bf16.mxu0 0
    %2913 = vmatpush1.bf16.xpose.msra.mxu0 0
    %2914 = vmatprep.subr.bf16.mxu0 0
    %2915 = vmatpush1.bf16.xpose.msra.mxu0 0
    %2916 = vmatprep.subr.bf16.mxu0 0
    %2917 = vmatpush1.bf16.xpose.msra.mxu0 0
    %2918 = vmatprep.subr.bf16.mxu0 0
    %2919 = vmatpush1.bf16.xpose.msra.mxu0 0
    %2920 = vmatprep.subr.bf16.mxu0 0
    %2921 = vmatpush1.bf16.xpose.msra.mxu0 %v2904
    %2922 = vmatprep.subr.bf16.mxu0 0
    %2923 = vmatpush2.bf16.xpose.msra.mxu0 0
    %2924 = vmatprep.subr.bf16.mxu0 0
    %2925 = vmatpush2.bf16.xpose.msra.mxu0 0
    %2926 = vmatprep.subr.bf16.mxu0 0
    %2927 = vmatpush2.bf16.xpose.msra.mxu0 0
    %2928 = vmatprep.subr.bf16.mxu0 0
    %2929 = vmatpush2.bf16.xpose.msra.mxu0 0
    %2930 = vmatprep.subr.bf16.mxu0 0
    %2931 = vmatpush2.bf16.xpose.msra.mxu0 0
    %2932 = vmatprep.subr.bf16.mxu0 0
    %2933 = vmatpush2.bf16.xpose.msra.mxu0 0
    %2934 = vmatprep.subr.bf16.mxu0 0
    %2935 = vmatpush2.bf16.xpose.msra.mxu0 0
    %2936 = vmatprep.subr.bf16.mxu0 0
    %2937 = vmatpush2.bf16.xpose.msra.mxu0 0
    %2938 = vmatprep.mubr.bf16.mxu0 0
    %2939 = vmatmul.mubr.bf16.gmra.mxu0 %v2901
    %v2940 = vpop.f32.mrf.mxu0
    %v2941 = vadd.f32 0.0, %v2940
    %v2942 = vpop.f32.mrf.mxu0
    %v2943 = vpop.f32.mrf.mxu0
    %v2944 = vadd.f32 0.0, %v2943
    %v2945 = vpop.f32.mrf.mxu0
    %2946 = vdwg.mxu0
    %2947 = vst.msk [vmem:[#allocation3 + $0x20] sm:$0xff] %vm280, %v2941
    %2948 = vst.msk [vmem:[#allocation3 + $0x28] sm:$0xff] %vm280, %v2944
    %v2949 = vld [vmem:[#allocation2 + $0x8] sm:$0xf]
    %v2950 = vld [vmem:[#allocation2 + $0xc] sm:$0xf]
    %v2953 = vunpack.c.l.b16 %v2949
    %v2954 = vunpack.c.l.b16 %v2950
    %v2955 = vpack.c.b16 %v2954, %v2953
    %2956 = vrot.lane.b32.xlu0 %v2955, 104
    %v2957 = vpop.permute.xlu0 %2956
    %2958 = vrot.lane.b32.xlu0 %v2955, 72
    %v2959 = vpop.permute.xlu0 %2958
    %v2961 = vsel %vm232, %v2957, 0
    %v2964 = vsel %vm232, %v2959, 0
    %2966 = vmatprep.subr.bf16.mxu0 0
    %2967 = vmatpush1.bf16.xpose.msra.mxu0 0
    %2968 = vmatprep.subr.bf16.mxu0 0
    %2969 = vmatpush1.bf16.xpose.msra.mxu0 0
    %2970 = vmatprep.subr.bf16.mxu0 0
    %2971 = vmatpush1.bf16.xpose.msra.mxu0 0
    %2972 = vmatprep.subr.bf16.mxu0 0
    %2973 = vmatpush1.bf16.xpose.msra.mxu0 0
    %2974 = vmatprep.subr.bf16.mxu0 0
    %2975 = vmatpush1.bf16.xpose.msra.mxu0 0
    %2976 = vmatprep.subr.bf16.mxu0 0
    %2977 = vmatpush1.bf16.xpose.msra.mxu0 0
    %2978 = vmatprep.subr.bf16.mxu0 0
    %2979 = vmatpush1.bf16.xpose.msra.mxu0 0
    %2980 = vmatprep.subr.bf16.mxu0 0
    %2981 = vmatpush1.bf16.xpose.msra.mxu0 %v2964
    %2982 = vmatprep.subr.bf16.mxu0 0
    %2983 = vmatpush2.bf16.xpose.msra.mxu0 0
    %2984 = vmatprep.subr.bf16.mxu0 0
    %2985 = vmatpush2.bf16.xpose.msra.mxu0 0
    %2986 = vmatprep.subr.bf16.mxu0 0
    %2987 = vmatpush2.bf16.xpose.msra.mxu0 0
    %2988 = vmatprep.subr.bf16.mxu0 0
    %2989 = vmatpush2.bf16.xpose.msra.mxu0 0
    %2990 = vmatprep.subr.bf16.mxu0 0
    %2991 = vmatpush2.bf16.xpose.msra.mxu0 0
    %2992 = vmatprep.subr.bf16.mxu0 0
    %2993 = vmatpush2.bf16.xpose.msra.mxu0 0
    %2994 = vmatprep.subr.bf16.mxu0 0
    %2995 = vmatpush2.bf16.xpose.msra.mxu0 0
    %2996 = vmatprep.subr.bf16.mxu0 0
    %2997 = vmatpush2.bf16.xpose.msra.mxu0 0
    %2998 = vmatprep.mubr.bf16.mxu0 0
    %2999 = vmatmul.mubr.bf16.gmra.mxu0 %v2961
    %v3000 = vpop.f32.mrf.mxu0
    %v3001 = vadd.f32 0.0, %v3000
    %v3002 = vpop.f32.mrf.mxu0
    %v3003 = vpop.f32.mrf.mxu0
    %v3004 = vadd.f32 0.0, %v3003
    %v3005 = vpop.f32.mrf.mxu0
    %3006 = vdwg.mxu0
    %3007 = vst.msk [vmem:[#allocation3 + $0x30] sm:$0xff] %vm280, %v3001
    %3008 = vst.msk [vmem:[#allocation3 + $0x38] sm:$0xff] %vm280, %v3004
    %v3009 = vld [vmem:[#allocation3] sm:$0xff]
    %v3010 = vld [vmem:[#allocation3 + $0x8] sm:$0xff]
    %v3011 = vld [vmem:[#allocation3 + $0x10] sm:$0xff]
    %v3012 = vld [vmem:[#allocation3 + $0x18] sm:$0xff]
    %v3013 = vld [vmem:[#allocation3 + $0x20] sm:$0xff]
    %v3014 = vld [vmem:[#allocation3 + $0x28] sm:$0xff]
    %v3015 = vld [vmem:[#allocation3 + $0x30] sm:$0xff]
    %v3016 = vld [vmem:[#allocation3 + $0x38] sm:$0xff]
    %v3017 = vmul.f32 %v3009, 0.35355338
    %v3018 = vmul.f32 %v3010, 0.35355338
    %v3019 = vmul.f32 %v3011, 0.35355338
    %v3020 = vmul.f32 %v3012, 0.35355338
    %v3021 = vmul.f32 %v3013, 0.35355338
    %v3022 = vmul.f32 %v3014, 0.35355338
    %v3023 = vmul.f32 %v3015, 0.35355338
    %v3024 = vmul.f32 %v3016, 0.35355338
    %v3025 = vld [vmem:[%s2] sm:$0xff]
    %v3026 = vld [vmem:[%s2 + $0x8] sm:$0xff]
    %v3027 = vld [vmem:[%s2 + $0x10] sm:$0xff]
    %v3028 = vld [vmem:[%s2 + $0x18] sm:$0xff]
    %v3029 = vld [vmem:[%s2 + $0x20] sm:$0xff]
    %v3030 = vld [vmem:[%s2 + $0x28] sm:$0xff]
    %v3031 = vld [vmem:[%s2 + $0x30] sm:$0xff]
    %v3032 = vld [vmem:[%s2 + $0x38] sm:$0xff]
    %v3033 = vadd.f32 %v3017, %v3025
    %v3034 = vadd.f32 %v3018, %v3026
    %v3035 = vadd.f32 %v3019, %v3027
    %v3036 = vadd.f32 %v3020, %v3028
    %v3037 = vadd.f32 %v3021, %v3029
    %v3038 = vadd.f32 %v3022, %v3030
    %v3039 = vadd.f32 %v3023, %v3031
    %v3040 = vadd.f32 %v3024, %v3032
    %v3041 = vsel %vm280, %v3033, -inf
    %3042 = vmax.xlane.f32.xlu0 %v3041
    %v3043 = vpop.xlane.xlu0 %3042
    %v3044 = vsel %vm280, %v3034, -inf
    %3045 = vmax.xlane.f32.xlu0 %v3044
    %v3046 = vpop.xlane.xlu0 %3045
    %v3047 = vsel %vm280, %v3035, -inf
    %3048 = vmax.xlane.f32.xlu0 %v3047
    %v3049 = vpop.xlane.xlu0 %3048
    %v3050 = vsel %vm280, %v3036, -inf
    %3051 = vmax.xlane.f32.xlu0 %v3050
    %v3052 = vpop.xlane.xlu0 %3051
    %v3053 = vsel %vm280, %v3037, -inf
    %3054 = vmax.xlane.f32.xlu0 %v3053
    %v3055 = vpop.xlane.xlu0 %3054
    %v3056 = vsel %vm280, %v3038, -inf
    %3057 = vmax.xlane.f32.xlu0 %v3056
    %v3058 = vpop.xlane.xlu0 %3057
    %v3059 = vsel %vm280, %v3039, -inf
    %3060 = vmax.xlane.f32.xlu0 %v3059
    %v3061 = vpop.xlane.xlu0 %3060
    %v3062 = vsel %vm280, %v3040, -inf
    %3063 = vmax.xlane.f32.xlu0 %v3062
    %v3064 = vpop.xlane.xlu0 %3063
    %v3065 = vsub.f32 %v3033, %v3043
    %v3066 = vsub.f32 %v3034, %v3046
    %v3067 = vsub.f32 %v3035, %v3049
    %v3068 = vsub.f32 %v3036, %v3052
    %v3069 = vsub.f32 %v3037, %v3055
    %v3070 = vsub.f32 %v3038, %v3058
    %v3071 = vsub.f32 %v3039, %v3061
    %v3072 = vsub.f32 %v3040, %v3064
    %v3073 = vmul.f32 %v3065, 1.442695
    %v3074 = vpow.pop %v3073
    %v3075 = vmul.f32 %v3066, 1.442695
    %v3076 = vpow.pop %v3075
    %v3077 = vmul.f32 %v3067, 1.442695
    %v3078 = vpow.pop %v3077
    %v3079 = vmul.f32 %v3068, 1.442695
    %v3080 = vpow.pop %v3079
    %v3081 = vmul.f32 %v3069, 1.442695
    %v3082 = vpow.pop %v3081
    %v3083 = vmul.f32 %v3070, 1.442695
    %v3084 = vpow.pop %v3083
    %v3085 = vmul.f32 %v3071, 1.442695
    %v3086 = vpow.pop %v3085
    %v3087 = vmul.f32 %v3072, 1.442695
    %v3088 = vpow.pop %v3087
    %v3089 = vsel %vm280, %v3074, 0.0
    %3090 = vadd.xlane.f32.xlu0 %v3089
    %v3091 = vpop.xlane.xlu0 %3090
    %v3092 = vsel %vm280, %v3076, 0.0
    %3093 = vadd.xlane.f32.xlu0 %v3092
    %v3094 = vpop.xlane.xlu0 %3093
    %v3095 = vsel %vm280, %v3078, 0.0
    %3096 = vadd.xlane.f32.xlu0 %v3095
    %v3097 = vpop.xlane.xlu0 %3096
    %v3098 = vsel %vm280, %v3080, 0.0
    %3099 = vadd.xlane.f32.xlu0 %v3098
    %v3100 = vpop.xlane.xlu0 %3099
    %v3101 = vsel %vm280, %v3082, 0.0
    %3102 = vadd.xlane.f32.xlu0 %v3101
    %v3103 = vpop.xlane.xlu0 %3102
    %v3104 = vsel %vm280, %v3084, 0.0
    %3105 = vadd.xlane.f32.xlu0 %v3104
    %v3106 = vpop.xlane.xlu0 %3105
    %v3107 = vsel %vm280, %v3086, 0.0
    %3108 = vadd.xlane.f32.xlu0 %v3107
    %v3109 = vpop.xlane.xlu0 %3108
    %v3110 = vsel %vm280, %v3088, 0.0
    %3111 = vadd.xlane.f32.xlu0 %v3110
    %v3112 = vpop.xlane.xlu0 %3111
    %v3113 = vrcp.pop %v3091
    %v3114 = vrcp.pop %v3094
    %v3115 = vrcp.pop %v3097
    %v3116 = vrcp.pop %v3100
    %v3117 = vrcp.pop %v3103
    %v3118 = vrcp.pop %v3106
    %v3119 = vrcp.pop %v3109
    %v3120 = vrcp.pop %v3112
    %v3121 = vmul.f32 %v3074, %v3113
    %v3122 = vmul.f32 %v3076, %v3114
    %v3123 = vmul.f32 %v3078, %v3115
    %v3124 = vmul.f32 %v3080, %v3116
    %v3125 = vmul.f32 %v3082, %v3117
    %v3126 = vmul.f32 %v3084, %v3118
    %v3127 = vmul.f32 %v3086, %v3119
    %v3128 = vmul.f32 %v3088, %v3120
    %v3129 = vpack.c.bf16 %v3122, %v3121
    %v3130 = vpack.c.bf16 %v3124, %v3123
    %v3131 = vpack.c.bf16 %v3126, %v3125
    %v3132 = vpack.c.bf16 %v3128, %v3127
    %v3137 = vunpack.c.l.b16 %v3129
    %v3138 = vunpack.c.h.b16 %v3129
    %v3139 = vunpack.c.l.b16 %v3130
    %v3140 = vunpack.c.h.b16 %v3130
    %v3141 = vunpack.c.l.b16 %v3131
    %v3142 = vunpack.c.h.b16 %v3131
    %v3143 = vunpack.c.l.b16 %v3132
    %v3144 = vunpack.c.h.b16 %v3132
    %v3145 = vpack.c.b16 %v3137, %v3137
    %v3146 = vpack.c.b16 %v3138, %v3138
    %v3147 = vpack.c.b16 %v3139, %v3139
    %v3148 = vpack.c.b16 %v3140, %v3140
    %v3149 = vpack.c.b16 %v3141, %v3141
    %v3150 = vpack.c.b16 %v3142, %v3142
    %v3151 = vpack.c.b16 %v3143, %v3143
    %v3152 = vpack.c.b16 %v3144, %v3144
    %3161 = vst.msk [vmem:[#allocation4] sm:$0xf] %vm615, %v3145
    %3162 = vst.msk [vmem:[#allocation4 + $0x4] sm:$0xf] %vm615, %v3146
    %3163 = vst.msk [vmem:[#allocation4 + $0x8] sm:$0xf] %vm615, %v3147
    %3164 = vst.msk [vmem:[#allocation4 + $0xc] sm:$0xf] %vm615, %v3148
    %3165 = vst.msk [vmem:[#allocation4 + $0x10] sm:$0xf] %vm615, %v3149
    %3166 = vst.msk [vmem:[#allocation4 + $0x14] sm:$0xf] %vm615, %v3150
    %3167 = vst.msk [vmem:[#allocation4 + $0x18] sm:$0xf] %vm615, %v3151
    %3168 = vst.msk [vmem:[#allocation4 + $0x1c] sm:$0xf] %vm615, %v3152
    %v3169 = vld [vmem:[#allocation2 + $0x8] sm:$0xf]
    %v3170 = vld [vmem:[#allocation2 + $0xc] sm:$0xf]
    %v3171 = vld [vmem:[#allocation4] sm:$0xf]
    %v3172 = vld [vmem:[#allocation4 + $0x4] sm:$0xf]
    %v3175 = vunpack.c.l.b16 %v3171
    %v3176 = vunpack.c.l.b16 %v3172
    %v3177 = vpack.c.b16 %v3176, %v3175
    %v3180 = vunpack.c.l.b16 %v3169
    %v3181 = vunpack.c.l.b16 %v3170
    %v3182 = vpack.c.b16 %v3181, %v3180
    %3183 = vrot.lane.b32.xlu0 %v3182, 64
    %v3184 = vpop.permute.xlu0 %3183
    %v3187 = vsel %vm280, %v3177, 0
    %3189 = vmatprep.subr.bf16.mxu0 0
    %3190 = vmatpush1.bf16.msra.mxu0 0
    %3191 = vmatprep.subr.bf16.mxu0 0
    %3192 = vmatpush1.bf16.msra.mxu0 0
    %3193 = vmatprep.subr.bf16.mxu0 0
    %3194 = vmatpush1.bf16.msra.mxu0 0
    %3195 = vmatprep.subr.bf16.mxu0 0
    %3196 = vmatpush1.bf16.msra.mxu0 0
    %3197 = vmatprep.subr.bf16.mxu0 0
    %3198 = vmatpush1.bf16.msra.mxu0 0
    %3199 = vmatprep.subr.bf16.mxu0 0
    %3200 = vmatpush1.bf16.msra.mxu0 0
    %3201 = vmatprep.subr.bf16.mxu0 0
    %3202 = vmatpush1.bf16.msra.mxu0 0
    %3203 = vmatprep.subr.bf16.mxu0 0
    %3204 = vmatpush1.bf16.msra.mxu0 %v3184
    %3205 = vmatprep.subr.bf16.mxu0 0
    %3206 = vmatpush2.bf16.msra.mxu0 0
    %3207 = vmatprep.subr.bf16.mxu0 0
    %3208 = vmatpush2.bf16.msra.mxu0 0
    %3209 = vmatprep.subr.bf16.mxu0 0
    %3210 = vmatpush2.bf16.msra.mxu0 0
    %3211 = vmatprep.subr.bf16.mxu0 0
    %3212 = vmatpush2.bf16.msra.mxu0 0
    %3213 = vmatprep.subr.bf16.mxu0 0
    %3214 = vmatpush2.bf16.msra.mxu0 0
    %3215 = vmatprep.subr.bf16.mxu0 0
    %3216 = vmatpush2.bf16.msra.mxu0 0
    %3217 = vmatprep.subr.bf16.mxu0 0
    %3218 = vmatpush2.bf16.msra.mxu0 0
    %3219 = vmatprep.subr.bf16.mxu0 0
    %3220 = vmatpush2.bf16.msra.mxu0 0
    %3221 = vmatprep.mubr.bf16.mxu0 0
    %3222 = vmatmul.mubr.bf16.gmra.mxu0 %v3187
    %v3223 = vpop.f32.mrf.mxu0
    %v3224 = vadd.f32 0.0, %v3223
    %v3225 = vpop.f32.mrf.mxu0
    %v3226 = vpop.f32.mrf.mxu0
    %v3227 = vadd.f32 0.0, %v3226
    %v3228 = vpop.f32.mrf.mxu0
    %3229 = vdwg.mxu0
    %v3230 = vpack.c.bf16 %v3227, %v3224
    %v3232 = vunpack.c.l.b16 %v3230
    %v3233 = vunpack.c.h.b16 %v3230
    %v3234 = vpack.c.b16 %v3232, %v3232
    %v3235 = vpack.c.b16 %v3233, %v3233
    %3238 = vst.msk [vmem:[#allocation5 + $0x8] sm:$0xf] %vm693, %v3234
    %3239 = vst.msk [vmem:[#allocation5 + $0xc] sm:$0xf] %vm693, %v3235
    %v3240 = vld [vmem:[#allocation2 + $0x8] sm:$0xf]
    %v3241 = vld [vmem:[#allocation2 + $0xc] sm:$0xf]
    %v3242 = vld [vmem:[#allocation4 + $0x8] sm:$0xf]
    %v3243 = vld [vmem:[#allocation4 + $0xc] sm:$0xf]
    %v3246 = vunpack.c.l.b16 %v3242
    %v3247 = vunpack.c.l.b16 %v3243
    %v3248 = vpack.c.b16 %v3247, %v3246
    %v3251 = vunpack.c.l.b16 %v3240
    %v3252 = vunpack.c.l.b16 %v3241
    %v3253 = vpack.c.b16 %v3252, %v3251
    %3254 = vrot.lane.b32.xlu0 %v3253, 56
    %v3255 = vpop.permute.xlu0 %3254
    %v3258 = vsel %vm280, %v3248, 0
    %3260 = vmatprep.subr.bf16.mxu0 0
    %3261 = vmatpush1.bf16.msra.mxu0 0
    %3262 = vmatprep.subr.bf16.mxu0 0
    %3263 = vmatpush1.bf16.msra.mxu0 0
    %3264 = vmatprep.subr.bf16.mxu0 0
    %3265 = vmatpush1.bf16.msra.mxu0 0
    %3266 = vmatprep.subr.bf16.mxu0 0
    %3267 = vmatpush1.bf16.msra.mxu0 0
    %3268 = vmatprep.subr.bf16.mxu0 0
    %3269 = vmatpush1.bf16.msra.mxu0 0
    %3270 = vmatprep.subr.bf16.mxu0 0
    %3271 = vmatpush1.bf16.msra.mxu0 0
    %3272 = vmatprep.subr.bf16.mxu0 0
    %3273 = vmatpush1.bf16.msra.mxu0 0
    %3274 = vmatprep.subr.bf16.mxu0 0
    %3275 = vmatpush1.bf16.msra.mxu0 %v3255
    %3276 = vmatprep.subr.bf16.mxu0 0
    %3277 = vmatpush2.bf16.msra.mxu0 0
    %3278 = vmatprep.subr.bf16.mxu0 0
    %3279 = vmatpush2.bf16.msra.mxu0 0
    %3280 = vmatprep.subr.bf16.mxu0 0
    %3281 = vmatpush2.bf16.msra.mxu0 0
    %3282 = vmatprep.subr.bf16.mxu0 0
    %3283 = vmatpush2.bf16.msra.mxu0 0
    %3284 = vmatprep.subr.bf16.mxu0 0
    %3285 = vmatpush2.bf16.msra.mxu0 0
    %3286 = vmatprep.subr.bf16.mxu0 0
    %3287 = vmatpush2.bf16.msra.mxu0 0
    %3288 = vmatprep.subr.bf16.mxu0 0
    %3289 = vmatpush2.bf16.msra.mxu0 0
    %3290 = vmatprep.subr.bf16.mxu0 0
    %3291 = vmatpush2.bf16.msra.mxu0 0
    %3292 = vmatprep.mubr.bf16.mxu0 0
    %3293 = vmatmul.mubr.bf16.gmra.mxu0 %v3258
    %v3294 = vpop.f32.mrf.mxu0
    %v3295 = vadd.f32 0.0, %v3294
    %v3296 = vpop.f32.mrf.mxu0
    %v3297 = vpop.f32.mrf.mxu0
    %v3298 = vadd.f32 0.0, %v3297
    %v3299 = vpop.f32.mrf.mxu0
    %3300 = vdwg.mxu0
    %v3301 = vpack.c.bf16 %v3298, %v3295
    %v3303 = vunpack.c.l.b16 %v3301
    %v3304 = vunpack.c.h.b16 %v3301
    %v3305 = vpack.c.b16 %v3303, %v3303
    %v3306 = vpack.c.b16 %v3304, %v3304
    %3307 = vrot.lane.b32.xlu0 %v3305, 8
    %v3308 = vpop.permute.xlu0 %3307
    %3309 = vrot.lane.b32.xlu0 %v3306, 8
    %v3310 = vpop.permute.xlu0 %3309
    %3313 = vst.msk [vmem:[#allocation5 + $0x8] sm:$0xf] %vm769, %v3308
    %3314 = vst.msk [vmem:[#allocation5 + $0xc] sm:$0xf] %vm769, %v3310
    %v3315 = vld [vmem:[#allocation2 + $0x8] sm:$0xf]
    %v3316 = vld [vmem:[#allocation2 + $0xc] sm:$0xf]
    %v3317 = vld [vmem:[#allocation4 + $0x10] sm:$0xf]
    %v3318 = vld [vmem:[#allocation4 + $0x14] sm:$0xf]
    %v3321 = vunpack.c.l.b16 %v3317
    %v3322 = vunpack.c.l.b16 %v3318
    %v3323 = vpack.c.b16 %v3322, %v3321
    %v3326 = vunpack.c.l.b16 %v3315
    %v3327 = vunpack.c.l.b16 %v3316
    %v3328 = vpack.c.b16 %v3327, %v3326
    %3329 = vrot.lane.b32.xlu0 %v3328, 48
    %v3330 = vpop.permute.xlu0 %3329
    %v3333 = vsel %vm280, %v3323, 0
    %3335 = vmatprep.subr.bf16.mxu0 0
    %3336 = vmatpush1.bf16.msra.mxu0 0
    %3337 = vmatprep.subr.bf16.mxu0 0
    %3338 = vmatpush1.bf16.msra.mxu0 0
    %3339 = vmatprep.subr.bf16.mxu0 0
    %3340 = vmatpush1.bf16.msra.mxu0 0
    %3341 = vmatprep.subr.bf16.mxu0 0
    %3342 = vmatpush1.bf16.msra.mxu0 0
    %3343 = vmatprep.subr.bf16.mxu0 0
    %3344 = vmatpush1.bf16.msra.mxu0 0
    %3345 = vmatprep.subr.bf16.mxu0 0
    %3346 = vmatpush1.bf16.msra.mxu0 0
    %3347 = vmatprep.subr.bf16.mxu0 0
    %3348 = vmatpush1.bf16.msra.mxu0 0
    %3349 = vmatprep.subr.bf16.mxu0 0
    %3350 = vmatpush1.bf16.msra.mxu0 %v3330
    %3351 = vmatprep.subr.bf16.mxu0 0
    %3352 = vmatpush2.bf16.msra.mxu0 0
    %3353 = vmatprep.subr.bf16.mxu0 0
    %3354 = vmatpush2.bf16.msra.mxu0 0
    %3355 = vmatprep.subr.bf16.mxu0 0
    %3356 = vmatpush2.bf16.msra.mxu0 0
    %3357 = vmatprep.subr.bf16.mxu0 0
    %3358 = vmatpush2.bf16.msra.mxu0 0
    %3359 = vmatprep.subr.bf16.mxu0 0
    %3360 = vmatpush2.bf16.msra.mxu0 0
    %3361 = vmatprep.subr.bf16.mxu0 0
    %3362 = vmatpush2.bf16.msra.mxu0 0
    %3363 = vmatprep.subr.bf16.mxu0 0
    %3364 = vmatpush2.bf16.msra.mxu0 0
    %3365 = vmatprep.subr.bf16.mxu0 0
    %3366 = vmatpush2.bf16.msra.mxu0 0
    %3367 = vmatprep.mubr.bf16.mxu0 0
    %3368 = vmatmul.mubr.bf16.gmra.mxu0 %v3333
    %v3369 = vpop.f32.mrf.mxu0
    %v3370 = vadd.f32 0.0, %v3369
    %v3371 = vpop.f32.mrf.mxu0
    %v3372 = vpop.f32.mrf.mxu0
    %v3373 = vadd.f32 0.0, %v3372
    %v3374 = vpop.f32.mrf.mxu0
    %3375 = vdwg.mxu0
    %v3376 = vpack.c.bf16 %v3373, %v3370
    %v3378 = vunpack.c.l.b16 %v3376
    %v3379 = vunpack.c.h.b16 %v3376
    %v3380 = vpack.c.b16 %v3378, %v3378
    %v3381 = vpack.c.b16 %v3379, %v3379
    %3382 = vrot.lane.b32.xlu0 %v3380, 16
    %v3383 = vpop.permute.xlu0 %3382
    %3384 = vrot.lane.b32.xlu0 %v3381, 16
    %v3385 = vpop.permute.xlu0 %3384
    %3388 = vst.msk [vmem:[#allocation5 + $0x8] sm:$0xf] %vm845, %v3383
    %3389 = vst.msk [vmem:[#allocation5 + $0xc] sm:$0xf] %vm845, %v3385
    %v3390 = vld [vmem:[#allocation2 + $0x8] sm:$0xf]
    %v3391 = vld [vmem:[#allocation2 + $0xc] sm:$0xf]
    %v3392 = vld [vmem:[#allocation4 + $0x18] sm:$0xf]
    %v3393 = vld [vmem:[#allocation4 + $0x1c] sm:$0xf]
    %v3396 = vunpack.c.l.b16 %v3392
    %v3397 = vunpack.c.l.b16 %v3393
    %v3398 = vpack.c.b16 %v3397, %v3396
    %v3401 = vunpack.c.l.b16 %v3390
    %v3402 = vunpack.c.l.b16 %v3391
    %v3403 = vpack.c.b16 %v3402, %v3401
    %3404 = vrot.lane.b32.xlu0 %v3403, 40
    %v3405 = vpop.permute.xlu0 %3404
    %v3408 = vsel %vm280, %v3398, 0
    %3410 = vmatprep.subr.bf16.mxu0 0
    %3411 = vmatpush1.bf16.msra.mxu0 0
    %3412 = vmatprep.subr.bf16.mxu0 0
    %3413 = vmatpush1.bf16.msra.mxu0 0
    %3414 = vmatprep.subr.bf16.mxu0 0
    %3415 = vmatpush1.bf16.msra.mxu0 0
    %3416 = vmatprep.subr.bf16.mxu0 0
    %3417 = vmatpush1.bf16.msra.mxu0 0
    %3418 = vmatprep.subr.bf16.mxu0 0
    %3419 = vmatpush1.bf16.msra.mxu0 0
    %3420 = vmatprep.subr.bf16.mxu0 0
    %3421 = vmatpush1.bf16.msra.mxu0 0
    %3422 = vmatprep.subr.bf16.mxu0 0
    %3423 = vmatpush1.bf16.msra.mxu0 0
    %3424 = vmatprep.subr.bf16.mxu0 0
    %3425 = vmatpush1.bf16.msra.mxu0 %v3405
    %3426 = vmatprep.subr.bf16.mxu0 0
    %3427 = vmatpush2.bf16.msra.mxu0 0
    %3428 = vmatprep.subr.bf16.mxu0 0
    %3429 = vmatpush2.bf16.msra.mxu0 0
    %3430 = vmatprep.subr.bf16.mxu0 0
    %3431 = vmatpush2.bf16.msra.mxu0 0
    %3432 = vmatprep.subr.bf16.mxu0 0
    %3433 = vmatpush2.bf16.msra.mxu0 0
    %3434 = vmatprep.subr.bf16.mxu0 0
    %3435 = vmatpush2.bf16.msra.mxu0 0
    %3436 = vmatprep.subr.bf16.mxu0 0
    %3437 = vmatpush2.bf16.msra.mxu0 0
    %3438 = vmatprep.subr.bf16.mxu0 0
    %3439 = vmatpush2.bf16.msra.mxu0 0
    %3440 = vmatprep.subr.bf16.mxu0 0
    %3441 = vmatpush2.bf16.msra.mxu0 0
    %3442 = vmatprep.mubr.bf16.mxu0 0
    %3443 = vmatmul.mubr.bf16.gmra.mxu0 %v3408
    %v3444 = vpop.f32.mrf.mxu0
    %v3445 = vadd.f32 0.0, %v3444
    %v3446 = vpop.f32.mrf.mxu0
    %v3447 = vpop.f32.mrf.mxu0
    %v3448 = vadd.f32 0.0, %v3447
    %v3449 = vpop.f32.mrf.mxu0
    %3450 = vdwg.mxu0
    %v3451 = vpack.c.bf16 %v3448, %v3445
    %v3453 = vunpack.c.l.b16 %v3451
    %v3454 = vunpack.c.h.b16 %v3451
    %v3455 = vpack.c.b16 %v3453, %v3453
    %v3456 = vpack.c.b16 %v3454, %v3454
    %3457 = vrot.lane.b32.xlu0 %v3455, 24
    %v3458 = vpop.permute.xlu0 %3457
    %3459 = vrot.lane.b32.xlu0 %v3456, 24
    %v3460 = vpop.permute.xlu0 %3459
    %3463 = vst.msk [vmem:[#allocation5 + $0x8] sm:$0xf] %vm921, %v3458
    %3464 = vst.msk [vmem:[#allocation5 + $0xc] sm:$0xf] %vm921, %v3460
    %v3465 = vld [vmem:[#allocation5] sm:$0xf]
    %v3466 = vld [vmem:[#allocation5 + $0x4] sm:$0xf]
    %v3467 = vld [vmem:[#allocation5 + $0x8] sm:$0xf]
    %v3468 = vld [vmem:[#allocation5 + $0xc] sm:$0xf]
    %v3469 = vld [vmem:[%s1 + $0x30] sm:$0xf]
    %v3470 = vld [vmem:[%s1 + $0x34] sm:$0xf]
    %v3471 = vld [vmem:[%s1 + $0x38] sm:$0xf]
    %v3472 = vld [vmem:[%s1 + $0x3c] sm:$0xf]
    %v3473 = vld [vmem:[%s2 + $0x50] sm:$0x1]
    %v3474 = vlaneseq
    %v3475 = vshrl.u32 %v3474, 7
    %v3476 = vsub.s32 0, %v3475
    %v3477 = vrot.slane %v3473, %v3476
    %v3482 = vunpack.c.l.b16 %v3465
    %v3483 = vunpack.c.l.b16 %v3466
    %v3484 = vunpack.c.l.b16 %v3467
    %v3485 = vunpack.c.l.b16 %v3468
    %v3486 = vpack.c.b16 %v3483, %v3482
    %v3487 = vpack.c.b16 %v3485, %v3484
    %v3492 = vunpack.c.l.b16 %v3469
    %v3493 = vunpack.c.l.b16 %v3470
    %v3494 = vunpack.c.l.b16 %v3471
    %v3495 = vunpack.c.l.b16 %v3472
    %v3496 = vpack.c.b16 %v3493, %v3492
    %v3497 = vpack.c.b16 %v3495, %v3494
    %v3501 = vsel %vm146, %v3486, 0
    %v3504 = vsel %vm146, %v3487, 0
    %3506 = vmatprep.subr.bf16.mxu0 0
    %3507 = vmatpush1.bf16.msra.mxu0 0
    %3508 = vmatprep.subr.bf16.mxu0 0
    %3509 = vmatpush1.bf16.msra.mxu0 0
    %3510 = vmatprep.subr.bf16.mxu0 0
    %3511 = vmatpush1.bf16.msra.mxu0 0
    %3512 = vmatprep.subr.bf16.mxu0 0
    %3513 = vmatpush1.bf16.msra.mxu0 0
    %3514 = vmatprep.subr.bf16.mxu0 0
    %3515 = vmatpush1.bf16.msra.mxu0 0
    %3516 = vmatprep.subr.bf16.mxu0 0
    %3517 = vmatpush1.bf16.msra.mxu0 0
    %3518 = vmatprep.subr.bf16.mxu0 0
    %3519 = vmatpush1.bf16.msra.mxu0 %v3497
    %3520 = vmatprep.subr.bf16.mxu0 0
    %3521 = vmatpush1.bf16.msra.mxu0 %v3496
    %3522 = vmatprep.subr.bf16.mxu0 0
    %3523 = vmatpush2.bf16.msra.mxu0 0
    %3524 = vmatprep.subr.bf16.mxu0 0
    %3525 = vmatpush2.bf16.msra.mxu0 0
    %3526 = vmatprep.subr.bf16.mxu0 0
    %3527 = vmatpush2.bf16.msra.mxu0 0
    %3528 = vmatprep.subr.bf16.mxu0 0
    %3529 = vmatpush2.bf16.msra.mxu0 0
    %3530 = vmatprep.subr.bf16.mxu0 0
    %3531 = vmatpush2.bf16.msra.mxu0 0
    %3532 = vmatprep.subr.bf16.mxu0 0
    %3533 = vmatpush2.bf16.msra.mxu0 0
    %3534 = vmatprep.subr.bf16.mxu0 0
    %3535 = vmatpush2.bf16.msra.mxu0 0
    %3536 = vmatprep.subr.bf16.mxu0 0
    %3537 = vmatpush2.bf16.msra.mxu0 0
    %3538 = vmatprep.mubr.bf16.mxu0 0
    %3539 = vmatmul.mubr.bf16.gmra.mxu0 %v3501
    %v3540 = vpop.f32.mrf.mxu0
    %v3541 = vadd.f32 %v3477, %v3540
    %v3542 = vpop.f32.mrf.mxu0
    %v3543 = vpop.f32.mrf.mxu0
    %v3544 = vadd.f32 %v3477, %v3543
    %v3545 = vpop.f32.mrf.mxu0
    %3546 = vmatprep.mubr.bf16.mxu0 0
    %3547 = vmatmul.mubr.bf16.gmra.mxu0 %v3504
    %v3548 = vpop.f32.mrf.mxu0
    %v3549 = vadd.f32 %v3477, %v3548
    %v3550 = vpop.f32.mrf.mxu0
    %v3551 = vpop.f32.mrf.mxu0
    %v3552 = vadd.f32 %v3477, %v3551
    %v3553 = vpop.f32.mrf.mxu0
    %3554 = vdwg.mxu0
    %v3555 = vadd.f32 %v1975, %v3541
    %v3556 = vadd.f32 %v1976, %v3544
    %v3557 = vadd.f32 %v1977, %v3549
    %v3558 = vadd.f32 %v1978, %v3552
    %v3559 = vld [vmem:[%s2 + $0x58] sm:$0x1]
    %v3560 = vld [vmem:[%s2 + $0x60] sm:$0x1]
    %v3561 = vsel %vm146, %v3555, 0.0
    %3562 = vadd.xlane.f32.xlu0 %v3561
    %v3563 = vpop.xlane.xlu0 %3562
    %v3564 = vsel %vm146, %v3556, 0.0
    %3565 = vadd.xlane.f32.xlu0 %v3564
    %v3566 = vpop.xlane.xlu0 %3565
    %v3567 = vsel %vm146, %v3557, 0.0
    %3568 = vadd.xlane.f32.xlu0 %v3567
    %v3569 = vpop.xlane.xlu0 %3568
    %v3570 = vsel %vm146, %v3558, 0.0
    %3571 = vadd.xlane.f32.xlu0 %v3570
    %v3572 = vpop.xlane.xlu0 %3571
    %v3573 = vmul.f32 %v3563, %v1726
    %v3574 = vmul.f32 %v3566, %v1726
    %v3575 = vmul.f32 %v3569, %v1726
    %v3576 = vmul.f32 %v3572, %v1726
    %v3577 = vsub.f32 %v3555, %v3573
    %v3578 = vsub.f32 %v3556, %v3574
    %v3579 = vsub.f32 %v3557, %v3575
    %v3580 = vsub.f32 %v3558, %v3576
    %v3581 = vmul.f32 %v3577, %v3577
    %v3582 = vmul.f32 %v3578, %v3578
    %v3583 = vmul.f32 %v3579, %v3579
    %v3584 = vmul.f32 %v3580, %v3580
    %v3585 = vsel %vm146, %v3581, 0.0
    %3586 = vadd.xlane.f32.xlu0 %v3585
    %v3587 = vpop.xlane.xlu0 %3586
    %v3588 = vsel %vm146, %v3582, 0.0
    %3589 = vadd.xlane.f32.xlu0 %v3588
    %v3590 = vpop.xlane.xlu0 %3589
    %v3591 = vsel %vm146, %v3583, 0.0
    %3592 = vadd.xlane.f32.xlu0 %v3591
    %v3593 = vpop.xlane.xlu0 %3592
    %v3594 = vsel %vm146, %v3584, 0.0
    %3595 = vadd.xlane.f32.xlu0 %v3594
    %v3596 = vpop.xlane.xlu0 %3595
    %v3597 = vmul.f32 %v3587, %v1726
    %v3598 = vmul.f32 %v3590, %v1726
    %v3599 = vmul.f32 %v3593, %v1726
    %v3600 = vmul.f32 %v3596, %v1726
    %v3601 = vadd.f32 %v3597, 1e-05
    %v3602 = vadd.f32 %v3598, 1e-05
    %v3603 = vadd.f32 %v3599, 1e-05
    %v3604 = vadd.f32 %v3600, 1e-05
    %v3605 = vrsqrt.pop %v3601
    %v3606 = vrsqrt.pop %v3602
    %v3607 = vrsqrt.pop %v3603
    %v3608 = vrsqrt.pop %v3604
    %v3609 = vmul.f32 %v3577, %v3605
    %v3610 = vmul.f32 %v3578, %v3606
    %v3611 = vmul.f32 %v3579, %v3607
    %v3612 = vmul.f32 %v3580, %v3608
    %v3613 = vlaneseq
    %v3614 = vshrl.u32 %v3613, 7
    %v3615 = vsub.s32 0, %v3614
    %v3616 = vrot.slane %v3559, %v3615
    %v3617 = vmul.f32 %v3609, %v3616
    %v3618 = vmul.f32 %v3610, %v3616
    %v3619 = vmul.f32 %v3611, %v3616
    %v3620 = vmul.f32 %v3612, %v3616
    %v3621 = vlaneseq
    %v3622 = vshrl.u32 %v3621, 7
    %v3623 = vsub.s32 0, %v3622
    %v3624 = vrot.slane %v3560, %v3623
    %v3625 = vadd.f32 %v3617, %v3624
    %v3626 = vadd.f32 %v3618, %v3624
    %v3627 = vadd.f32 %v3619, %v3624
    %v3628 = vadd.f32 %v3620, %v3624
    %v3629 = vpack.c.bf16 %v3626, %v3625
    %v3630 = vpack.c.bf16 %v3628, %v3627
    %v3631 = vld [vmem:[%s1 + $0x40] sm:$0xf]
    %v3632 = vld [vmem:[%s1 + $0x44] sm:$0xf]
    %v3633 = vld [vmem:[%s1 + $0x48] sm:$0xf]
    %v3634 = vld [vmem:[%s1 + $0x4c] sm:$0xf]
    %v3635 = vld [vmem:[%s2 + $0x68] sm:$0x1]
    %v3636 = vlaneseq
    %v3637 = vshrl.u32 %v3636, 7
    %v3638 = vsub.s32 0, %v3637
    %v3639 = vrot.slane %v3635, %v3638
    %v3644 = vunpack.c.l.b16 %v3631
    %v3645 = vunpack.c.l.b16 %v3632
    %v3646 = vunpack.c.l.b16 %v3633
    %v3647 = vunpack.c.l.b16 %v3634
    %v3648 = vpack.c.b16 %v3645, %v3644
    %v3649 = vpack.c.b16 %v3647, %v3646
    %v3653 = vsel %vm146, %v3629, 0
    %v3656 = vsel %vm146, %v3630, 0
    %3658 = vmatprep.subr.bf16.mxu0 0
    %3659 = vmatpush1.bf16.msra.mxu0 0
    %3660 = vmatprep.subr.bf16.mxu0 0
    %3661 = vmatpush1.bf16.msra.mxu0 0
    %3662 = vmatprep.subr.bf16.mxu0 0
    %3663 = vmatpush1.bf16.msra.mxu0 0
    %3664 = vmatprep.subr.bf16.mxu0 0
    %3665 = vmatpush1.bf16.msra.mxu0 0
    %3666 = vmatprep.subr.bf16.mxu0 0
    %3667 = vmatpush1.bf16.msra.mxu0 0
    %3668 = vmatprep.subr.bf16.mxu0 0
    %3669 = vmatpush1.bf16.msra.mxu0 0
    %3670 = vmatprep.subr.bf16.mxu0 0
    %3671 = vmatpush1.bf16.msra.mxu0 %v3649
    %3672 = vmatprep.subr.bf16.mxu0 0
    %3673 = vmatpush1.bf16.msra.mxu0 %v3648
    %3674 = vmatprep.subr.bf16.mxu0 0
    %3675 = vmatpush2.bf16.msra.mxu0 0
    %3676 = vmatprep.subr.bf16.mxu0 0
    %3677 = vmatpush2.bf16.msra.mxu0 0
    %3678 = vmatprep.subr.bf16.mxu0 0
    %3679 = vmatpush2.bf16.msra.mxu0 0
    %3680 = vmatprep.subr.bf16.mxu0 0
    %3681 = vmatpush2.bf16.msra.mxu0 0
    %3682 = vmatprep.subr.bf16.mxu0 0
    %3683 = vmatpush2.bf16.msra.mxu0 0
    %3684 = vmatprep.subr.bf16.mxu0 0
    %3685 = vmatpush2.bf16.msra.mxu0 0
    %3686 = vmatprep.subr.bf16.mxu0 0
    %3687 = vmatpush2.bf16.msra.mxu0 0
    %3688 = vmatprep.subr.bf16.mxu0 0
    %3689 = vmatpush2.bf16.msra.mxu0 0
    %3690 = vmatprep.mubr.bf16.mxu0 0
    %3691 = vmatmul.mubr.bf16.gmra.mxu0 %v3653
    %v3692 = vpop.f32.mrf.mxu0
    %v3693 = vadd.f32 %v3639, %v3692
    %v3694 = vpop.f32.mrf.mxu0
    %v3695 = vpop.f32.mrf.mxu0
    %v3696 = vadd.f32 %v3639, %v3695
    %v3697 = vpop.f32.mrf.mxu0
    %3698 = vmatprep.mubr.bf16.mxu0 0
    %3699 = vmatmul.mubr.bf16.gmra.mxu0 %v3656
    %v3700 = vpop.f32.mrf.mxu0
    %v3701 = vadd.f32 %v3639, %v3700
    %v3702 = vpop.f32.mrf.mxu0
    %v3703 = vpop.f32.mrf.mxu0
    %v3704 = vadd.f32 %v3639, %v3703
    %v3705 = vpop.f32.mrf.mxu0
    %3706 = vdwg.mxu0
    %v3707 = vmul.f32 %v3693, 0.5
    %v3708 = vmul.f32 %v3696, 0.5
    %v3709 = vmul.f32 %v3701, 0.5
    %v3710 = vmul.f32 %v3704, 0.5
    %v3711 = vmul.f32 %v3693, 0.70710677
    %v3712 = vmul.f32 %v3696, 0.70710677
    %v3713 = vmul.f32 %v3701, 0.70710677
    %v3714 = vmul.f32 %v3704, 0.70710677
    %v3715 = verf.f32.pop %v3711
    %v3716 = verf.f32.pop %v3712
    %v3717 = verf.f32.pop %v3713
    %v3718 = verf.f32.pop %v3714
    %v3719 = vadd.f32 %v3715, 1.0
    %v3720 = vadd.f32 %v3716, 1.0
    %v3721 = vadd.f32 %v3717, 1.0
    %v3722 = vadd.f32 %v3718, 1.0
    %v3723 = vmul.f32 %v3707, %v3719
    %v3724 = vmul.f32 %v3708, %v3720
    %v3725 = vmul.f32 %v3709, %v3721
    %v3726 = vmul.f32 %v3710, %v3722
    %v3727 = vpack.c.bf16 %v3724, %v3723
    %v3728 = vpack.c.bf16 %v3726, %v3725
    %v3729 = vld [vmem:[%s1 + $0x50] sm:$0xf]
    %v3730 = vld [vmem:[%s1 + $0x54] sm:$0xf]
    %v3731 = vld [vmem:[%s1 + $0x58] sm:$0xf]
    %v3732 = vld [vmem:[%s1 + $0x5c] sm:$0xf]
    %v3733 = vld [vmem:[%s1 + $0x60] sm:$0xf]
    %v3734 = vld [vmem:[%s1 + $0x64] sm:$0xf]
    %v3735 = vld [vmem:[%s1 + $0x68] sm:$0xf]
    %v3736 = vld [vmem:[%s1 + $0x6c] sm:$0xf]
    %v3737 = vld [vmem:[%s2 + $0x70] sm:$0x1]
    %v3738 = vlaneseq
    %v3739 = vshrl.u32 %v3738, 7
    %v3740 = vsub.s32 0, %v3739
    %v3741 = vrot.slane %v3737, %v3740
    %v3750 = vunpack.c.l.b16 %v3729
    %v3751 = vunpack.c.l.b16 %v3730
    %v3752 = vunpack.c.l.b16 %v3731
    %v3753 = vunpack.c.l.b16 %v3732
    %v3754 = vunpack.c.l.b16 %v3733
    %v3755 = vunpack.c.l.b16 %v3734
    %v3756 = vunpack.c.l.b16 %v3735
    %v3757 = vunpack.c.l.b16 %v3736
    %v3758 = vpack.c.b16 %v3751, %v3750
    %v3759 = vpack.c.b16 %v3753, %v3752
    %v3760 = vpack.c.b16 %v3755, %v3754
    %v3761 = vpack.c.b16 %v3757, %v3756
    %v3767 = vsel %vm67, %v3727, 0
    %v3770 = vsel %vm67, %v3728, 0
    %3772 = vmatprep.subr.bf16.mxu0 0
    %3773 = vmatpush1.bf16.msra.mxu0 0
    %3774 = vmatprep.subr.bf16.mxu0 0
    %3775 = vmatpush1.bf16.msra.mxu0 0
    %3776 = vmatprep.subr.bf16.mxu0 0
    %3777 = vmatpush1.bf16.msra.mxu0 0
    %3778 = vmatprep.subr.bf16.mxu0 0
    %3779 = vmatpush1.bf16.msra.mxu0 0
    %3780 = vmatprep.subr.bf16.mxu0 0
    %3781 = vmatpush1.bf16.msra.mxu0 %v3761
    %3782 = vmatprep.subr.bf16.mxu0 0
    %3783 = vmatpush1.bf16.msra.mxu0 %v3760
    %3784 = vmatprep.subr.bf16.mxu0 0
    %3785 = vmatpush1.bf16.msra.mxu0 %v3759
    %3786 = vmatprep.subr.bf16.mxu0 0
    %3787 = vmatpush1.bf16.msra.mxu0 %v3758
    %3788 = vmatprep.subr.bf16.mxu0 0
    %3789 = vmatpush2.bf16.msra.mxu0 0
    %3790 = vmatprep.subr.bf16.mxu0 0
    %3791 = vmatpush2.bf16.msra.mxu0 0
    %3792 = vmatprep.subr.bf16.mxu0 0
    %3793 = vmatpush2.bf16.msra.mxu0 0
    %3794 = vmatprep.subr.bf16.mxu0 0
    %3795 = vmatpush2.bf16.msra.mxu0 0
    %3796 = vmatprep.subr.bf16.mxu0 0
    %3797 = vmatpush2.bf16.msra.mxu0 0
    %3798 = vmatprep.subr.bf16.mxu0 0
    %3799 = vmatpush2.bf16.msra.mxu0 0
    %3800 = vmatprep.subr.bf16.mxu0 0
    %3801 = vmatpush2.bf16.msra.mxu0 0
    %3802 = vmatprep.subr.bf16.mxu0 0
    %3803 = vmatpush2.bf16.msra.mxu0 0
    %3804 = vmatprep.mubr.bf16.mxu0 0
    %3805 = vmatmul.mubr.bf16.gmra.mxu0 %v3767
    %v3806 = vpop.f32.mrf.mxu0
    %v3807 = vadd.f32 %v3741, %v3806
    %v3808 = vpop.f32.mrf.mxu0
    %v3809 = vpop.f32.mrf.mxu0
    %v3810 = vadd.f32 %v3741, %v3809
    %v3811 = vpop.f32.mrf.mxu0
    %3812 = vmatprep.mubr.bf16.mxu0 0
    %3813 = vmatmul.mubr.bf16.gmra.mxu0 %v3770
    %v3814 = vpop.f32.mrf.mxu0
    %v3815 = vadd.f32 %v3741, %v3814
    %v3816 = vpop.f32.mrf.mxu0
    %v3817 = vpop.f32.mrf.mxu0
    %v3818 = vadd.f32 %v3741, %v3817
    %v3819 = vpop.f32.mrf.mxu0
    %3820 = vdwg.mxu0
    %v3821 = vadd.f32 %v3555, %v3807
    %v3822 = vadd.f32 %v3556, %v3810
    %v3823 = vadd.f32 %v3557, %v3815
    %v3824 = vadd.f32 %v3558, %v3818
    %v3825 = vld [vmem:[%s2 + $0x78] sm:$0x1]
    %v3826 = vld [vmem:[%s2 + $0x80] sm:$0x1]
    %v3827 = vsel %vm146, %v3821, 0.0
    %3828 = vadd.xlane.f32.xlu0 %v3827
    %v3829 = vpop.xlane.xlu0 %3828
    %v3830 = vsel %vm146, %v3822, 0.0
    %3831 = vadd.xlane.f32.xlu0 %v3830
    %v3832 = vpop.xlane.xlu0 %3831
    %v3833 = vsel %vm146, %v3823, 0.0
    %3834 = vadd.xlane.f32.xlu0 %v3833
    %v3835 = vpop.xlane.xlu0 %3834
    %v3836 = vsel %vm146, %v3824, 0.0
    %3837 = vadd.xlane.f32.xlu0 %v3836
    %v3838 = vpop.xlane.xlu0 %3837
    %v3839 = vmul.f32 %v3829, %v1726
    %v3840 = vmul.f32 %v3832, %v1726
    %v3841 = vmul.f32 %v3835, %v1726
    %v3842 = vmul.f32 %v3838, %v1726
    %v3843 = vsub.f32 %v3821, %v3839
    %v3844 = vsub.f32 %v3822, %v3840
    %v3845 = vsub.f32 %v3823, %v3841
    %v3846 = vsub.f32 %v3824, %v3842
    %v3847 = vmul.f32 %v3843, %v3843
    %v3848 = vmul.f32 %v3844, %v3844
    %v3849 = vmul.f32 %v3845, %v3845
    %v3850 = vmul.f32 %v3846, %v3846
    %v3851 = vsel %vm146, %v3847, 0.0
    %3852 = vadd.xlane.f32.xlu0 %v3851
    %v3853 = vpop.xlane.xlu0 %3852
    %v3854 = vsel %vm146, %v3848, 0.0
    %3855 = vadd.xlane.f32.xlu0 %v3854
    %v3856 = vpop.xlane.xlu0 %3855
    %v3857 = vsel %vm146, %v3849, 0.0
    %3858 = vadd.xlane.f32.xlu0 %v3857
    %v3859 = vpop.xlane.xlu0 %3858
    %v3860 = vsel %vm146, %v3850, 0.0
    %3861 = vadd.xlane.f32.xlu0 %v3860
    %v3862 = vpop.xlane.xlu0 %3861
    %v3863 = vmul.f32 %v3853, %v1726
    %v3864 = vmul.f32 %v3856, %v1726
    %v3865 = vmul.f32 %v3859, %v1726
    %v3866 = vmul.f32 %v3862, %v1726
    %v3867 = vadd.f32 %v3863, 1e-05
    %v3868 = vadd.f32 %v3864, 1e-05
    %v3869 = vadd.f32 %v3865, 1e-05
    %v3870 = vadd.f32 %v3866, 1e-05
    %v3871 = vrsqrt.pop %v3867
    %v3872 = vrsqrt.pop %v3868
    %v3873 = vrsqrt.pop %v3869
    %v3874 = vrsqrt.pop %v3870
    %v3875 = vmul.f32 %v3843, %v3871
    %v3876 = vmul.f32 %v3844, %v3872
    %v3877 = vmul.f32 %v3845, %v3873
    %v3878 = vmul.f32 %v3846, %v3874
    %v3879 = vlaneseq
    %v3880 = vshrl.u32 %v3879, 7
    %v3881 = vsub.s32 0, %v3880
    %v3882 = vrot.slane %v3825, %v3881
    %v3883 = vmul.f32 %v3875, %v3882
    %v3884 = vmul.f32 %v3876, %v3882
    %v3885 = vmul.f32 %v3877, %v3882
    %v3886 = vmul.f32 %v3878, %v3882
    %v3887 = vlaneseq
    %v3888 = vshrl.u32 %v3887, 7
    %v3889 = vsub.s32 0, %v3888
    %v3890 = vrot.slane %v3826, %v3889
    %v3891 = vadd.f32 %v3883, %v3890
    %v3892 = vadd.f32 %v3884, %v3890
    %v3893 = vadd.f32 %v3885, %v3890
    %v3894 = vadd.f32 %v3886, %v3890
    %v3895 = vld [vmem:[%s1 + $0x80] sm:$0x1]
    %v3896 = vpack.c.bf16 %v3892, %v3891
    %v3897 = vpack.c.bf16 %v3894, %v3893
    %v3899 = vsel %vm146, %v3895, 0
    %3901 = vmatprep.subr.bf16.mxu0 0
    %3902 = vmatpush1.bf16.msra.mxu0 0
    %3903 = vmatprep.subr.bf16.mxu0 0
    %3904 = vmatpush1.bf16.msra.mxu0 0
    %3905 = vmatprep.subr.bf16.mxu0 0
    %3906 = vmatpush1.bf16.msra.mxu0 0
    %3907 = vmatprep.subr.bf16.mxu0 0
    %3908 = vmatpush1.bf16.msra.mxu0 0
    %3909 = vmatprep.subr.bf16.mxu0 0
    %3910 = vmatpush1.bf16.msra.mxu0 0
    %3911 = vmatprep.subr.bf16.mxu0 0
    %3912 = vmatpush1.bf16.msra.mxu0 0
    %3913 = vmatprep.subr.bf16.mxu0 0
    %3914 = vmatpush1.bf16.msra.mxu0 %v3897
    %3915 = vmatprep.subr.bf16.mxu0 0
    %3916 = vmatpush1.bf16.msra.mxu0 %v3896
    %3917 = vmatprep.subr.bf16.mxu0 0
    %3918 = vmatpush2.bf16.msra.mxu0 0
    %3919 = vmatprep.subr.bf16.mxu0 0
    %3920 = vmatpush2.bf16.msra.mxu0 0
    %3921 = vmatprep.subr.bf16.mxu0 0
    %3922 = vmatpush2.bf16.msra.mxu0 0
    %3923 = vmatprep.subr.bf16.mxu0 0
    %3924 = vmatpush2.bf16.msra.mxu0 0
    %3925 = vmatprep.subr.bf16.mxu0 0
    %3926 = vmatpush2.bf16.msra.mxu0 0
    %3927 = vmatprep.subr.bf16.mxu0 0
    %3928 = vmatpush2.bf16.msra.mxu0 0
    %3929 = vmatprep.subr.bf16.mxu0 0
    %3930 = vmatpush2.bf16.msra.mxu0 0
    %3931 = vmatprep.subr.bf16.mxu0 0
    %3932 = vmatpush2.bf16.msra.mxu0 0
    %3933 = vmatprep.mubr.bf16.mxu0 0
    %3934 = vmatmul.mubr.bf16.gmra.mxu0 %v3899
    %v3935 = vpop.f32.mrf.mxu0
    %v3936 = vadd.f32 0.0, %v3935
    %v3937 = vpop.f32.mrf.mxu0
    %v3938 = vpop.f32.mrf.mxu0
    %v3939 = vpop.f32.mrf.mxu0
    %3940 = vdwg.mxu0
    %v3941 = vpack.c.bf16 %v3936, %v3936
    %v3942 = vld [vmem:[%s1 + $0x70] sm:$0xf]
    %v3943 = vld [vmem:[%s1 + $0x74] sm:$0xf]
    %v3944 = vld [vmem:[%s1 + $0x78] sm:$0xf]
    %v3945 = vld [vmem:[%s1 + $0x7c] sm:$0xf]
    %v3946 = vld [vmem:[%s2 + $0x88] sm:$0x1]
    %v3947 = vlaneseq
    %v3948 = vshrl.u32 %v3947, 7
    %v3949 = vsub.s32 0, %v3948
    %v3950 = vrot.slane %v3946, %v3949
    %v3955 = vunpack.c.l.b16 %v3942
    %v3956 = vunpack.c.l.b16 %v3943
    %v3957 = vunpack.c.l.b16 %v3944
    %v3958 = vunpack.c.l.b16 %v3945
    %v3959 = vpack.c.b16 %v3956, %v3955
    %v3960 = vpack.c.b16 %v3958, %v3957
    %v3964 = vsel %vm146, %v3941, 0
    %3966 = vmatprep.subr.bf16.mxu0 0
    %3967 = vmatpush1.bf16.msra.mxu0 0
    %3968 = vmatprep.subr.bf16.mxu0 0
    %3969 = vmatpush1.bf16.msra.mxu0 0
    %3970 = vmatprep.subr.bf16.mxu0 0
    %3971 = vmatpush1.bf16.msra.mxu0 0
    %3972 = vmatprep.subr.bf16.mxu0 0
    %3973 = vmatpush1.bf16.msra.mxu0 0
    %3974 = vmatprep.subr.bf16.mxu0 0
    %3975 = vmatpush1.bf16.msra.mxu0 0
    %3976 = vmatprep.subr.bf16.mxu0 0
    %3977 = vmatpush1.bf16.msra.mxu0 0
    %3978 = vmatprep.subr.bf16.mxu0 0
    %3979 = vmatpush1.bf16.msra.mxu0 %v3960
    %3980 = vmatprep.subr.bf16.mxu0 0
    %3981 = vmatpush1.bf16.msra.mxu0 %v3959
    %3982 = vmatprep.subr.bf16.mxu0 0
    %3983 = vmatpush2.bf16.msra.mxu0 0
    %3984 = vmatprep.subr.bf16.mxu0 0
    %3985 = vmatpush2.bf16.msra.mxu0 0
    %3986 = vmatprep.subr.bf16.mxu0 0
    %3987 = vmatpush2.bf16.msra.mxu0 0
    %3988 = vmatprep.subr.bf16.mxu0 0
    %3989 = vmatpush2.bf16.msra.mxu0 0
    %3990 = vmatprep.subr.bf16.mxu0 0
    %3991 = vmatpush2.bf16.msra.mxu0 0
    %3992 = vmatprep.subr.bf16.mxu0 0
    %3993 = vmatpush2.bf16.msra.mxu0 0
    %3994 = vmatprep.subr.bf16.mxu0 0
    %3995 = vmatpush2.bf16.msra.mxu0 0
    %3996 = vmatprep.subr.bf16.mxu0 0
    %3997 = vmatpush2.bf16.msra.mxu0 0
    %3998 = vmatprep.mubr.bf16.mxu0 0
    %3999 = vmatmul.mubr.bf16.gmra.mxu0 %v3964
    %v4000 = vpop.f32.mrf.mxu0
    %v4001 = vadd.f32 %v3950, %v4000
    %v4002 = vpop.f32.mrf.mxu0
    %v4003 = vpop.f32.mrf.mxu0
    %v4004 = vpop.f32.mrf.mxu0
    %4005 = vdwg.mxu0
    %4006 = vst [vmem:[#allocation6] sm:$0x3] %v4001
    // Predicated region
    $region14: #{vision_transformer_forward.1} parent=1 // pred_check
      _
    $region15: #{vision_transformer_forward.1} parent=1 // pred_check_branch
      %4008 = sbr.rel (0) target = $region17
    $region16: #{vision_transformer_forward.1} parent=1 // pred_region
      %s4010 = ssub.s32 32, 32
      %4011 = vsyncadd [#allocation7], %s4010
      %s4013 = sshll.u32 [#allocation6], 4
      %s4014 = int_to_ptr.vmem [resolvable:$true] %s4013
      %4016 = dma.vmem_to_hbm [thread:$0]  %s4014, 32, %s3, [#allocation7]
    $region17: #{vision_transformer_forward.1} parent=1 // pred_fallthru
      _
    // Predicated region
    $region18: #{vision_transformer_forward.1} parent=1 // pred_check
      _
    $region19: #{vision_transformer_forward.1} parent=1 // pred_check_branch
      %4018 = sbr.rel (0) target = $region21
    $region20: #{vision_transformer_forward.1} parent=1 // pred_region
      %4019 = dma.done [#allocation7], 32
    $region21: #{vision_transformer_forward.1} parent=1 // pred_fallthru
      _
    %4020 = vsyncpa [#allocation7], 1

</llo_original>
